<compile_context>
chip_gen: v7x
topology: tpu7x:2x2x1
jax: 0.10.0
libtpu: 0.0.40
codegen_flags: <defaults>
</compile_context>

<pallas_src>
import functools

import jax
import jax.numpy as jnp
from jax.experimental import pallas as pl
from jax.experimental.pallas import tpu as pltpu

KSIZE = 7
PAD = KSIZE // 2
NEG_INF = float("-inf")


def _plan(C, HW, itemsize):
    """Pick the C-chunk size, grid extent and scoped-VMEM limit."""
    try:
        cap = int(pltpu.get_tpu_info().vmem_capacity_bytes)
    except Exception:          # conservative default (v7x-sized 64 MiB VMEM)
        cap = 64 * 2**20
    vmem_limit = min(cap - 8 * 2**20, 110 * 2**20)

    # Per-step VMEM besides the double-buffered x chunk.
    fixed = (2 * 8 * HW * 4        # (8, HW) f32 sum/max accumulators
             + 2 * HW * 4          # row/col index vectors
             + 2 * 2 * HW * 4      # output double-buffer (<= f32)
             + 64 * HW * 4         # fused-conv temporaries / spill headroom
             + (2 << 20))          # misc
    # ~12 MiB chunks on 64 MiB/TC parts (v7x), ~28 MiB on 128 MiB parts.
    chunk_cap = (12 << 20) if cap <= 96 * 2**20 else (28 << 20)
    target = max(HW * itemsize, min(chunk_cap, (vmem_limit - fixed) // 2))

    pack = 8 * max(1, 4 // itemsize)           # sublane packing per dtype
    rows_fit = max(pack, target // (HW * itemsize))
    if C <= rows_fit:
        ct, nck = C, 1                         # single chunk == full array dim
    else:
        ct = max(pack, (rows_fit // pack) * pack)
        nck = -(-C // ct)

    need = 2 * ct * HW * itemsize + fixed + (4 << 20)
    vmem_limit = int(min(vmem_limit, max(need, 32 << 20)))
    return ct, nck, vmem_limit


def _fused_kernel(w_ref, rc_ref, x_ref, o_ref, sum_ref, max_ref, *,
                  C, ct, H, W, inv_c):
    # w_ref:  (2*7*7,) f32 in SMEM            (conv weights, OIHW flattened)
    # rc_ref: (2, 1, HW) int32 in VMEM        (row ids, col ids of flat pixels)
    # x_ref:  (1, ct, HW) input C-chunk       (lane-dense view of NCHW)
    # o_ref:  (1, 1, HW) output block         (written only at the last chunk)
    # sum_ref/max_ref: (8, HW) f32 scratch    (sublane-dense running sum / max)
    HW = H * W
    k = pl.program_id(1)
    nk = pl.num_programs(1)

    @pl.when(k == 0)
    def _():
        sum_ref[...] = jnp.zeros_like(sum_ref)
        max_ref[...] = jnp.full(max_ref.shape, NEG_INF, dtype=max_ref.dtype)

    full_slabs = ct // 8
    tail = ct % 8                      # nonzero only when ct == C (one chunk)
    needs_c_mask = (C % ct) != 0       # cdiv tail chunk carries garbage rows

    def slab_body(i, carry):
        off = pl.multiple_of(i * 8, 8)
        blk = x_ref[0, pl.ds(off, 8), :]                       # (8, HW)
        if needs_c_mask:
            gidx = (k * ct + off
                    + jax.lax.broadcasted_iota(jnp.int32, (8, 1), 0))
            valid = gidx < C
            bs = jnp.where(valid, blk, jnp.zeros_like(blk))
            bm = jnp.where(valid, blk, jnp.full_like(blk, NEG_INF))
        else:
            bs = bm = blk
        sum_ref[...] = sum_ref[...] + bs.astype(jnp.float32)
        max_ref[...] = jnp.maximum(max_ref[...], bm.astype(jnp.float32))
        return carry

    if full_slabs > 0:
        jax.lax.fori_loop(0, full_slabs, slab_body, 0)

    if tail > 0:                       # static (<8 rows); single-chunk case
        tb = x_ref[0, full_slabs * 8:ct, :]                    # (tail, HW)
        sum_ref[0:1, :] = sum_ref[0:1, :] + jnp.sum(
            tb.astype(jnp.float32), axis=0, keepdims=True)
        max_ref[0:1, :] = jnp.maximum(
            max_ref[0:1, :],
            jnp.max(tb, axis=0, keepdims=True).astype(jnp.float32))

    @pl.when(k == nk - 1)
    def _():
        # Collapse 8 -> 1 once per batch element (XLU), then the fused conv.
        avg = jnp.sum(sum_ref[...], axis=0, keepdims=True) * inv_c   # (1, HW)
        mx = jnp.max(max_ref[...], axis=0, keepdims=True)            # (1, HW)
        row = rc_ref[0]                                              # (1, HW)
        col = rc_ref[1]                                              # (1, HW)

        # Border-validity masks: 7 vertical + 7 horizontal compare pairs.
        vmasks = []
        hmasks = []
        for d in range(KSIZE):
            dr = d - PAD
            vmasks.append(jnp.logical_and(row >= -dr, row < H - dr))
            hmasks.append(jnp.logical_and(col >= -dr, col < W - dr))

        accs = [jnp.zeros((1, HW), jnp.float32) for _ in range(4)]
        planes = (avg, mx)             # channel 0 = avg, channel 1 = max
        for c in range(2):
            for dy in range(KSIZE):
                dr = dy - PAD
                lane = 2 * c + (dy & 1)        # 4 independent VALU chains
                for dx in range(KSIZE):
                    dc = dx - PAD
                    wv = w_ref[c * KSIZE * KSIZE + dy * KSIZE + dx]
                    # shifted[p] == plane[p + dr*W + dc]; lanes that would wrap
                    # across a row / image edge are zeroed by the masks.
                    shift = (-(dr * W + dc)) % HW
                    src = planes[c] if shift == 0 else pltpu.roll(
                        planes[c], shift, axis=1)
                    m = jnp.logical_and(vmasks[dy], hmasks[dx])
                    accs[lane] = accs[lane] + jnp.where(m, src, 0.0) * wv
        acc = (accs[0] + accs[1]) + (accs[2] + accs[3])
        o_ref[0] = jax.nn.sigmoid(acc).astype(o_ref.dtype)


def spatial_attention(x, w):
    """x: (B, C, H, W); w: (1, 2, KSIZE, KSIZE) conv weight (no bias)."""
    B, C, H, W = x.shape
    HW = H * W
    dt = x.dtype

    x2 = x.reshape(B, C, HW)                      # lane-dense view of NCHW
    w_flat = w.reshape(-1).astype(jnp.float32)    # (2*7*7,)
    pos = jnp.arange(HW, dtype=jnp.int32)
    rowcol = jnp.stack([pos // W, pos % W]).reshape(2, 1, HW)

    ct, nck, vmem_limit = _plan(C, HW, dt.itemsize)

    kernel = functools.partial(_fused_kernel, C=C, ct=ct, H=H, W=W,
                               inv_c=1.0 / C)
    out_flat = pl.pallas_call(
        kernel,
        out_shape=jax.ShapeDtypeStruct((B, 1, HW), dt),
        grid=(B, nck),
        in_specs=[
            pl.BlockSpec(memory_space=pltpu.MemorySpace.SMEM),      # weights
            pl.BlockSpec((2, 1, HW), lambda b, k: (0, 0, 0)),       # row/col
            pl.BlockSpec((1, ct, HW), lambda b, k: (b, k, 0)),      # x chunk
        ],
        out_specs=pl.BlockSpec((1, 1, HW), lambda b, k: (b, 0, 0)),
        scratch_shapes=[pltpu.VMEM((8, HW), jnp.float32),           # run sum
                        pltpu.VMEM((8, HW), jnp.float32)],          # run max
        compiler_params=pltpu.CompilerParams(
            dimension_semantics=("parallel", "arbitrary"),
            vmem_limit_bytes=vmem_limit),
    )(w_flat, rowcol, x2)
    return out_flat.reshape(B, 1, H, W)


def reference(x, w):
    """Pure-JAX reference matching the PyTorch forward."""
    avg = jnp.mean(x, axis=1, keepdims=True)
    mx = jnp.max(x, axis=1, keepdims=True)
    xc = jnp.concatenate([avg, mx], axis=1)
    y = jax.lax.conv_general_dilated(
        xc, w, window_strides=(1, 1),
        padding=((PAD, PAD), (PAD, PAD)),
        dimension_numbers=("NCHW", "OIHW", "NCHW"))
    return jax.nn.sigmoid(y)


if __name__ == "__main__":
    key = jax.random.PRNGKey(0)
    kx, kw = jax.random.split(key)

    B, C, H, W = 2, 4, 16, 16
    x = jax.random.normal(kx, (B, C, H, W), jnp.float32)

    # Deterministic conv weight (kaiming-uniform-style bound, like nn.Conv2d).
    fan_in = 2 * KSIZE * KSIZE
    bound = 1.0 / (fan_in ** 0.5)
    w = jax.random.uniform(kw, (1, 2, KSIZE, KSIZE), jnp.float32, -bound, bound)

    out = jax.jit(spatial_attention)(x, w)
    out = jax.block_until_ready(out)

    ref = reference(x, w)
    assert out.shape == (B, 1, H, W), out.shape
    err = float(jnp.max(jnp.abs(out - ref)))
    assert err < 1e-5, err
    print("KERNEL_OK")
</pallas_src>

<mosaic_0001>
module attributes {stable_mosaic.version = 11 : i64} {
  func.func @_fused_kernel(%arg0: i32, %arg1: i32, %arg2: memref<98xf32, #tpu.memory_space<smem>>, %arg3: memref<2x1x256xi32, #tpu.memory_space<vmem>>, %arg4: memref<1x4x256xf32, #tpu.memory_space<vmem>>, %arg5: memref<1x1x256xf32, #tpu.memory_space<vmem>>, %arg6: memref<8x256xf32, #tpu.memory_space<vmem>>, %arg7: memref<8x256xf32, #tpu.memory_space<vmem>>) attributes {dimension_semantics = [#tpu.dimension_semantics<parallel>, #tpu.dimension_semantics<arbitrary>], iteration_bounds = array<i64: 2, 1>, scalar_prefetch = 0 : i64, scratch_operands = 2 : i64, tpu.core_type = #tpu.core_type<tc>, window_params = [{transform_indices = @transform_0, window_bounds = array<i64: 98>}, {pipeline_mode = #tpu.pipeline_mode<synchronous>, transform_indices = @transform_1, window_bounds = array<i64: 2, 1, 256>}, {transform_indices = @transform_2, window_bounds = array<i64: 1, 4, 256>}, {transform_indices = @transform_3, window_bounds = array<i64: 1, 1, 256>}]} {
    %c0_i32 = arith.constant 0 : i32
    %0 = arith.cmpi eq, %arg1, %c0_i32 : i32
    %1 = arith.extui %0 : i1 to i32
    %c0_i32_0 = arith.constant 0 : i32
    %2 = arith.cmpi ne, %1, %c0_i32_0 : i32
    scf.if %2 {
      %cst_14 = arith.constant 0.000000e+00 : f32
      %18 = vector.broadcast %cst_14 : f32 to vector<8x256xf32>
      %c0_15 = arith.constant 0 : index
      %c0_16 = arith.constant 0 : index
      %19 = vector.load %arg6[%c0_15, %c0_16] : memref<8x256xf32, #tpu.memory_space<vmem>>, vector<8x256xf32>
      tpu.vector_store %arg6[%c0_15, %c0_16], %18 {strides = array<i32>} : memref<8x256xf32, #tpu.memory_space<vmem>>, vector<8x256xf32>,
      %cst_17 = arith.constant 0xFF800000 : f32
      %20 = vector.broadcast %cst_17 : f32 to vector<8x256xf32>
      %c0_18 = arith.constant 0 : index
      %c0_19 = arith.constant 0 : index
      %21 = vector.load %arg7[%c0_18, %c0_19] : memref<8x256xf32, #tpu.memory_space<vmem>>, vector<8x256xf32>
      tpu.vector_store %arg7[%c0_18, %c0_19], %20 {strides = array<i32>} : memref<8x256xf32, #tpu.memory_space<vmem>>, vector<8x256xf32>,
    } else {
    }
    %c0 = arith.constant 0 : index
    %c0_1 = arith.constant 0 : index
    %c0_2 = arith.constant 0 : index
    %3 = vector.load %arg4[%c0, %c0_1, %c0_2] : memref<1x4x256xf32, #tpu.memory_space<vmem>>, vector<1x4x256xf32>
    %4 = vector.shape_cast %3 : vector<1x4x256xf32> to vector<4x256xf32>
    %c0_3 = arith.constant 0 : index
    %c0_4 = arith.constant 0 : index
    %5 = vector.load %arg6[%c0_3, %c0_4] : memref<8x256xf32, #tpu.memory_space<vmem>>, vector<1x256xf32>
    %cst = arith.constant dense<0.000000e+00> : vector<256xf32>
    %6 = vector.multi_reduction <add>, %4, %cst [0] : vector<4x256xf32> to vector<256xf32>
    %7 = vector.shape_cast %6 : vector<256xf32> to vector<1x256xf32>
    %8 = arith.addf %5, %7 : vector<1x256xf32>
    %c0_5 = arith.constant 0 : index
    %c0_6 = arith.constant 0 : index
    %9 = vector.load %arg6[%c0_5, %c0_6] : memref<8x256xf32, #tpu.memory_space<vmem>>, vector<1x256xf32>
    tpu.vector_store %arg6[%c0_5, %c0_6], %8 {strides = array<i32>} : memref<8x256xf32, #tpu.memory_space<vmem>>, vector<1x256xf32>,
    %c0_7 = arith.constant 0 : index
    %c0_8 = arith.constant 0 : index
    %10 = vector.load %arg7[%c0_7, %c0_8] : memref<8x256xf32, #tpu.memory_space<vmem>>, vector<1x256xf32>
    %cst_9 = arith.constant dense<0xFF800000> : vector<256xf32>
    %11 = vector.multi_reduction <maximumf>, %4, %cst_9 [0] : vector<4x256xf32> to vector<256xf32>
    %12 = vector.shape_cast %11 : vector<256xf32> to vector<1x256xf32>
    %13 = arith.maximumf %10, %12 : vector<1x256xf32>
    %c0_10 = arith.constant 0 : index
    %c0_11 = arith.constant 0 : index
    %14 = vector.load %arg7[%c0_10, %c0_11] : memref<8x256xf32, #tpu.memory_space<vmem>>, vector<1x256xf32>
    tpu.vector_store %arg7[%c0_10, %c0_11], %13 {strides = array<i32>} : memref<8x256xf32, #tpu.memory_space<vmem>>, vector<1x256xf32>,
    %c0_i32_12 = arith.constant 0 : i32
    %15 = arith.cmpi eq, %arg1, %c0_i32_12 : i32
    %16 = arith.extui %15 : i1 to i32
    %c0_i32_13 = arith.constant 0 : i32
    %17 = arith.cmpi ne, %16, %c0_i32_13 : i32
    scf.if %17 {
      %c0_14 = arith.constant 0 : index
      %c0_15 = arith.constant 0 : index
      %18 = vector.load %arg6[%c0_14, %c0_15] : memref<8x256xf32, #tpu.memory_space<vmem>>, vector<8x256xf32>
      %cst_16 = arith.constant dense<0.000000e+00> : vector<256xf32>
      %19 = vector.multi_reduction <add>, %18, %cst_16 [0] : vector<8x256xf32> to vector<256xf32>
      %20 = vector.shape_cast %19 : vector<256xf32> to vector<1x256xf32>
      %cst_17 = arith.constant 2.500000e-01 : f32
      %21 = vector.broadcast %cst_17 : f32 to vector<1x256xf32>
      %22 = arith.mulf %20, %21 : vector<1x256xf32>
      %c0_18 = arith.constant 0 : index
      %c0_19 = arith.constant 0 : index
      %23 = vector.load %arg7[%c0_18, %c0_19] : memref<8x256xf32, #tpu.memory_space<vmem>>, vector<8x256xf32>
      %cst_20 = arith.constant dense<0xFF800000> : vector<256xf32>
      %24 = vector.multi_reduction <maximumf>, %23, %cst_20 [0] : vector<8x256xf32> to vector<256xf32>
      %25 = vector.shape_cast %24 : vector<256xf32> to vector<1x256xf32>
      %c0_21 = arith.constant 0 : index
      %c0_22 = arith.constant 0 : index
      %c0_23 = arith.constant 0 : index
      %26 = vector.load %arg3[%c0_21, %c0_22, %c0_23] : memref<2x1x256xi32, #tpu.memory_space<vmem>>, vector<1x1x256xi32>
      %27 = vector.shape_cast %26 : vector<1x1x256xi32> to vector<1x256xi32>
      %c1 = arith.constant 1 : index
      %c0_24 = arith.constant 0 : index
      %c0_25 = arith.constant 0 : index
      %28 = vector.load %arg3[%c1, %c0_24, %c0_25] : memref<2x1x256xi32, #tpu.memory_space<vmem>>, vector<1x1x256xi32>
      %29 = vector.shape_cast %28 : vector<1x1x256xi32> to vector<1x256xi32>
      %c3_i32 = arith.constant 3 : i32
      %30 = vector.broadcast %c3_i32 : i32 to vector<1x256xi32>
      %31 = arith.cmpi sge, %27, %30 : vector<1x256xi32>
      %c19_i32 = arith.constant 19 : i32
      %32 = vector.broadcast %c19_i32 : i32 to vector<1x256xi32>
      %33 = arith.cmpi slt, %27, %32 : vector<1x256xi32>
      %34 = arith.andi %31, %33 : vector<1x256xi1>
      %c3_i32_26 = arith.constant 3 : i32
      %35 = vector.broadcast %c3_i32_26 : i32 to vector<1x256xi32>
      %36 = arith.cmpi sge, %29, %35 : vector<1x256xi32>
      %c19_i32_27 = arith.constant 19 : i32
      %37 = vector.broadcast %c19_i32_27 : i32 to vector<1x256xi32>
      %38 = arith.cmpi slt, %29, %37 : vector<1x256xi32>
      %39 = arith.andi %36, %38 : vector<1x256xi1>
      %c2_i32 = arith.constant 2 : i32
      %40 = vector.broadcast %c2_i32 : i32 to vector<1x256xi32>
      %41 = arith.cmpi sge, %27, %40 : vector<1x256xi32>
      %c18_i32 = arith.constant 18 : i32
      %42 = vector.broadcast %c18_i32 : i32 to vector<1x256xi32>
      %43 = arith.cmpi slt, %27, %42 : vector<1x256xi32>
      %44 = arith.andi %41, %43 : vector<1x256xi1>
      %c2_i32_28 = arith.constant 2 : i32
      %45 = vector.broadcast %c2_i32_28 : i32 to vector<1x256xi32>
      %46 = arith.cmpi sge, %29, %45 : vector<1x256xi32>
      %c18_i32_29 = arith.constant 18 : i32
      %47 = vector.broadcast %c18_i32_29 : i32 to vector<1x256xi32>
      %48 = arith.cmpi slt, %29, %47 : vector<1x256xi32>
      %49 = arith.andi %46, %48 : vector<1x256xi1>
      %c1_i32 = arith.constant 1 : i32
      %50 = vector.broadcast %c1_i32 : i32 to vector<1x256xi32>
      %51 = arith.cmpi sge, %27, %50 : vector<1x256xi32>
      %c17_i32 = arith.constant 17 : i32
      %52 = vector.broadcast %c17_i32 : i32 to vector<1x256xi32>
      %53 = arith.cmpi slt, %27, %52 : vector<1x256xi32>
      %54 = arith.andi %51, %53 : vector<1x256xi1>
      %c1_i32_30 = arith.constant 1 : i32
      %55 = vector.broadcast %c1_i32_30 : i32 to vector<1x256xi32>
      %56 = arith.cmpi sge, %29, %55 : vector<1x256xi32>
      %c17_i32_31 = arith.constant 17 : i32
      %57 = vector.broadcast %c17_i32_31 : i32 to vector<1x256xi32>
      %58 = arith.cmpi slt, %29, %57 : vector<1x256xi32>
      %59 = arith.andi %56, %58 : vector<1x256xi1>
      %c0_i32_32 = arith.constant 0 : i32
      %60 = vector.broadcast %c0_i32_32 : i32 to vector<1x256xi32>
      %61 = arith.cmpi sge, %27, %60 : vector<1x256xi32>
      %c16_i32 = arith.constant 16 : i32
      %62 = vector.broadcast %c16_i32 : i32 to vector<1x256xi32>
      %63 = arith.cmpi slt, %27, %62 : vector<1x256xi32>
      %64 = arith.andi %61, %63 : vector<1x256xi1>
      %c0_i32_33 = arith.constant 0 : i32
      %65 = vector.broadcast %c0_i32_33 : i32 to vector<1x256xi32>
      %66 = arith.cmpi sge, %29, %65 : vector<1x256xi32>
      %c16_i32_34 = arith.constant 16 : i32
      %67 = vector.broadcast %c16_i32_34 : i32 to vector<1x256xi32>
      %68 = arith.cmpi slt, %29, %67 : vector<1x256xi32>
      %69 = arith.andi %66, %68 : vector<1x256xi1>
      %c-1_i32 = arith.constant -1 : i32
      %70 = vector.broadcast %c-1_i32 : i32 to vector<1x256xi32>
      %71 = arith.cmpi sge, %27, %70 : vector<1x256xi32>
      %c15_i32 = arith.constant 15 : i32
      %72 = vector.broadcast %c15_i32 : i32 to vector<1x256xi32>
      %73 = arith.cmpi slt, %27, %72 : vector<1x256xi32>
      %74 = arith.andi %71, %73 : vector<1x256xi1>
      %c-1_i32_35 = arith.constant -1 : i32
      %75 = vector.broadcast %c-1_i32_35 : i32 to vector<1x256xi32>
      %76 = arith.cmpi sge, %29, %75 : vector<1x256xi32>
      %c15_i32_36 = arith.constant 15 : i32
      %77 = vector.broadcast %c15_i32_36 : i32 to vector<1x256xi32>
      %78 = arith.cmpi slt, %29, %77 : vector<1x256xi32>
      %79 = arith.andi %76, %78 : vector<1x256xi1>
      %c-2_i32 = arith.constant -2 : i32
      %80 = vector.broadcast %c-2_i32 : i32 to vector<1x256xi32>
      %81 = arith.cmpi sge, %27, %80 : vector<1x256xi32>
      %c14_i32 = arith.constant 14 : i32
      %82 = vector.broadcast %c14_i32 : i32 to vector<1x256xi32>
      %83 = arith.cmpi slt, %27, %82 : vector<1x256xi32>
      %84 = arith.andi %81, %83 : vector<1x256xi1>
      %c-2_i32_37 = arith.constant -2 : i32
      %85 = vector.broadcast %c-2_i32_37 : i32 to vector<1x256xi32>
      %86 = arith.cmpi sge, %29, %85 : vector<1x256xi32>
      %c14_i32_38 = arith.constant 14 : i32
      %87 = vector.broadcast %c14_i32_38 : i32 to vector<1x256xi32>
      %88 = arith.cmpi slt, %29, %87 : vector<1x256xi32>
      %89 = arith.andi %86, %88 : vector<1x256xi1>
      %c-3_i32 = arith.constant -3 : i32
      %90 = vector.broadcast %c-3_i32 : i32 to vector<1x256xi32>
      %91 = arith.cmpi sge, %27, %90 : vector<1x256xi32>
      %c13_i32 = arith.constant 13 : i32
      %92 = vector.broadcast %c13_i32 : i32 to vector<1x256xi32>
      %93 = arith.cmpi slt, %27, %92 : vector<1x256xi32>
      %94 = arith.andi %91, %93 : vector<1x256xi1>
      %c-3_i32_39 = arith.constant -3 : i32
      %95 = vector.broadcast %c-3_i32_39 : i32 to vector<1x256xi32>
      %96 = arith.cmpi sge, %29, %95 : vector<1x256xi32>
      %c13_i32_40 = arith.constant 13 : i32
      %97 = vector.broadcast %c13_i32_40 : i32 to vector<1x256xi32>
      %98 = arith.cmpi slt, %29, %97 : vector<1x256xi32>
      %99 = arith.andi %96, %98 : vector<1x256xi1>
      %cst_41 = arith.constant 0.000000e+00 : f32
      %100 = vector.broadcast %cst_41 : f32 to vector<1x256xf32>
      %cst_42 = arith.constant 0.000000e+00 : f32
      %101 = vector.broadcast %cst_42 : f32 to vector<1x256xf32>
      %cst_43 = arith.constant 0.000000e+00 : f32
      %102 = vector.broadcast %cst_43 : f32 to vector<1x256xf32>
      %cst_44 = arith.constant 0.000000e+00 : f32
      %103 = vector.broadcast %cst_44 : f32 to vector<1x256xf32>
      %c0_45 = arith.constant 0 : index
      %104 = memref.load %arg2[%c0_45] : memref<98xf32, #tpu.memory_space<smem>>
      %c51_i32 = arith.constant 51 : i32
      %105 = tpu.dynamic_rotate %22 by %c51_i32 dim 1 : vector<1x256xf32>, i32 -> vector<1x256xf32>
      %106 = arith.andi %34, %39 : vector<1x256xi1>
      %cst_46 = arith.constant 0.000000e+00 : f32
      %107 = vector.broadcast %cst_46 : f32 to vector<1x256xf32>
      %108 = arith.select %106, %105, %107 : vector<1x256xi1>, vector<1x256xf32>
      %109 = vector.broadcast %104 : f32 to vector<1x256xf32>
      %110 = arith.mulf %108, %109 : vector<1x256xf32>
      %111 = arith.addf %100, %110 : vector<1x256xf32>
      %c1_47 = arith.constant 1 : index
      %112 = memref.load %arg2[%c1_47] : memref<98xf32, #tpu.memory_space<smem>>
      %c50_i32 = arith.constant 50 : i32
      %113 = tpu.dynamic_rotate %22 by %c50_i32 dim 1 : vector<1x256xf32>, i32 -> vector<1x256xf32>
      %114 = arith.andi %34, %49 : vector<1x256xi1>
      %cst_48 = arith.constant 0.000000e+00 : f32
      %115 = vector.broadcast %cst_48 : f32 to vector<1x256xf32>
      %116 = arith.select %114, %113, %115 : vector<1x256xi1>, vector<1x256xf32>
      %117 = vector.broadcast %112 : f32 to vector<1x256xf32>
      %118 = arith.mulf %116, %117 : vector<1x256xf32>
      %119 = arith.addf %111, %118 : vector<1x256xf32>
      %c2 = arith.constant 2 : index
      %120 = memref.load %arg2[%c2] : memref<98xf32, #tpu.memory_space<smem>>
      %c49_i32 = arith.constant 49 : i32
      %121 = tpu.dynamic_rotate %22 by %c49_i32 dim 1 : vector<1x256xf32>, i32 -> vector<1x256xf32>
      %122 = arith.andi %34, %59 : vector<1x256xi1>
      %cst_49 = arith.constant 0.000000e+00 : f32
      %123 = vector.broadcast %cst_49 : f32 to vector<1x256xf32>
      %124 = arith.select %122, %121, %123 : vector<1x256xi1>, vector<1x256xf32>
      %125 = vector.broadcast %120 : f32 to vector<1x256xf32>
      %126 = arith.mulf %124, %125 : vector<1x256xf32>
      %127 = arith.addf %119, %126 : vector<1x256xf32>
      %c3 = arith.constant 3 : index
      %128 = memref.load %arg2[%c3] : memref<98xf32, #tpu.memory_space<smem>>
      %c48_i32 = arith.constant 48 : i32
      %129 = tpu.dynamic_rotate %22 by %c48_i32 dim 1 : vector<1x256xf32>, i32 -> vector<1x256xf32>
      %130 = arith.andi %34, %69 : vector<1x256xi1>
      %cst_50 = arith.constant 0.000000e+00 : f32
      %131 = vector.broadcast %cst_50 : f32 to vector<1x256xf32>
      %132 = arith.select %130, %129, %131 : vector<1x256xi1>, vector<1x256xf32>
      %133 = vector.broadcast %128 : f32 to vector<1x256xf32>
      %134 = arith.mulf %132, %133 : vector<1x256xf32>
      %135 = arith.addf %127, %134 : vector<1x256xf32>
      %c4 = arith.constant 4 : index
      %136 = memref.load %arg2[%c4] : memref<98xf32, #tpu.memory_space<smem>>
      %c47_i32 = arith.constant 47 : i32
      %137 = tpu.dynamic_rotate %22 by %c47_i32 dim 1 : vector<1x256xf32>, i32 -> vector<1x256xf32>
      %138 = arith.andi %34, %79 : vector<1x256xi1>
      %cst_51 = arith.constant 0.000000e+00 : f32
      %139 = vector.broadcast %cst_51 : f32 to vector<1x256xf32>
      %140 = arith.select %138, %137, %139 : vector<1x256xi1>, vector<1x256xf32>
      %141 = vector.broadcast %136 : f32 to vector<1x256xf32>
      %142 = arith.mulf %140, %141 : vector<1x256xf32>
      %143 = arith.addf %135, %142 : vector<1x256xf32>
      %c5 = arith.constant 5 : index
      %144 = memref.load %arg2[%c5] : memref<98xf32, #tpu.memory_space<smem>>
      %c46_i32 = arith.constant 46 : i32
      %145 = tpu.dynamic_rotate %22 by %c46_i32 dim 1 : vector<1x256xf32>, i32 -> vector<1x256xf32>
      %146 = arith.andi %34, %89 : vector<1x256xi1>
      %cst_52 = arith.constant 0.000000e+00 : f32
      %147 = vector.broadcast %cst_52 : f32 to vector<1x256xf32>
      %148 = arith.select %146, %145, %147 : vector<1x256xi1>, vector<1x256xf32>
      %149 = vector.broadcast %144 : f32 to vector<1x256xf32>
      %150 = arith.mulf %148, %149 : vector<1x256xf32>
      %151 = arith.addf %143, %150 : vector<1x256xf32>
      %c6 = arith.constant 6 : index
      %152 = memref.load %arg2[%c6] : memref<98xf32, #tpu.memory_space<smem>>
      %c45_i32 = arith.constant 45 : i32
      %153 = tpu.dynamic_rotate %22 by %c45_i32 dim 1 : vector<1x256xf32>, i32 -> vector<1x256xf32>
      %154 = arith.andi %34, %99 : vector<1x256xi1>
      %cst_53 = arith.constant 0.000000e+00 : f32
      %155 = vector.broadcast %cst_53 : f32 to vector<1x256xf32>
      %156 = arith.select %154, %153, %155 : vector<1x256xi1>, vector<1x256xf32>
      %157 = vector.broadcast %152 : f32 to vector<1x256xf32>
      %158 = arith.mulf %156, %157 : vector<1x256xf32>
      %159 = arith.addf %151, %158 : vector<1x256xf32>
      %c7 = arith.constant 7 : index
      %160 = memref.load %arg2[%c7] : memref<98xf32, #tpu.memory_space<smem>>
      %c35_i32 = arith.constant 35 : i32
      %161 = tpu.dynamic_rotate %22 by %c35_i32 dim 1 : vector<1x256xf32>, i32 -> vector<1x256xf32>
      %162 = arith.andi %44, %39 : vector<1x256xi1>
      %cst_54 = arith.constant 0.000000e+00 : f32
      %163 = vector.broadcast %cst_54 : f32 to vector<1x256xf32>
      %164 = arith.select %162, %161, %163 : vector<1x256xi1>, vector<1x256xf32>
      %165 = vector.broadcast %160 : f32 to vector<1x256xf32>
      %166 = arith.mulf %164, %165 : vector<1x256xf32>
      %167 = arith.addf %101, %166 : vector<1x256xf32>
      %c8 = arith.constant 8 : index
      %168 = memref.load %arg2[%c8] : memref<98xf32, #tpu.memory_space<smem>>
      %c34_i32 = arith.constant 34 : i32
      %169 = tpu.dynamic_rotate %22 by %c34_i32 dim 1 : vector<1x256xf32>, i32 -> vector<1x256xf32>
      %170 = arith.andi %44, %49 : vector<1x256xi1>
      %cst_55 = arith.constant 0.000000e+00 : f32
      %171 = vector.broadcast %cst_55 : f32 to vector<1x256xf32>
      %172 = arith.select %170, %169, %171 : vector<1x256xi1>, vector<1x256xf32>
      %173 = vector.broadcast %168 : f32 to vector<1x256xf32>
      %174 = arith.mulf %172, %173 : vector<1x256xf32>
      %175 = arith.addf %167, %174 : vector<1x256xf32>
      %c9 = arith.constant 9 : index
      %176 = memref.load %arg2[%c9] : memref<98xf32, #tpu.memory_space<smem>>
      %c33_i32 = arith.constant 33 : i32
      %177 = tpu.dynamic_rotate %22 by %c33_i32 dim 1 : vector<1x256xf32>, i32 -> vector<1x256xf32>
      %178 = arith.andi %44, %59 : vector<1x256xi1>
      %cst_56 = arith.constant 0.000000e+00 : f32
      %179 = vector.broadcast %cst_56 : f32 to vector<1x256xf32>
      %180 = arith.select %178, %177, %179 : vector<1x256xi1>, vector<1x256xf32>
      %181 = vector.broadcast %176 : f32 to vector<1x256xf32>
      %182 = arith.mulf %180, %181 : vector<1x256xf32>
      %183 = arith.addf %175, %182 : vector<1x256xf32>
      %c10 = arith.constant 10 : index
      %184 = memref.load %arg2[%c10] : memref<98xf32, #tpu.memory_space<smem>>
      %c32_i32 = arith.constant 32 : i32
      %185 = tpu.dynamic_rotate %22 by %c32_i32 dim 1 : vector<1x256xf32>, i32 -> vector<1x256xf32>
      %186 = arith.andi %44, %69 : vector<1x256xi1>
      %cst_57 = arith.constant 0.000000e+00 : f32
      %187 = vector.broadcast %cst_57 : f32 to vector<1x256xf32>
      %188 = arith.select %186, %185, %187 : vector<1x256xi1>, vector<1x256xf32>
      %189 = vector.broadcast %184 : f32 to vector<1x256xf32>
      %190 = arith.mulf %188, %189 : vector<1x256xf32>
      %191 = arith.addf %183, %190 : vector<1x256xf32>
      %c11 = arith.constant 11 : index
      %192 = memref.load %arg2[%c11] : memref<98xf32, #tpu.memory_space<smem>>
      %c31_i32 = arith.constant 31 : i32
      %193 = tpu.dynamic_rotate %22 by %c31_i32 dim 1 : vector<1x256xf32>, i32 -> vector<1x256xf32>
      %194 = arith.andi %44, %79 : vector<1x256xi1>
      %cst_58 = arith.constant 0.000000e+00 : f32
      %195 = vector.broadcast %cst_58 : f32 to vector<1x256xf32>
      %196 = arith.select %194, %193, %195 : vector<1x256xi1>, vector<1x256xf32>
      %197 = vector.broadcast %192 : f32 to vector<1x256xf32>
      %198 = arith.mulf %196, %197 : vector<1x256xf32>
      %199 = arith.addf %191, %198 : vector<1x256xf32>
      %c12 = arith.constant 12 : index
      %200 = memref.load %arg2[%c12] : memref<98xf32, #tpu.memory_space<smem>>
      %c30_i32 = arith.constant 30 : i32
      %201 = tpu.dynamic_rotate %22 by %c30_i32 dim 1 : vector<1x256xf32>, i32 -> vector<1x256xf32>
      %202 = arith.andi %44, %89 : vector<1x256xi1>
      %cst_59 = arith.constant 0.000000e+00 : f32
      %203 = vector.broadcast %cst_59 : f32 to vector<1x256xf32>
      %204 = arith.select %202, %201, %203 : vector<1x256xi1>, vector<1x256xf32>
      %205 = vector.broadcast %200 : f32 to vector<1x256xf32>
      %206 = arith.mulf %204, %205 : vector<1x256xf32>
      %207 = arith.addf %199, %206 : vector<1x256xf32>
      %c13 = arith.constant 13 : index
      %208 = memref.load %arg2[%c13] : memref<98xf32, #tpu.memory_space<smem>>
      %c29_i32 = arith.constant 29 : i32
      %209 = tpu.dynamic_rotate %22 by %c29_i32 dim 1 : vector<1x256xf32>, i32 -> vector<1x256xf32>
      %210 = arith.andi %44, %99 : vector<1x256xi1>
      %cst_60 = arith.constant 0.000000e+00 : f32
      %211 = vector.broadcast %cst_60 : f32 to vector<1x256xf32>
      %212 = arith.select %210, %209, %211 : vector<1x256xi1>, vector<1x256xf32>
      %213 = vector.broadcast %208 : f32 to vector<1x256xf32>
      %214 = arith.mulf %212, %213 : vector<1x256xf32>
      %215 = arith.addf %207, %214 : vector<1x256xf32>
      %c14 = arith.constant 14 : index
      %216 = memref.load %arg2[%c14] : memref<98xf32, #tpu.memory_space<smem>>
      %c19_i32_61 = arith.constant 19 : i32
      %217 = tpu.dynamic_rotate %22 by %c19_i32_61 dim 1 : vector<1x256xf32>, i32 -> vector<1x256xf32>
      %218 = arith.andi %54, %39 : vector<1x256xi1>
      %cst_62 = arith.constant 0.000000e+00 : f32
      %219 = vector.broadcast %cst_62 : f32 to vector<1x256xf32>
      %220 = arith.select %218, %217, %219 : vector<1x256xi1>, vector<1x256xf32>
      %221 = vector.broadcast %216 : f32 to vector<1x256xf32>
      %222 = arith.mulf %220, %221 : vector<1x256xf32>
      %223 = arith.addf %159, %222 : vector<1x256xf32>
      %c15 = arith.constant 15 : index
      %224 = memref.load %arg2[%c15] : memref<98xf32, #tpu.memory_space<smem>>
      %c18_i32_63 = arith.constant 18 : i32
      %225 = tpu.dynamic_rotate %22 by %c18_i32_63 dim 1 : vector<1x256xf32>, i32 -> vector<1x256xf32>
      %226 = arith.andi %54, %49 : vector<1x256xi1>
      %cst_64 = arith.constant 0.000000e+00 : f32
      %227 = vector.broadcast %cst_64 : f32 to vector<1x256xf32>
      %228 = arith.select %226, %225, %227 : vector<1x256xi1>, vector<1x256xf32>
      %229 = vector.broadcast %224 : f32 to vector<1x256xf32>
      %230 = arith.mulf %228, %229 : vector<1x256xf32>
      %231 = arith.addf %223, %230 : vector<1x256xf32>
      %c16 = arith.constant 16 : index
      %232 = memref.load %arg2[%c16] : memref<98xf32, #tpu.memory_space<smem>>
      %c17_i32_65 = arith.constant 17 : i32
      %233 = tpu.dynamic_rotate %22 by %c17_i32_65 dim 1 : vector<1x256xf32>, i32 -> vector<1x256xf32>
      %234 = arith.andi %54, %59 : vector<1x256xi1>
      %cst_66 = arith.constant 0.000000e+00 : f32
      %235 = vector.broadcast %cst_66 : f32 to vector<1x256xf32>
      %236 = arith.select %234, %233, %235 : vector<1x256xi1>, vector<1x256xf32>
      %237 = vector.broadcast %232 : f32 to vector<1x256xf32>
      %238 = arith.mulf %236, %237 : vector<1x256xf32>
      %239 = arith.addf %231, %238 : vector<1x256xf32>
      %c17 = arith.constant 17 : index
      %240 = memref.load %arg2[%c17] : memref<98xf32, #tpu.memory_space<smem>>
      %c16_i32_67 = arith.constant 16 : i32
      %241 = tpu.dynamic_rotate %22 by %c16_i32_67 dim 1 : vector<1x256xf32>, i32 -> vector<1x256xf32>
      %242 = arith.andi %54, %69 : vector<1x256xi1>
      %cst_68 = arith.constant 0.000000e+00 : f32
      %243 = vector.broadcast %cst_68 : f32 to vector<1x256xf32>
      %244 = arith.select %242, %241, %243 : vector<1x256xi1>, vector<1x256xf32>
      %245 = vector.broadcast %240 : f32 to vector<1x256xf32>
      %246 = arith.mulf %244, %245 : vector<1x256xf32>
      %247 = arith.addf %239, %246 : vector<1x256xf32>
      %c18 = arith.constant 18 : index
      %248 = memref.load %arg2[%c18] : memref<98xf32, #tpu.memory_space<smem>>
      %c15_i32_69 = arith.constant 15 : i32
      %249 = tpu.dynamic_rotate %22 by %c15_i32_69 dim 1 : vector<1x256xf32>, i32 -> vector<1x256xf32>
      %250 = arith.andi %54, %79 : vector<1x256xi1>
      %cst_70 = arith.constant 0.000000e+00 : f32
      %251 = vector.broadcast %cst_70 : f32 to vector<1x256xf32>
      %252 = arith.select %250, %249, %251 : vector<1x256xi1>, vector<1x256xf32>
      %253 = vector.broadcast %248 : f32 to vector<1x256xf32>
      %254 = arith.mulf %252, %253 : vector<1x256xf32>
      %255 = arith.addf %247, %254 : vector<1x256xf32>
      %c19 = arith.constant 19 : index
      %256 = memref.load %arg2[%c19] : memref<98xf32, #tpu.memory_space<smem>>
      %c14_i32_71 = arith.constant 14 : i32
      %257 = tpu.dynamic_rotate %22 by %c14_i32_71 dim 1 : vector<1x256xf32>, i32 -> vector<1x256xf32>
      %258 = arith.andi %54, %89 : vector<1x256xi1>
      %cst_72 = arith.constant 0.000000e+00 : f32
      %259 = vector.broadcast %cst_72 : f32 to vector<1x256xf32>
      %260 = arith.select %258, %257, %259 : vector<1x256xi1>, vector<1x256xf32>
      %261 = vector.broadcast %256 : f32 to vector<1x256xf32>
      %262 = arith.mulf %260, %261 : vector<1x256xf32>
      %263 = arith.addf %255, %262 : vector<1x256xf32>
      %c20 = arith.constant 20 : index
      %264 = memref.load %arg2[%c20] : memref<98xf32, #tpu.memory_space<smem>>
      %c13_i32_73 = arith.constant 13 : i32
      %265 = tpu.dynamic_rotate %22 by %c13_i32_73 dim 1 : vector<1x256xf32>, i32 -> vector<1x256xf32>
      %266 = arith.andi %54, %99 : vector<1x256xi1>
      %cst_74 = arith.constant 0.000000e+00 : f32
      %267 = vector.broadcast %cst_74 : f32 to vector<1x256xf32>
      %268 = arith.select %266, %265, %267 : vector<1x256xi1>, vector<1x256xf32>
      %269 = vector.broadcast %264 : f32 to vector<1x256xf32>
      %270 = arith.mulf %268, %269 : vector<1x256xf32>
      %271 = arith.addf %263, %270 : vector<1x256xf32>
      %c21 = arith.constant 21 : index
      %272 = memref.load %arg2[%c21] : memref<98xf32, #tpu.memory_space<smem>>
      %c3_i32_75 = arith.constant 3 : i32
      %273 = tpu.dynamic_rotate %22 by %c3_i32_75 dim 1 : vector<1x256xf32>, i32 -> vector<1x256xf32>
      %274 = arith.andi %64, %39 : vector<1x256xi1>
      %cst_76 = arith.constant 0.000000e+00 : f32
      %275 = vector.broadcast %cst_76 : f32 to vector<1x256xf32>
      %276 = arith.select %274, %273, %275 : vector<1x256xi1>, vector<1x256xf32>
      %277 = vector.broadcast %272 : f32 to vector<1x256xf32>
      %278 = arith.mulf %276, %277 : vector<1x256xf32>
      %279 = arith.addf %215, %278 : vector<1x256xf32>
      %c22 = arith.constant 22 : index
      %280 = memref.load %arg2[%c22] : memref<98xf32, #tpu.memory_space<smem>>
      %c2_i32_77 = arith.constant 2 : i32
      %281 = tpu.dynamic_rotate %22 by %c2_i32_77 dim 1 : vector<1x256xf32>, i32 -> vector<1x256xf32>
      %282 = arith.andi %64, %49 : vector<1x256xi1>
      %cst_78 = arith.constant 0.000000e+00 : f32
      %283 = vector.broadcast %cst_78 : f32 to vector<1x256xf32>
      %284 = arith.select %282, %281, %283 : vector<1x256xi1>, vector<1x256xf32>
      %285 = vector.broadcast %280 : f32 to vector<1x256xf32>
      %286 = arith.mulf %284, %285 : vector<1x256xf32>
      %287 = arith.addf %279, %286 : vector<1x256xf32>
      %c23 = arith.constant 23 : index
      %288 = memref.load %arg2[%c23] : memref<98xf32, #tpu.memory_space<smem>>
      %c1_i32_79 = arith.constant 1 : i32
      %289 = tpu.dynamic_rotate %22 by %c1_i32_79 dim 1 : vector<1x256xf32>, i32 -> vector<1x256xf32>
      %290 = arith.andi %64, %59 : vector<1x256xi1>
      %cst_80 = arith.constant 0.000000e+00 : f32
      %291 = vector.broadcast %cst_80 : f32 to vector<1x256xf32>
      %292 = arith.select %290, %289, %291 : vector<1x256xi1>, vector<1x256xf32>
      %293 = vector.broadcast %288 : f32 to vector<1x256xf32>
      %294 = arith.mulf %292, %293 : vector<1x256xf32>
      %295 = arith.addf %287, %294 : vector<1x256xf32>
      %c24 = arith.constant 24 : index
      %296 = memref.load %arg2[%c24] : memref<98xf32, #tpu.memory_space<smem>>
      %297 = arith.andi %64, %69 : vector<1x256xi1>
      %cst_81 = arith.constant 0.000000e+00 : f32
      %298 = vector.broadcast %cst_81 : f32 to vector<1x256xf32>
      %299 = arith.select %297, %22, %298 : vector<1x256xi1>, vector<1x256xf32>
      %300 = vector.broadcast %296 : f32 to vector<1x256xf32>
      %301 = arith.mulf %299, %300 : vector<1x256xf32>
      %302 = arith.addf %295, %301 : vector<1x256xf32>
      %c25 = arith.constant 25 : index
      %303 = memref.load %arg2[%c25] : memref<98xf32, #tpu.memory_space<smem>>
      %c255_i32 = arith.constant 255 : i32
      %304 = tpu.dynamic_rotate %22 by %c255_i32 dim 1 : vector<1x256xf32>, i32 -> vector<1x256xf32>
      %305 = arith.andi %64, %79 : vector<1x256xi1>
      %cst_82 = arith.constant 0.000000e+00 : f32
      %306 = vector.broadcast %cst_82 : f32 to vector<1x256xf32>
      %307 = arith.select %305, %304, %306 : vector<1x256xi1>, vector<1x256xf32>
      %308 = vector.broadcast %303 : f32 to vector<1x256xf32>
      %309 = arith.mulf %307, %308 : vector<1x256xf32>
      %310 = arith.addf %302, %309 : vector<1x256xf32>
      %c26 = arith.constant 26 : index
      %311 = memref.load %arg2[%c26] : memref<98xf32, #tpu.memory_space<smem>>
      %c254_i32 = arith.constant 254 : i32
      %312 = tpu.dynamic_rotate %22 by %c254_i32 dim 1 : vector<1x256xf32>, i32 -> vector<1x256xf32>
      %313 = arith.andi %64, %89 : vector<1x256xi1>
      %cst_83 = arith.constant 0.000000e+00 : f32
      %314 = vector.broadcast %cst_83 : f32 to vector<1x256xf32>
      %315 = arith.select %313, %312, %314 : vector<1x256xi1>, vector<1x256xf32>
      %316 = vector.broadcast %311 : f32 to vector<1x256xf32>
      %317 = arith.mulf %315, %316 : vector<1x256xf32>
      %318 = arith.addf %310, %317 : vector<1x256xf32>
      %c27 = arith.constant 27 : index
      %319 = memref.load %arg2[%c27] : memref<98xf32, #tpu.memory_space<smem>>
      %c253_i32 = arith.constant 253 : i32
      %320 = tpu.dynamic_rotate %22 by %c253_i32 dim 1 : vector<1x256xf32>, i32 -> vector<1x256xf32>
      %321 = arith.andi %64, %99 : vector<1x256xi1>
      %cst_84 = arith.constant 0.000000e+00 : f32
      %322 = vector.broadcast %cst_84 : f32 to vector<1x256xf32>
      %323 = arith.select %321, %320, %322 : vector<1x256xi1>, vector<1x256xf32>
      %324 = vector.broadcast %319 : f32 to vector<1x256xf32>
      %325 = arith.mulf %323, %324 : vector<1x256xf32>
      %326 = arith.addf %318, %325 : vector<1x256xf32>
      %c28 = arith.constant 28 : index
      %327 = memref.load %arg2[%c28] : memref<98xf32, #tpu.memory_space<smem>>
      %c243_i32 = arith.constant 243 : i32
      %328 = tpu.dynamic_rotate %22 by %c243_i32 dim 1 : vector<1x256xf32>, i32 -> vector<1x256xf32>
      %329 = arith.andi %74, %39 : vector<1x256xi1>
      %cst_85 = arith.constant 0.000000e+00 : f32
      %330 = vector.broadcast %cst_85 : f32 to vector<1x256xf32>
      %331 = arith.select %329, %328, %330 : vector<1x256xi1>, vector<1x256xf32>
      %332 = vector.broadcast %327 : f32 to vector<1x256xf32>
      %333 = arith.mulf %331, %332 : vector<1x256xf32>
      %334 = arith.addf %271, %333 : vector<1x256xf32>
      %c29 = arith.constant 29 : index
      %335 = memref.load %arg2[%c29] : memref<98xf32, #tpu.memory_space<smem>>
      %c242_i32 = arith.constant 242 : i32
      %336 = tpu.dynamic_rotate %22 by %c242_i32 dim 1 : vector<1x256xf32>, i32 -> vector<1x256xf32>
      %337 = arith.andi %74, %49 : vector<1x256xi1>
      %cst_86 = arith.constant 0.000000e+00 : f32
      %338 = vector.broadcast %cst_86 : f32 to vector<1x256xf32>
      %339 = arith.select %337, %336, %338 : vector<1x256xi1>, vector<1x256xf32>
      %340 = vector.broadcast %335 : f32 to vector<1x256xf32>
      %341 = arith.mulf %339, %340 : vector<1x256xf32>
      %342 = arith.addf %334, %341 : vector<1x256xf32>
      %c30 = arith.constant 30 : index
      %343 = memref.load %arg2[%c30] : memref<98xf32, #tpu.memory_space<smem>>
      %c241_i32 = arith.constant 241 : i32
      %344 = tpu.dynamic_rotate %22 by %c241_i32 dim 1 : vector<1x256xf32>, i32 -> vector<1x256xf32>
      %345 = arith.andi %74, %59 : vector<1x256xi1>
      %cst_87 = arith.constant 0.000000e+00 : f32
      %346 = vector.broadcast %cst_87 : f32 to vector<1x256xf32>
      %347 = arith.select %345, %344, %346 : vector<1x256xi1>, vector<1x256xf32>
      %348 = vector.broadcast %343 : f32 to vector<1x256xf32>
      %349 = arith.mulf %347, %348 : vector<1x256xf32>
      %350 = arith.addf %342, %349 : vector<1x256xf32>
      %c31 = arith.constant 31 : index
      %351 = memref.load %arg2[%c31] : memref<98xf32, #tpu.memory_space<smem>>
      %c240_i32 = arith.constant 240 : i32
      %352 = tpu.dynamic_rotate %22 by %c240_i32 dim 1 : vector<1x256xf32>, i32 -> vector<1x256xf32>
      %353 = arith.andi %74, %69 : vector<1x256xi1>
      %cst_88 = arith.constant 0.000000e+00 : f32
      %354 = vector.broadcast %cst_88 : f32 to vector<1x256xf32>
      %355 = arith.select %353, %352, %354 : vector<1x256xi1>, vector<1x256xf32>
      %356 = vector.broadcast %351 : f32 to vector<1x256xf32>
      %357 = arith.mulf %355, %356 : vector<1x256xf32>
      %358 = arith.addf %350, %357 : vector<1x256xf32>
      %c32 = arith.constant 32 : index
      %359 = memref.load %arg2[%c32] : memref<98xf32, #tpu.memory_space<smem>>
      %c239_i32 = arith.constant 239 : i32
      %360 = tpu.dynamic_rotate %22 by %c239_i32 dim 1 : vector<1x256xf32>, i32 -> vector<1x256xf32>
      %361 = arith.andi %74, %79 : vector<1x256xi1>
      %cst_89 = arith.constant 0.000000e+00 : f32
      %362 = vector.broadcast %cst_89 : f32 to vector<1x256xf32>
      %363 = arith.select %361, %360, %362 : vector<1x256xi1>, vector<1x256xf32>
      %364 = vector.broadcast %359 : f32 to vector<1x256xf32>
      %365 = arith.mulf %363, %364 : vector<1x256xf32>
      %366 = arith.addf %358, %365 : vector<1x256xf32>
      %c33 = arith.constant 33 : index
      %367 = memref.load %arg2[%c33] : memref<98xf32, #tpu.memory_space<smem>>
      %c238_i32 = arith.constant 238 : i32
      %368 = tpu.dynamic_rotate %22 by %c238_i32 dim 1 : vector<1x256xf32>, i32 -> vector<1x256xf32>
      %369 = arith.andi %74, %89 : vector<1x256xi1>
      %cst_90 = arith.constant 0.000000e+00 : f32
      %370 = vector.broadcast %cst_90 : f32 to vector<1x256xf32>
      %371 = arith.select %369, %368, %370 : vector<1x256xi1>, vector<1x256xf32>
      %372 = vector.broadcast %367 : f32 to vector<1x256xf32>
      %373 = arith.mulf %371, %372 : vector<1x256xf32>
      %374 = arith.addf %366, %373 : vector<1x256xf32>
      %c34 = arith.constant 34 : index
      %375 = memref.load %arg2[%c34] : memref<98xf32, #tpu.memory_space<smem>>
      %c237_i32 = arith.constant 237 : i32
      %376 = tpu.dynamic_rotate %22 by %c237_i32 dim 1 : vector<1x256xf32>, i32 -> vector<1x256xf32>
      %377 = arith.andi %74, %99 : vector<1x256xi1>
      %cst_91 = arith.constant 0.000000e+00 : f32
      %378 = vector.broadcast %cst_91 : f32 to vector<1x256xf32>
      %379 = arith.select %377, %376, %378 : vector<1x256xi1>, vector<1x256xf32>
      %380 = vector.broadcast %375 : f32 to vector<1x256xf32>
      %381 = arith.mulf %379, %380 : vector<1x256xf32>
      %382 = arith.addf %374, %381 : vector<1x256xf32>
      %c35 = arith.constant 35 : index
      %383 = memref.load %arg2[%c35] : memref<98xf32, #tpu.memory_space<smem>>
      %c227_i32 = arith.constant 227 : i32
      %384 = tpu.dynamic_rotate %22 by %c227_i32 dim 1 : vector<1x256xf32>, i32 -> vector<1x256xf32>
      %385 = arith.andi %84, %39 : vector<1x256xi1>
      %cst_92 = arith.constant 0.000000e+00 : f32
      %386 = vector.broadcast %cst_92 : f32 to vector<1x256xf32>
      %387 = arith.select %385, %384, %386 : vector<1x256xi1>, vector<1x256xf32>
      %388 = vector.broadcast %383 : f32 to vector<1x256xf32>
      %389 = arith.mulf %387, %388 : vector<1x256xf32>
      %390 = arith.addf %326, %389 : vector<1x256xf32>
      %c36 = arith.constant 36 : index
      %391 = memref.load %arg2[%c36] : memref<98xf32, #tpu.memory_space<smem>>
      %c226_i32 = arith.constant 226 : i32
      %392 = tpu.dynamic_rotate %22 by %c226_i32 dim 1 : vector<1x256xf32>, i32 -> vector<1x256xf32>
      %393 = arith.andi %84, %49 : vector<1x256xi1>
      %cst_93 = arith.constant 0.000000e+00 : f32
      %394 = vector.broadcast %cst_93 : f32 to vector<1x256xf32>
      %395 = arith.select %393, %392, %394 : vector<1x256xi1>, vector<1x256xf32>
      %396 = vector.broadcast %391 : f32 to vector<1x256xf32>
      %397 = arith.mulf %395, %396 : vector<1x256xf32>
      %398 = arith.addf %390, %397 : vector<1x256xf32>
      %c37 = arith.constant 37 : index
      %399 = memref.load %arg2[%c37] : memref<98xf32, #tpu.memory_space<smem>>
      %c225_i32 = arith.constant 225 : i32
      %400 = tpu.dynamic_rotate %22 by %c225_i32 dim 1 : vector<1x256xf32>, i32 -> vector<1x256xf32>
      %401 = arith.andi %84, %59 : vector<1x256xi1>
      %cst_94 = arith.constant 0.000000e+00 : f32
      %402 = vector.broadcast %cst_94 : f32 to vector<1x256xf32>
      %403 = arith.select %401, %400, %402 : vector<1x256xi1>, vector<1x256xf32>
      %404 = vector.broadcast %399 : f32 to vector<1x256xf32>
      %405 = arith.mulf %403, %404 : vector<1x256xf32>
      %406 = arith.addf %398, %405 : vector<1x256xf32>
      %c38 = arith.constant 38 : index
      %407 = memref.load %arg2[%c38] : memref<98xf32, #tpu.memory_space<smem>>
      %c224_i32 = arith.constant 224 : i32
      %408 = tpu.dynamic_rotate %22 by %c224_i32 dim 1 : vector<1x256xf32>, i32 -> vector<1x256xf32>
      %409 = arith.andi %84, %69 : vector<1x256xi1>
      %cst_95 = arith.constant 0.000000e+00 : f32
      %410 = vector.broadcast %cst_95 : f32 to vector<1x256xf32>
      %411 = arith.select %409, %408, %410 : vector<1x256xi1>, vector<1x256xf32>
      %412 = vector.broadcast %407 : f32 to vector<1x256xf32>
      %413 = arith.mulf %411, %412 : vector<1x256xf32>
      %414 = arith.addf %406, %413 : vector<1x256xf32>
      %c39 = arith.constant 39 : index
      %415 = memref.load %arg2[%c39] : memref<98xf32, #tpu.memory_space<smem>>
      %c223_i32 = arith.constant 223 : i32
      %416 = tpu.dynamic_rotate %22 by %c223_i32 dim 1 : vector<1x256xf32>, i32 -> vector<1x256xf32>
      %417 = arith.andi %84, %79 : vector<1x256xi1>
      %cst_96 = arith.constant 0.000000e+00 : f32
      %418 = vector.broadcast %cst_96 : f32 to vector<1x256xf32>
      %419 = arith.select %417, %416, %418 : vector<1x256xi1>, vector<1x256xf32>
      %420 = vector.broadcast %415 : f32 to vector<1x256xf32>
      %421 = arith.mulf %419, %420 : vector<1x256xf32>
      %422 = arith.addf %414, %421 : vector<1x256xf32>
      %c40 = arith.constant 40 : index
      %423 = memref.load %arg2[%c40] : memref<98xf32, #tpu.memory_space<smem>>
      %c222_i32 = arith.constant 222 : i32
      %424 = tpu.dynamic_rotate %22 by %c222_i32 dim 1 : vector<1x256xf32>, i32 -> vector<1x256xf32>
      %425 = arith.andi %84, %89 : vector<1x256xi1>
      %cst_97 = arith.constant 0.000000e+00 : f32
      %426 = vector.broadcast %cst_97 : f32 to vector<1x256xf32>
      %427 = arith.select %425, %424, %426 : vector<1x256xi1>, vector<1x256xf32>
      %428 = vector.broadcast %423 : f32 to vector<1x256xf32>
      %429 = arith.mulf %427, %428 : vector<1x256xf32>
      %430 = arith.addf %422, %429 : vector<1x256xf32>
      %c41 = arith.constant 41 : index
      %431 = memref.load %arg2[%c41] : memref<98xf32, #tpu.memory_space<smem>>
      %c221_i32 = arith.constant 221 : i32
      %432 = tpu.dynamic_rotate %22 by %c221_i32 dim 1 : vector<1x256xf32>, i32 -> vector<1x256xf32>
      %433 = arith.andi %84, %99 : vector<1x256xi1>
      %cst_98 = arith.constant 0.000000e+00 : f32
      %434 = vector.broadcast %cst_98 : f32 to vector<1x256xf32>
      %435 = arith.select %433, %432, %434 : vector<1x256xi1>, vector<1x256xf32>
      %436 = vector.broadcast %431 : f32 to vector<1x256xf32>
      %437 = arith.mulf %435, %436 : vector<1x256xf32>
      %438 = arith.addf %430, %437 : vector<1x256xf32>
      %c42 = arith.constant 42 : index
      %439 = memref.load %arg2[%c42] : memref<98xf32, #tpu.memory_space<smem>>
      %c211_i32 = arith.constant 211 : i32
      %440 = tpu.dynamic_rotate %22 by %c211_i32 dim 1 : vector<1x256xf32>, i32 -> vector<1x256xf32>
      %441 = arith.andi %94, %39 : vector<1x256xi1>
      %cst_99 = arith.constant 0.000000e+00 : f32
      %442 = vector.broadcast %cst_99 : f32 to vector<1x256xf32>
      %443 = arith.select %441, %440, %442 : vector<1x256xi1>, vector<1x256xf32>
      %444 = vector.broadcast %439 : f32 to vector<1x256xf32>
      %445 = arith.mulf %443, %444 : vector<1x256xf32>
      %446 = arith.addf %382, %445 : vector<1x256xf32>
      %c43 = arith.constant 43 : index
      %447 = memref.load %arg2[%c43] : memref<98xf32, #tpu.memory_space<smem>>
      %c210_i32 = arith.constant 210 : i32
      %448 = tpu.dynamic_rotate %22 by %c210_i32 dim 1 : vector<1x256xf32>, i32 -> vector<1x256xf32>
      %449 = arith.andi %94, %49 : vector<1x256xi1>
      %cst_100 = arith.constant 0.000000e+00 : f32
      %450 = vector.broadcast %cst_100 : f32 to vector<1x256xf32>
      %451 = arith.select %449, %448, %450 : vector<1x256xi1>, vector<1x256xf32>
      %452 = vector.broadcast %447 : f32 to vector<1x256xf32>
      %453 = arith.mulf %451, %452 : vector<1x256xf32>
      %454 = arith.addf %446, %453 : vector<1x256xf32>
      %c44 = arith.constant 44 : index
      %455 = memref.load %arg2[%c44] : memref<98xf32, #tpu.memory_space<smem>>
      %c209_i32 = arith.constant 209 : i32
      %456 = tpu.dynamic_rotate %22 by %c209_i32 dim 1 : vector<1x256xf32>, i32 -> vector<1x256xf32>
      %457 = arith.andi %94, %59 : vector<1x256xi1>
      %cst_101 = arith.constant 0.000000e+00 : f32
      %458 = vector.broadcast %cst_101 : f32 to vector<1x256xf32>
      %459 = arith.select %457, %456, %458 : vector<1x256xi1>, vector<1x256xf32>
      %460 = vector.broadcast %455 : f32 to vector<1x256xf32>
      %461 = arith.mulf %459, %460 : vector<1x256xf32>
      %462 = arith.addf %454, %461 : vector<1x256xf32>
      %c45 = arith.constant 45 : index
      %463 = memref.load %arg2[%c45] : memref<98xf32, #tpu.memory_space<smem>>
      %c208_i32 = arith.constant 208 : i32
      %464 = tpu.dynamic_rotate %22 by %c208_i32 dim 1 : vector<1x256xf32>, i32 -> vector<1x256xf32>
      %465 = arith.andi %94, %69 : vector<1x256xi1>
      %cst_102 = arith.constant 0.000000e+00 : f32
      %466 = vector.broadcast %cst_102 : f32 to vector<1x256xf32>
      %467 = arith.select %465, %464, %466 : vector<1x256xi1>, vector<1x256xf32>
      %468 = vector.broadcast %463 : f32 to vector<1x256xf32>
      %469 = arith.mulf %467, %468 : vector<1x256xf32>
      %470 = arith.addf %462, %469 : vector<1x256xf32>
      %c46 = arith.constant 46 : index
      %471 = memref.load %arg2[%c46] : memref<98xf32, #tpu.memory_space<smem>>
      %c207_i32 = arith.constant 207 : i32
      %472 = tpu.dynamic_rotate %22 by %c207_i32 dim 1 : vector<1x256xf32>, i32 -> vector<1x256xf32>
      %473 = arith.andi %94, %79 : vector<1x256xi1>
      %cst_103 = arith.constant 0.000000e+00 : f32
      %474 = vector.broadcast %cst_103 : f32 to vector<1x256xf32>
      %475 = arith.select %473, %472, %474 : vector<1x256xi1>, vector<1x256xf32>
      %476 = vector.broadcast %471 : f32 to vector<1x256xf32>
      %477 = arith.mulf %475, %476 : vector<1x256xf32>
      %478 = arith.addf %470, %477 : vector<1x256xf32>
      %c47 = arith.constant 47 : index
      %479 = memref.load %arg2[%c47] : memref<98xf32, #tpu.memory_space<smem>>
      %c206_i32 = arith.constant 206 : i32
      %480 = tpu.dynamic_rotate %22 by %c206_i32 dim 1 : vector<1x256xf32>, i32 -> vector<1x256xf32>
      %481 = arith.andi %94, %89 : vector<1x256xi1>
      %cst_104 = arith.constant 0.000000e+00 : f32
      %482 = vector.broadcast %cst_104 : f32 to vector<1x256xf32>
      %483 = arith.select %481, %480, %482 : vector<1x256xi1>, vector<1x256xf32>
      %484 = vector.broadcast %479 : f32 to vector<1x256xf32>
      %485 = arith.mulf %483, %484 : vector<1x256xf32>
      %486 = arith.addf %478, %485 : vector<1x256xf32>
      %c48 = arith.constant 48 : index
      %487 = memref.load %arg2[%c48] : memref<98xf32, #tpu.memory_space<smem>>
      %c205_i32 = arith.constant 205 : i32
      %488 = tpu.dynamic_rotate %22 by %c205_i32 dim 1 : vector<1x256xf32>, i32 -> vector<1x256xf32>
      %489 = arith.andi %94, %99 : vector<1x256xi1>
      %cst_105 = arith.constant 0.000000e+00 : f32
      %490 = vector.broadcast %cst_105 : f32 to vector<1x256xf32>
      %491 = arith.select %489, %488, %490 : vector<1x256xi1>, vector<1x256xf32>
      %492 = vector.broadcast %487 : f32 to vector<1x256xf32>
      %493 = arith.mulf %491, %492 : vector<1x256xf32>
      %494 = arith.addf %486, %493 : vector<1x256xf32>
      %c49 = arith.constant 49 : index
      %495 = memref.load %arg2[%c49] : memref<98xf32, #tpu.memory_space<smem>>
      %c51_i32_106 = arith.constant 51 : i32
      %496 = tpu.dynamic_rotate %25 by %c51_i32_106 dim 1 : vector<1x256xf32>, i32 -> vector<1x256xf32>
      %497 = arith.andi %34, %39 : vector<1x256xi1>
      %cst_107 = arith.constant 0.000000e+00 : f32
      %498 = vector.broadcast %cst_107 : f32 to vector<1x256xf32>
      %499 = arith.select %497, %496, %498 : vector<1x256xi1>, vector<1x256xf32>
      %500 = vector.broadcast %495 : f32 to vector<1x256xf32>
      %501 = arith.mulf %499, %500 : vector<1x256xf32>
      %502 = arith.addf %102, %501 : vector<1x256xf32>
      %c50 = arith.constant 50 : index
      %503 = memref.load %arg2[%c50] : memref<98xf32, #tpu.memory_space<smem>>
      %c50_i32_108 = arith.constant 50 : i32
      %504 = tpu.dynamic_rotate %25 by %c50_i32_108 dim 1 : vector<1x256xf32>, i32 -> vector<1x256xf32>
      %505 = arith.andi %34, %49 : vector<1x256xi1>
      %cst_109 = arith.constant 0.000000e+00 : f32
      %506 = vector.broadcast %cst_109 : f32 to vector<1x256xf32>
      %507 = arith.select %505, %504, %506 : vector<1x256xi1>, vector<1x256xf32>
      %508 = vector.broadcast %503 : f32 to vector<1x256xf32>
      %509 = arith.mulf %507, %508 : vector<1x256xf32>
      %510 = arith.addf %502, %509 : vector<1x256xf32>
      %c51 = arith.constant 51 : index
      %511 = memref.load %arg2[%c51] : memref<98xf32, #tpu.memory_space<smem>>
      %c49_i32_110 = arith.constant 49 : i32
      %512 = tpu.dynamic_rotate %25 by %c49_i32_110 dim 1 : vector<1x256xf32>, i32 -> vector<1x256xf32>
      %513 = arith.andi %34, %59 : vector<1x256xi1>
      %cst_111 = arith.constant 0.000000e+00 : f32
      %514 = vector.broadcast %cst_111 : f32 to vector<1x256xf32>
      %515 = arith.select %513, %512, %514 : vector<1x256xi1>, vector<1x256xf32>
      %516 = vector.broadcast %511 : f32 to vector<1x256xf32>
      %517 = arith.mulf %515, %516 : vector<1x256xf32>
      %518 = arith.addf %510, %517 : vector<1x256xf32>
      %c52 = arith.constant 52 : index
      %519 = memref.load %arg2[%c52] : memref<98xf32, #tpu.memory_space<smem>>
      %c48_i32_112 = arith.constant 48 : i32
      %520 = tpu.dynamic_rotate %25 by %c48_i32_112 dim 1 : vector<1x256xf32>, i32 -> vector<1x256xf32>
      %521 = arith.andi %34, %69 : vector<1x256xi1>
      %cst_113 = arith.constant 0.000000e+00 : f32
      %522 = vector.broadcast %cst_113 : f32 to vector<1x256xf32>
      %523 = arith.select %521, %520, %522 : vector<1x256xi1>, vector<1x256xf32>
      %524 = vector.broadcast %519 : f32 to vector<1x256xf32>
      %525 = arith.mulf %523, %524 : vector<1x256xf32>
      %526 = arith.addf %518, %525 : vector<1x256xf32>
      %c53 = arith.constant 53 : index
      %527 = memref.load %arg2[%c53] : memref<98xf32, #tpu.memory_space<smem>>
      %c47_i32_114 = arith.constant 47 : i32
      %528 = tpu.dynamic_rotate %25 by %c47_i32_114 dim 1 : vector<1x256xf32>, i32 -> vector<1x256xf32>
      %529 = arith.andi %34, %79 : vector<1x256xi1>
      %cst_115 = arith.constant 0.000000e+00 : f32
      %530 = vector.broadcast %cst_115 : f32 to vector<1x256xf32>
      %531 = arith.select %529, %528, %530 : vector<1x256xi1>, vector<1x256xf32>
      %532 = vector.broadcast %527 : f32 to vector<1x256xf32>
      %533 = arith.mulf %531, %532 : vector<1x256xf32>
      %534 = arith.addf %526, %533 : vector<1x256xf32>
      %c54 = arith.constant 54 : index
      %535 = memref.load %arg2[%c54] : memref<98xf32, #tpu.memory_space<smem>>
      %c46_i32_116 = arith.constant 46 : i32
      %536 = tpu.dynamic_rotate %25 by %c46_i32_116 dim 1 : vector<1x256xf32>, i32 -> vector<1x256xf32>
      %537 = arith.andi %34, %89 : vector<1x256xi1>
      %cst_117 = arith.constant 0.000000e+00 : f32
      %538 = vector.broadcast %cst_117 : f32 to vector<1x256xf32>
      %539 = arith.select %537, %536, %538 : vector<1x256xi1>, vector<1x256xf32>
      %540 = vector.broadcast %535 : f32 to vector<1x256xf32>
      %541 = arith.mulf %539, %540 : vector<1x256xf32>
      %542 = arith.addf %534, %541 : vector<1x256xf32>
      %c55 = arith.constant 55 : index
      %543 = memref.load %arg2[%c55] : memref<98xf32, #tpu.memory_space<smem>>
      %c45_i32_118 = arith.constant 45 : i32
      %544 = tpu.dynamic_rotate %25 by %c45_i32_118 dim 1 : vector<1x256xf32>, i32 -> vector<1x256xf32>
      %545 = arith.andi %34, %99 : vector<1x256xi1>
      %cst_119 = arith.constant 0.000000e+00 : f32
      %546 = vector.broadcast %cst_119 : f32 to vector<1x256xf32>
      %547 = arith.select %545, %544, %546 : vector<1x256xi1>, vector<1x256xf32>
      %548 = vector.broadcast %543 : f32 to vector<1x256xf32>
      %549 = arith.mulf %547, %548 : vector<1x256xf32>
      %550 = arith.addf %542, %549 : vector<1x256xf32>
      %c56 = arith.constant 56 : index
      %551 = memref.load %arg2[%c56] : memref<98xf32, #tpu.memory_space<smem>>
      %c35_i32_120 = arith.constant 35 : i32
      %552 = tpu.dynamic_rotate %25 by %c35_i32_120 dim 1 : vector<1x256xf32>, i32 -> vector<1x256xf32>
      %553 = arith.andi %44, %39 : vector<1x256xi1>
      %cst_121 = arith.constant 0.000000e+00 : f32
      %554 = vector.broadcast %cst_121 : f32 to vector<1x256xf32>
      %555 = arith.select %553, %552, %554 : vector<1x256xi1>, vector<1x256xf32>
      %556 = vector.broadcast %551 : f32 to vector<1x256xf32>
      %557 = arith.mulf %555, %556 : vector<1x256xf32>
      %558 = arith.addf %103, %557 : vector<1x256xf32>
      %c57 = arith.constant 57 : index
      %559 = memref.load %arg2[%c57] : memref<98xf32, #tpu.memory_space<smem>>
      %c34_i32_122 = arith.constant 34 : i32
      %560 = tpu.dynamic_rotate %25 by %c34_i32_122 dim 1 : vector<1x256xf32>, i32 -> vector<1x256xf32>
      %561 = arith.andi %44, %49 : vector<1x256xi1>
      %cst_123 = arith.constant 0.000000e+00 : f32
      %562 = vector.broadcast %cst_123 : f32 to vector<1x256xf32>
      %563 = arith.select %561, %560, %562 : vector<1x256xi1>, vector<1x256xf32>
      %564 = vector.broadcast %559 : f32 to vector<1x256xf32>
      %565 = arith.mulf %563, %564 : vector<1x256xf32>
      %566 = arith.addf %558, %565 : vector<1x256xf32>
      %c58 = arith.constant 58 : index
      %567 = memref.load %arg2[%c58] : memref<98xf32, #tpu.memory_space<smem>>
      %c33_i32_124 = arith.constant 33 : i32
      %568 = tpu.dynamic_rotate %25 by %c33_i32_124 dim 1 : vector<1x256xf32>, i32 -> vector<1x256xf32>
      %569 = arith.andi %44, %59 : vector<1x256xi1>
      %cst_125 = arith.constant 0.000000e+00 : f32
      %570 = vector.broadcast %cst_125 : f32 to vector<1x256xf32>
      %571 = arith.select %569, %568, %570 : vector<1x256xi1>, vector<1x256xf32>
      %572 = vector.broadcast %567 : f32 to vector<1x256xf32>
      %573 = arith.mulf %571, %572 : vector<1x256xf32>
      %574 = arith.addf %566, %573 : vector<1x256xf32>
      %c59 = arith.constant 59 : index
      %575 = memref.load %arg2[%c59] : memref<98xf32, #tpu.memory_space<smem>>
      %c32_i32_126 = arith.constant 32 : i32
      %576 = tpu.dynamic_rotate %25 by %c32_i32_126 dim 1 : vector<1x256xf32>, i32 -> vector<1x256xf32>
      %577 = arith.andi %44, %69 : vector<1x256xi1>
      %cst_127 = arith.constant 0.000000e+00 : f32
      %578 = vector.broadcast %cst_127 : f32 to vector<1x256xf32>
      %579 = arith.select %577, %576, %578 : vector<1x256xi1>, vector<1x256xf32>
      %580 = vector.broadcast %575 : f32 to vector<1x256xf32>
      %581 = arith.mulf %579, %580 : vector<1x256xf32>
      %582 = arith.addf %574, %581 : vector<1x256xf32>
      %c60 = arith.constant 60 : index
      %583 = memref.load %arg2[%c60] : memref<98xf32, #tpu.memory_space<smem>>
      %c31_i32_128 = arith.constant 31 : i32
      %584 = tpu.dynamic_rotate %25 by %c31_i32_128 dim 1 : vector<1x256xf32>, i32 -> vector<1x256xf32>
      %585 = arith.andi %44, %79 : vector<1x256xi1>
      %cst_129 = arith.constant 0.000000e+00 : f32
      %586 = vector.broadcast %cst_129 : f32 to vector<1x256xf32>
      %587 = arith.select %585, %584, %586 : vector<1x256xi1>, vector<1x256xf32>
      %588 = vector.broadcast %583 : f32 to vector<1x256xf32>
      %589 = arith.mulf %587, %588 : vector<1x256xf32>
      %590 = arith.addf %582, %589 : vector<1x256xf32>
      %c61 = arith.constant 61 : index
      %591 = memref.load %arg2[%c61] : memref<98xf32, #tpu.memory_space<smem>>
      %c30_i32_130 = arith.constant 30 : i32
      %592 = tpu.dynamic_rotate %25 by %c30_i32_130 dim 1 : vector<1x256xf32>, i32 -> vector<1x256xf32>
      %593 = arith.andi %44, %89 : vector<1x256xi1>
      %cst_131 = arith.constant 0.000000e+00 : f32
      %594 = vector.broadcast %cst_131 : f32 to vector<1x256xf32>
      %595 = arith.select %593, %592, %594 : vector<1x256xi1>, vector<1x256xf32>
      %596 = vector.broadcast %591 : f32 to vector<1x256xf32>
      %597 = arith.mulf %595, %596 : vector<1x256xf32>
      %598 = arith.addf %590, %597 : vector<1x256xf32>
      %c62 = arith.constant 62 : index
      %599 = memref.load %arg2[%c62] : memref<98xf32, #tpu.memory_space<smem>>
      %c29_i32_132 = arith.constant 29 : i32
      %600 = tpu.dynamic_rotate %25 by %c29_i32_132 dim 1 : vector<1x256xf32>, i32 -> vector<1x256xf32>
      %601 = arith.andi %44, %99 : vector<1x256xi1>
      %cst_133 = arith.constant 0.000000e+00 : f32
      %602 = vector.broadcast %cst_133 : f32 to vector<1x256xf32>
      %603 = arith.select %601, %600, %602 : vector<1x256xi1>, vector<1x256xf32>
      %604 = vector.broadcast %599 : f32 to vector<1x256xf32>
      %605 = arith.mulf %603, %604 : vector<1x256xf32>
      %606 = arith.addf %598, %605 : vector<1x256xf32>
      %c63 = arith.constant 63 : index
      %607 = memref.load %arg2[%c63] : memref<98xf32, #tpu.memory_space<smem>>
      %c19_i32_134 = arith.constant 19 : i32
      %608 = tpu.dynamic_rotate %25 by %c19_i32_134 dim 1 : vector<1x256xf32>, i32 -> vector<1x256xf32>
      %609 = arith.andi %54, %39 : vector<1x256xi1>
      %cst_135 = arith.constant 0.000000e+00 : f32
      %610 = vector.broadcast %cst_135 : f32 to vector<1x256xf32>
      %611 = arith.select %609, %608, %610 : vector<1x256xi1>, vector<1x256xf32>
      %612 = vector.broadcast %607 : f32 to vector<1x256xf32>
      %613 = arith.mulf %611, %612 : vector<1x256xf32>
      %614 = arith.addf %550, %613 : vector<1x256xf32>
      %c64 = arith.constant 64 : index
      %615 = memref.load %arg2[%c64] : memref<98xf32, #tpu.memory_space<smem>>
      %c18_i32_136 = arith.constant 18 : i32
      %616 = tpu.dynamic_rotate %25 by %c18_i32_136 dim 1 : vector<1x256xf32>, i32 -> vector<1x256xf32>
      %617 = arith.andi %54, %49 : vector<1x256xi1>
      %cst_137 = arith.constant 0.000000e+00 : f32
      %618 = vector.broadcast %cst_137 : f32 to vector<1x256xf32>
      %619 = arith.select %617, %616, %618 : vector<1x256xi1>, vector<1x256xf32>
      %620 = vector.broadcast %615 : f32 to vector<1x256xf32>
      %621 = arith.mulf %619, %620 : vector<1x256xf32>
      %622 = arith.addf %614, %621 : vector<1x256xf32>
      %c65 = arith.constant 65 : index
      %623 = memref.load %arg2[%c65] : memref<98xf32, #tpu.memory_space<smem>>
      %c17_i32_138 = arith.constant 17 : i32
      %624 = tpu.dynamic_rotate %25 by %c17_i32_138 dim 1 : vector<1x256xf32>, i32 -> vector<1x256xf32>
      %625 = arith.andi %54, %59 : vector<1x256xi1>
      %cst_139 = arith.constant 0.000000e+00 : f32
      %626 = vector.broadcast %cst_139 : f32 to vector<1x256xf32>
      %627 = arith.select %625, %624, %626 : vector<1x256xi1>, vector<1x256xf32>
      %628 = vector.broadcast %623 : f32 to vector<1x256xf32>
      %629 = arith.mulf %627, %628 : vector<1x256xf32>
      %630 = arith.addf %622, %629 : vector<1x256xf32>
      %c66 = arith.constant 66 : index
      %631 = memref.load %arg2[%c66] : memref<98xf32, #tpu.memory_space<smem>>
      %c16_i32_140 = arith.constant 16 : i32
      %632 = tpu.dynamic_rotate %25 by %c16_i32_140 dim 1 : vector<1x256xf32>, i32 -> vector<1x256xf32>
      %633 = arith.andi %54, %69 : vector<1x256xi1>
      %cst_141 = arith.constant 0.000000e+00 : f32
      %634 = vector.broadcast %cst_141 : f32 to vector<1x256xf32>
      %635 = arith.select %633, %632, %634 : vector<1x256xi1>, vector<1x256xf32>
      %636 = vector.broadcast %631 : f32 to vector<1x256xf32>
      %637 = arith.mulf %635, %636 : vector<1x256xf32>
      %638 = arith.addf %630, %637 : vector<1x256xf32>
      %c67 = arith.constant 67 : index
      %639 = memref.load %arg2[%c67] : memref<98xf32, #tpu.memory_space<smem>>
      %c15_i32_142 = arith.constant 15 : i32
      %640 = tpu.dynamic_rotate %25 by %c15_i32_142 dim 1 : vector<1x256xf32>, i32 -> vector<1x256xf32>
      %641 = arith.andi %54, %79 : vector<1x256xi1>
      %cst_143 = arith.constant 0.000000e+00 : f32
      %642 = vector.broadcast %cst_143 : f32 to vector<1x256xf32>
      %643 = arith.select %641, %640, %642 : vector<1x256xi1>, vector<1x256xf32>
      %644 = vector.broadcast %639 : f32 to vector<1x256xf32>
      %645 = arith.mulf %643, %644 : vector<1x256xf32>
      %646 = arith.addf %638, %645 : vector<1x256xf32>
      %c68 = arith.constant 68 : index
      %647 = memref.load %arg2[%c68] : memref<98xf32, #tpu.memory_space<smem>>
      %c14_i32_144 = arith.constant 14 : i32
      %648 = tpu.dynamic_rotate %25 by %c14_i32_144 dim 1 : vector<1x256xf32>, i32 -> vector<1x256xf32>
      %649 = arith.andi %54, %89 : vector<1x256xi1>
      %cst_145 = arith.constant 0.000000e+00 : f32
      %650 = vector.broadcast %cst_145 : f32 to vector<1x256xf32>
      %651 = arith.select %649, %648, %650 : vector<1x256xi1>, vector<1x256xf32>
      %652 = vector.broadcast %647 : f32 to vector<1x256xf32>
      %653 = arith.mulf %651, %652 : vector<1x256xf32>
      %654 = arith.addf %646, %653 : vector<1x256xf32>
      %c69 = arith.constant 69 : index
      %655 = memref.load %arg2[%c69] : memref<98xf32, #tpu.memory_space<smem>>
      %c13_i32_146 = arith.constant 13 : i32
      %656 = tpu.dynamic_rotate %25 by %c13_i32_146 dim 1 : vector<1x256xf32>, i32 -> vector<1x256xf32>
      %657 = arith.andi %54, %99 : vector<1x256xi1>
      %cst_147 = arith.constant 0.000000e+00 : f32
      %658 = vector.broadcast %cst_147 : f32 to vector<1x256xf32>
      %659 = arith.select %657, %656, %658 : vector<1x256xi1>, vector<1x256xf32>
      %660 = vector.broadcast %655 : f32 to vector<1x256xf32>
      %661 = arith.mulf %659, %660 : vector<1x256xf32>
      %662 = arith.addf %654, %661 : vector<1x256xf32>
      %c70 = arith.constant 70 : index
      %663 = memref.load %arg2[%c70] : memref<98xf32, #tpu.memory_space<smem>>
      %c3_i32_148 = arith.constant 3 : i32
      %664 = tpu.dynamic_rotate %25 by %c3_i32_148 dim 1 : vector<1x256xf32>, i32 -> vector<1x256xf32>
      %665 = arith.andi %64, %39 : vector<1x256xi1>
      %cst_149 = arith.constant 0.000000e+00 : f32
      %666 = vector.broadcast %cst_149 : f32 to vector<1x256xf32>
      %667 = arith.select %665, %664, %666 : vector<1x256xi1>, vector<1x256xf32>
      %668 = vector.broadcast %663 : f32 to vector<1x256xf32>
      %669 = arith.mulf %667, %668 : vector<1x256xf32>
      %670 = arith.addf %606, %669 : vector<1x256xf32>
      %c71 = arith.constant 71 : index
      %671 = memref.load %arg2[%c71] : memref<98xf32, #tpu.memory_space<smem>>
      %c2_i32_150 = arith.constant 2 : i32
      %672 = tpu.dynamic_rotate %25 by %c2_i32_150 dim 1 : vector<1x256xf32>, i32 -> vector<1x256xf32>
      %673 = arith.andi %64, %49 : vector<1x256xi1>
      %cst_151 = arith.constant 0.000000e+00 : f32
      %674 = vector.broadcast %cst_151 : f32 to vector<1x256xf32>
      %675 = arith.select %673, %672, %674 : vector<1x256xi1>, vector<1x256xf32>
      %676 = vector.broadcast %671 : f32 to vector<1x256xf32>
      %677 = arith.mulf %675, %676 : vector<1x256xf32>
      %678 = arith.addf %670, %677 : vector<1x256xf32>
      %c72 = arith.constant 72 : index
      %679 = memref.load %arg2[%c72] : memref<98xf32, #tpu.memory_space<smem>>
      %c1_i32_152 = arith.constant 1 : i32
      %680 = tpu.dynamic_rotate %25 by %c1_i32_152 dim 1 : vector<1x256xf32>, i32 -> vector<1x256xf32>
      %681 = arith.andi %64, %59 : vector<1x256xi1>
      %cst_153 = arith.constant 0.000000e+00 : f32
      %682 = vector.broadcast %cst_153 : f32 to vector<1x256xf32>
      %683 = arith.select %681, %680, %682 : vector<1x256xi1>, vector<1x256xf32>
      %684 = vector.broadcast %679 : f32 to vector<1x256xf32>
      %685 = arith.mulf %683, %684 : vector<1x256xf32>
      %686 = arith.addf %678, %685 : vector<1x256xf32>
      %c73 = arith.constant 73 : index
      %687 = memref.load %arg2[%c73] : memref<98xf32, #tpu.memory_space<smem>>
      %688 = arith.andi %64, %69 : vector<1x256xi1>
      %cst_154 = arith.constant 0.000000e+00 : f32
      %689 = vector.broadcast %cst_154 : f32 to vector<1x256xf32>
      %690 = arith.select %688, %25, %689 : vector<1x256xi1>, vector<1x256xf32>
      %691 = vector.broadcast %687 : f32 to vector<1x256xf32>
      %692 = arith.mulf %690, %691 : vector<1x256xf32>
      %693 = arith.addf %686, %692 : vector<1x256xf32>
      %c74 = arith.constant 74 : index
      %694 = memref.load %arg2[%c74] : memref<98xf32, #tpu.memory_space<smem>>
      %c255_i32_155 = arith.constant 255 : i32
      %695 = tpu.dynamic_rotate %25 by %c255_i32_155 dim 1 : vector<1x256xf32>, i32 -> vector<1x256xf32>
      %696 = arith.andi %64, %79 : vector<1x256xi1>
      %cst_156 = arith.constant 0.000000e+00 : f32
      %697 = vector.broadcast %cst_156 : f32 to vector<1x256xf32>
      %698 = arith.select %696, %695, %697 : vector<1x256xi1>, vector<1x256xf32>
      %699 = vector.broadcast %694 : f32 to vector<1x256xf32>
      %700 = arith.mulf %698, %699 : vector<1x256xf32>
      %701 = arith.addf %693, %700 : vector<1x256xf32>
      %c75 = arith.constant 75 : index
      %702 = memref.load %arg2[%c75] : memref<98xf32, #tpu.memory_space<smem>>
      %c254_i32_157 = arith.constant 254 : i32
      %703 = tpu.dynamic_rotate %25 by %c254_i32_157 dim 1 : vector<1x256xf32>, i32 -> vector<1x256xf32>
      %704 = arith.andi %64, %89 : vector<1x256xi1>
      %cst_158 = arith.constant 0.000000e+00 : f32
      %705 = vector.broadcast %cst_158 : f32 to vector<1x256xf32>
      %706 = arith.select %704, %703, %705 : vector<1x256xi1>, vector<1x256xf32>
      %707 = vector.broadcast %702 : f32 to vector<1x256xf32>
      %708 = arith.mulf %706, %707 : vector<1x256xf32>
      %709 = arith.addf %701, %708 : vector<1x256xf32>
      %c76 = arith.constant 76 : index
      %710 = memref.load %arg2[%c76] : memref<98xf32, #tpu.memory_space<smem>>
      %c253_i32_159 = arith.constant 253 : i32
      %711 = tpu.dynamic_rotate %25 by %c253_i32_159 dim 1 : vector<1x256xf32>, i32 -> vector<1x256xf32>
      %712 = arith.andi %64, %99 : vector<1x256xi1>
      %cst_160 = arith.constant 0.000000e+00 : f32
      %713 = vector.broadcast %cst_160 : f32 to vector<1x256xf32>
      %714 = arith.select %712, %711, %713 : vector<1x256xi1>, vector<1x256xf32>
      %715 = vector.broadcast %710 : f32 to vector<1x256xf32>
      %716 = arith.mulf %714, %715 : vector<1x256xf32>
      %717 = arith.addf %709, %716 : vector<1x256xf32>
      %c77 = arith.constant 77 : index
      %718 = memref.load %arg2[%c77] : memref<98xf32, #tpu.memory_space<smem>>
      %c243_i32_161 = arith.constant 243 : i32
      %719 = tpu.dynamic_rotate %25 by %c243_i32_161 dim 1 : vector<1x256xf32>, i32 -> vector<1x256xf32>
      %720 = arith.andi %74, %39 : vector<1x256xi1>
      %cst_162 = arith.constant 0.000000e+00 : f32
      %721 = vector.broadcast %cst_162 : f32 to vector<1x256xf32>
      %722 = arith.select %720, %719, %721 : vector<1x256xi1>, vector<1x256xf32>
      %723 = vector.broadcast %718 : f32 to vector<1x256xf32>
      %724 = arith.mulf %722, %723 : vector<1x256xf32>
      %725 = arith.addf %662, %724 : vector<1x256xf32>
      %c78 = arith.constant 78 : index
      %726 = memref.load %arg2[%c78] : memref<98xf32, #tpu.memory_space<smem>>
      %c242_i32_163 = arith.constant 242 : i32
      %727 = tpu.dynamic_rotate %25 by %c242_i32_163 dim 1 : vector<1x256xf32>, i32 -> vector<1x256xf32>
      %728 = arith.andi %74, %49 : vector<1x256xi1>
      %cst_164 = arith.constant 0.000000e+00 : f32
      %729 = vector.broadcast %cst_164 : f32 to vector<1x256xf32>
      %730 = arith.select %728, %727, %729 : vector<1x256xi1>, vector<1x256xf32>
      %731 = vector.broadcast %726 : f32 to vector<1x256xf32>
      %732 = arith.mulf %730, %731 : vector<1x256xf32>
      %733 = arith.addf %725, %732 : vector<1x256xf32>
      %c79 = arith.constant 79 : index
      %734 = memref.load %arg2[%c79] : memref<98xf32, #tpu.memory_space<smem>>
      %c241_i32_165 = arith.constant 241 : i32
      %735 = tpu.dynamic_rotate %25 by %c241_i32_165 dim 1 : vector<1x256xf32>, i32 -> vector<1x256xf32>
      %736 = arith.andi %74, %59 : vector<1x256xi1>
      %cst_166 = arith.constant 0.000000e+00 : f32
      %737 = vector.broadcast %cst_166 : f32 to vector<1x256xf32>
      %738 = arith.select %736, %735, %737 : vector<1x256xi1>, vector<1x256xf32>
      %739 = vector.broadcast %734 : f32 to vector<1x256xf32>
      %740 = arith.mulf %738, %739 : vector<1x256xf32>
      %741 = arith.addf %733, %740 : vector<1x256xf32>
      %c80 = arith.constant 80 : index
      %742 = memref.load %arg2[%c80] : memref<98xf32, #tpu.memory_space<smem>>
      %c240_i32_167 = arith.constant 240 : i32
      %743 = tpu.dynamic_rotate %25 by %c240_i32_167 dim 1 : vector<1x256xf32>, i32 -> vector<1x256xf32>
      %744 = arith.andi %74, %69 : vector<1x256xi1>
      %cst_168 = arith.constant 0.000000e+00 : f32
      %745 = vector.broadcast %cst_168 : f32 to vector<1x256xf32>
      %746 = arith.select %744, %743, %745 : vector<1x256xi1>, vector<1x256xf32>
      %747 = vector.broadcast %742 : f32 to vector<1x256xf32>
      %748 = arith.mulf %746, %747 : vector<1x256xf32>
      %749 = arith.addf %741, %748 : vector<1x256xf32>
      %c81 = arith.constant 81 : index
      %750 = memref.load %arg2[%c81] : memref<98xf32, #tpu.memory_space<smem>>
      %c239_i32_169 = arith.constant 239 : i32
      %751 = tpu.dynamic_rotate %25 by %c239_i32_169 dim 1 : vector<1x256xf32>, i32 -> vector<1x256xf32>
      %752 = arith.andi %74, %79 : vector<1x256xi1>
      %cst_170 = arith.constant 0.000000e+00 : f32
      %753 = vector.broadcast %cst_170 : f32 to vector<1x256xf32>
      %754 = arith.select %752, %751, %753 : vector<1x256xi1>, vector<1x256xf32>
      %755 = vector.broadcast %750 : f32 to vector<1x256xf32>
      %756 = arith.mulf %754, %755 : vector<1x256xf32>
      %757 = arith.addf %749, %756 : vector<1x256xf32>
      %c82 = arith.constant 82 : index
      %758 = memref.load %arg2[%c82] : memref<98xf32, #tpu.memory_space<smem>>
      %c238_i32_171 = arith.constant 238 : i32
      %759 = tpu.dynamic_rotate %25 by %c238_i32_171 dim 1 : vector<1x256xf32>, i32 -> vector<1x256xf32>
      %760 = arith.andi %74, %89 : vector<1x256xi1>
      %cst_172 = arith.constant 0.000000e+00 : f32
      %761 = vector.broadcast %cst_172 : f32 to vector<1x256xf32>
      %762 = arith.select %760, %759, %761 : vector<1x256xi1>, vector<1x256xf32>
      %763 = vector.broadcast %758 : f32 to vector<1x256xf32>
      %764 = arith.mulf %762, %763 : vector<1x256xf32>
      %765 = arith.addf %757, %764 : vector<1x256xf32>
      %c83 = arith.constant 83 : index
      %766 = memref.load %arg2[%c83] : memref<98xf32, #tpu.memory_space<smem>>
      %c237_i32_173 = arith.constant 237 : i32
      %767 = tpu.dynamic_rotate %25 by %c237_i32_173 dim 1 : vector<1x256xf32>, i32 -> vector<1x256xf32>
      %768 = arith.andi %74, %99 : vector<1x256xi1>
      %cst_174 = arith.constant 0.000000e+00 : f32
      %769 = vector.broadcast %cst_174 : f32 to vector<1x256xf32>
      %770 = arith.select %768, %767, %769 : vector<1x256xi1>, vector<1x256xf32>
      %771 = vector.broadcast %766 : f32 to vector<1x256xf32>
      %772 = arith.mulf %770, %771 : vector<1x256xf32>
      %773 = arith.addf %765, %772 : vector<1x256xf32>
      %c84 = arith.constant 84 : index
      %774 = memref.load %arg2[%c84] : memref<98xf32, #tpu.memory_space<smem>>
      %c227_i32_175 = arith.constant 227 : i32
      %775 = tpu.dynamic_rotate %25 by %c227_i32_175 dim 1 : vector<1x256xf32>, i32 -> vector<1x256xf32>
      %776 = arith.andi %84, %39 : vector<1x256xi1>
      %cst_176 = arith.constant 0.000000e+00 : f32
      %777 = vector.broadcast %cst_176 : f32 to vector<1x256xf32>
      %778 = arith.select %776, %775, %777 : vector<1x256xi1>, vector<1x256xf32>
      %779 = vector.broadcast %774 : f32 to vector<1x256xf32>
      %780 = arith.mulf %778, %779 : vector<1x256xf32>
      %781 = arith.addf %717, %780 : vector<1x256xf32>
      %c85 = arith.constant 85 : index
      %782 = memref.load %arg2[%c85] : memref<98xf32, #tpu.memory_space<smem>>
      %c226_i32_177 = arith.constant 226 : i32
      %783 = tpu.dynamic_rotate %25 by %c226_i32_177 dim 1 : vector<1x256xf32>, i32 -> vector<1x256xf32>
      %784 = arith.andi %84, %49 : vector<1x256xi1>
      %cst_178 = arith.constant 0.000000e+00 : f32
      %785 = vector.broadcast %cst_178 : f32 to vector<1x256xf32>
      %786 = arith.select %784, %783, %785 : vector<1x256xi1>, vector<1x256xf32>
      %787 = vector.broadcast %782 : f32 to vector<1x256xf32>
      %788 = arith.mulf %786, %787 : vector<1x256xf32>
      %789 = arith.addf %781, %788 : vector<1x256xf32>
      %c86 = arith.constant 86 : index
      %790 = memref.load %arg2[%c86] : memref<98xf32, #tpu.memory_space<smem>>
      %c225_i32_179 = arith.constant 225 : i32
      %791 = tpu.dynamic_rotate %25 by %c225_i32_179 dim 1 : vector<1x256xf32>, i32 -> vector<1x256xf32>
      %792 = arith.andi %84, %59 : vector<1x256xi1>
      %cst_180 = arith.constant 0.000000e+00 : f32
      %793 = vector.broadcast %cst_180 : f32 to vector<1x256xf32>
      %794 = arith.select %792, %791, %793 : vector<1x256xi1>, vector<1x256xf32>
      %795 = vector.broadcast %790 : f32 to vector<1x256xf32>
      %796 = arith.mulf %794, %795 : vector<1x256xf32>
      %797 = arith.addf %789, %796 : vector<1x256xf32>
      %c87 = arith.constant 87 : index
      %798 = memref.load %arg2[%c87] : memref<98xf32, #tpu.memory_space<smem>>
      %c224_i32_181 = arith.constant 224 : i32
      %799 = tpu.dynamic_rotate %25 by %c224_i32_181 dim 1 : vector<1x256xf32>, i32 -> vector<1x256xf32>
      %800 = arith.andi %84, %69 : vector<1x256xi1>
      %cst_182 = arith.constant 0.000000e+00 : f32
      %801 = vector.broadcast %cst_182 : f32 to vector<1x256xf32>
      %802 = arith.select %800, %799, %801 : vector<1x256xi1>, vector<1x256xf32>
      %803 = vector.broadcast %798 : f32 to vector<1x256xf32>
      %804 = arith.mulf %802, %803 : vector<1x256xf32>
      %805 = arith.addf %797, %804 : vector<1x256xf32>
      %c88 = arith.constant 88 : index
      %806 = memref.load %arg2[%c88] : memref<98xf32, #tpu.memory_space<smem>>
      %c223_i32_183 = arith.constant 223 : i32
      %807 = tpu.dynamic_rotate %25 by %c223_i32_183 dim 1 : vector<1x256xf32>, i32 -> vector<1x256xf32>
      %808 = arith.andi %84, %79 : vector<1x256xi1>
      %cst_184 = arith.constant 0.000000e+00 : f32
      %809 = vector.broadcast %cst_184 : f32 to vector<1x256xf32>
      %810 = arith.select %808, %807, %809 : vector<1x256xi1>, vector<1x256xf32>
      %811 = vector.broadcast %806 : f32 to vector<1x256xf32>
      %812 = arith.mulf %810, %811 : vector<1x256xf32>
      %813 = arith.addf %805, %812 : vector<1x256xf32>
      %c89 = arith.constant 89 : index
      %814 = memref.load %arg2[%c89] : memref<98xf32, #tpu.memory_space<smem>>
      %c222_i32_185 = arith.constant 222 : i32
      %815 = tpu.dynamic_rotate %25 by %c222_i32_185 dim 1 : vector<1x256xf32>, i32 -> vector<1x256xf32>
      %816 = arith.andi %84, %89 : vector<1x256xi1>
      %cst_186 = arith.constant 0.000000e+00 : f32
      %817 = vector.broadcast %cst_186 : f32 to vector<1x256xf32>
      %818 = arith.select %816, %815, %817 : vector<1x256xi1>, vector<1x256xf32>
      %819 = vector.broadcast %814 : f32 to vector<1x256xf32>
      %820 = arith.mulf %818, %819 : vector<1x256xf32>
      %821 = arith.addf %813, %820 : vector<1x256xf32>
      %c90 = arith.constant 90 : index
      %822 = memref.load %arg2[%c90] : memref<98xf32, #tpu.memory_space<smem>>
      %c221_i32_187 = arith.constant 221 : i32
      %823 = tpu.dynamic_rotate %25 by %c221_i32_187 dim 1 : vector<1x256xf32>, i32 -> vector<1x256xf32>
      %824 = arith.andi %84, %99 : vector<1x256xi1>
      %cst_188 = arith.constant 0.000000e+00 : f32
      %825 = vector.broadcast %cst_188 : f32 to vector<1x256xf32>
      %826 = arith.select %824, %823, %825 : vector<1x256xi1>, vector<1x256xf32>
      %827 = vector.broadcast %822 : f32 to vector<1x256xf32>
      %828 = arith.mulf %826, %827 : vector<1x256xf32>
      %829 = arith.addf %821, %828 : vector<1x256xf32>
      %c91 = arith.constant 91 : index
      %830 = memref.load %arg2[%c91] : memref<98xf32, #tpu.memory_space<smem>>
      %c211_i32_189 = arith.constant 211 : i32
      %831 = tpu.dynamic_rotate %25 by %c211_i32_189 dim 1 : vector<1x256xf32>, i32 -> vector<1x256xf32>
      %832 = arith.andi %94, %39 : vector<1x256xi1>
      %cst_190 = arith.constant 0.000000e+00 : f32
      %833 = vector.broadcast %cst_190 : f32 to vector<1x256xf32>
      %834 = arith.select %832, %831, %833 : vector<1x256xi1>, vector<1x256xf32>
      %835 = vector.broadcast %830 : f32 to vector<1x256xf32>
      %836 = arith.mulf %834, %835 : vector<1x256xf32>
      %837 = arith.addf %773, %836 : vector<1x256xf32>
      %c92 = arith.constant 92 : index
      %838 = memref.load %arg2[%c92] : memref<98xf32, #tpu.memory_space<smem>>
      %c210_i32_191 = arith.constant 210 : i32
      %839 = tpu.dynamic_rotate %25 by %c210_i32_191 dim 1 : vector<1x256xf32>, i32 -> vector<1x256xf32>
      %840 = arith.andi %94, %49 : vector<1x256xi1>
      %cst_192 = arith.constant 0.000000e+00 : f32
      %841 = vector.broadcast %cst_192 : f32 to vector<1x256xf32>
      %842 = arith.select %840, %839, %841 : vector<1x256xi1>, vector<1x256xf32>
      %843 = vector.broadcast %838 : f32 to vector<1x256xf32>
      %844 = arith.mulf %842, %843 : vector<1x256xf32>
      %845 = arith.addf %837, %844 : vector<1x256xf32>
      %c93 = arith.constant 93 : index
      %846 = memref.load %arg2[%c93] : memref<98xf32, #tpu.memory_space<smem>>
      %c209_i32_193 = arith.constant 209 : i32
      %847 = tpu.dynamic_rotate %25 by %c209_i32_193 dim 1 : vector<1x256xf32>, i32 -> vector<1x256xf32>
      %848 = arith.andi %94, %59 : vector<1x256xi1>
      %cst_194 = arith.constant 0.000000e+00 : f32
      %849 = vector.broadcast %cst_194 : f32 to vector<1x256xf32>
      %850 = arith.select %848, %847, %849 : vector<1x256xi1>, vector<1x256xf32>
      %851 = vector.broadcast %846 : f32 to vector<1x256xf32>
      %852 = arith.mulf %850, %851 : vector<1x256xf32>
      %853 = arith.addf %845, %852 : vector<1x256xf32>
      %c94 = arith.constant 94 : index
      %854 = memref.load %arg2[%c94] : memref<98xf32, #tpu.memory_space<smem>>
      %c208_i32_195 = arith.constant 208 : i32
      %855 = tpu.dynamic_rotate %25 by %c208_i32_195 dim 1 : vector<1x256xf32>, i32 -> vector<1x256xf32>
      %856 = arith.andi %94, %69 : vector<1x256xi1>
      %cst_196 = arith.constant 0.000000e+00 : f32
      %857 = vector.broadcast %cst_196 : f32 to vector<1x256xf32>
      %858 = arith.select %856, %855, %857 : vector<1x256xi1>, vector<1x256xf32>
      %859 = vector.broadcast %854 : f32 to vector<1x256xf32>
      %860 = arith.mulf %858, %859 : vector<1x256xf32>
      %861 = arith.addf %853, %860 : vector<1x256xf32>
      %c95 = arith.constant 95 : index
      %862 = memref.load %arg2[%c95] : memref<98xf32, #tpu.memory_space<smem>>
      %c207_i32_197 = arith.constant 207 : i32
      %863 = tpu.dynamic_rotate %25 by %c207_i32_197 dim 1 : vector<1x256xf32>, i32 -> vector<1x256xf32>
      %864 = arith.andi %94, %79 : vector<1x256xi1>
      %cst_198 = arith.constant 0.000000e+00 : f32
      %865 = vector.broadcast %cst_198 : f32 to vector<1x256xf32>
      %866 = arith.select %864, %863, %865 : vector<1x256xi1>, vector<1x256xf32>
      %867 = vector.broadcast %862 : f32 to vector<1x256xf32>
      %868 = arith.mulf %866, %867 : vector<1x256xf32>
      %869 = arith.addf %861, %868 : vector<1x256xf32>
      %c96 = arith.constant 96 : index
      %870 = memref.load %arg2[%c96] : memref<98xf32, #tpu.memory_space<smem>>
      %c206_i32_199 = arith.constant 206 : i32
      %871 = tpu.dynamic_rotate %25 by %c206_i32_199 dim 1 : vector<1x256xf32>, i32 -> vector<1x256xf32>
      %872 = arith.andi %94, %89 : vector<1x256xi1>
      %cst_200 = arith.constant 0.000000e+00 : f32
      %873 = vector.broadcast %cst_200 : f32 to vector<1x256xf32>
      %874 = arith.select %872, %871, %873 : vector<1x256xi1>, vector<1x256xf32>
      %875 = vector.broadcast %870 : f32 to vector<1x256xf32>
      %876 = arith.mulf %874, %875 : vector<1x256xf32>
      %877 = arith.addf %869, %876 : vector<1x256xf32>
      %c97 = arith.constant 97 : index
      %878 = memref.load %arg2[%c97] : memref<98xf32, #tpu.memory_space<smem>>
      %c205_i32_201 = arith.constant 205 : i32
      %879 = tpu.dynamic_rotate %25 by %c205_i32_201 dim 1 : vector<1x256xf32>, i32 -> vector<1x256xf32>
      %880 = arith.andi %94, %99 : vector<1x256xi1>
      %cst_202 = arith.constant 0.000000e+00 : f32
      %881 = vector.broadcast %cst_202 : f32 to vector<1x256xf32>
      %882 = arith.select %880, %879, %881 : vector<1x256xi1>, vector<1x256xf32>
      %883 = vector.broadcast %878 : f32 to vector<1x256xf32>
      %884 = arith.mulf %882, %883 : vector<1x256xf32>
      %885 = arith.addf %877, %884 : vector<1x256xf32>
      %886 = arith.addf %494, %438 : vector<1x256xf32>
      %887 = arith.addf %885, %829 : vector<1x256xf32>
      %888 = arith.addf %886, %887 : vector<1x256xf32>
      %889 = arith.negf %888 : vector<1x256xf32>
      %890 = math.exp %889 : vector<1x256xf32>
      %cst_203 = arith.constant 1.000000e+00 : f32
      %891 = vector.broadcast %cst_203 : f32 to vector<1x256xf32>
      %892 = arith.addf %891, %890 : vector<1x256xf32>
      %893 = arith.divf %891, %892 : vector<1x256xf32>
      %c0_204 = arith.constant 0 : index
      %c0_205 = arith.constant 0 : index
      %c0_206 = arith.constant 0 : index
      %894 = vector.load %arg5[%c0_204, %c0_205, %c0_206] : memref<1x1x256xf32, #tpu.memory_space<vmem>>, vector<1x1x256xf32>
      %895 = vector.shape_cast %894 : vector<1x1x256xf32> to vector<1x256xf32>
      %896 = vector.shape_cast %893 : vector<1x256xf32> to vector<1x1x256xf32>
      tpu.vector_store %arg5[%c0_204, %c0_205, %c0_206], %896 {strides = array<i32>} : memref<1x1x256xf32, #tpu.memory_space<vmem>>, vector<1x1x256xf32>,
    } else {
    }
    return
  }
  func.func @transform_0(%arg0: i32, %arg1: i32) -> i32 {
    %c0_i32 = arith.constant 0 : i32
    %c0_i32_0 = arith.constant 0 : i32
    return %c0_i32 : i32
  }
  func.func @transform_1(%arg0: i32, %arg1: i32) -> (i32, i32, i32) {
    %c0_i32 = arith.constant 0 : i32
    %c0_i32_0 = arith.constant 0 : i32
    %c0_i32_1 = arith.constant 0 : i32
    %c0_i32_2 = arith.constant 0 : i32
    return %c0_i32, %c0_i32_0, %c0_i32_1 : i32, i32, i32
  }
  func.func @transform_2(%arg0: i32, %arg1: i32) -> (i32, i32, i32) {
    %c0_i32 = arith.constant 0 : i32
    %c0_i32_0 = arith.constant 0 : i32
    return %arg0, %arg1, %c0_i32 : i32, i32, i32
  }
  func.func @transform_3(%arg0: i32, %arg1: i32) -> (i32, i32, i32) {
    %c0_i32 = arith.constant 0 : i32
    %c0_i32_0 = arith.constant 0 : i32
    %c0_i32_1 = arith.constant 0 : i32
    return %arg0, %c0_i32, %c0_i32_0 : i32, i32, i32
  }
}

</mosaic_0001>

<llo_original>
// kernel: spatial_attention.1
$region0: #{spatial_attention.1}
  #allocation0 [shape = 'u32[]', space=smem, size = 0x4, offset = 0x4, fixed_abs, tag = 'smem constant byte address 0x4 - core index']
  #allocation1 [shape = 'u32[144,128]{1,0:T(1,128)}', space=vmem, size = 0x12000, scoped, tag = 'internal scratch']
  #allocation2 [shape = 'f32[8,256]{1,0:T(8,128)}', space=vmem, size = 0x2000, scoped, tag = 'scratch operand']
  #allocation3 [shape = 'f32[8,256]{1,0:T(8,128)}', space=vmem, size = 0x2000, scoped, tag = 'scratch operand']
  %s0 = inlined_call_operand.vmem [shape: f32[98], index: 0, kind: input, shape index: {}]
  %s1 = inlined_call_operand.vmem [shape: s32[2,1,256], index: 1, kind: input, shape index: {}]
  %s2 = inlined_call_operand.vmem [shape: f32[2,4,256], index: 2, kind: input, shape index: {}]
  %s3 = inlined_call_operand.vmem [shape: f32[2,1,256], index: 3, kind: output, shape index: {}]
  %s4 = sld [smem:[#allocation0]]
  $region57: #{spatial_attention.1} parent=0
    _
  %s6 = ssub.s32 1, %s4
  %s7 = scalar_select 0, %s6, %s4
  $region1: #{spatial_attention.1} parent=0
    #allocation4 [shape = 'u8[512]{0}', space=smem, size = 0x200, scoped, tag = 'input window, operand 0, single buffered']
    #allocation5 [shape = 's32[2]{0}', space=sflag, size = 0x8, scoped, tag = 'scoped memory for spatial_attention.1']
    %8 = vsyncpa [#allocation5], 0
    loop: start=0, step=1, limit=4
    $region2: #{spatial_attention.1} parent=1 // loop_pre_header
      _
    $region3: #{spatial_attention.1} parent=1 // loop_header
      %s10 = sphi 0, %s14
      %p11 = scmp.ge.s32.totalorder %s10, 4
      %s17 = sphi 0, %s29
      %s18 = sphi 0, %s25
      %s19 = sphi 0, %s17
      %s20 = sphi 0, %s18
      %s21 = sphi 0, %s19
      %s22 = sphi 0, %s20
      %s30 = sphi 0, %s30
      %s32 = sphi 0, %s30
      %s33 = sphi 0, %s32
      %s47 = sphi 0, %s33
      %s51 = sphi 0, %s51
      %s53 = sphi 0, %s51
      %s54 = sphi 0, %s53
      %s68 = sphi 0, %s54
      %s76 = sphi 0, %s78
      %s79 = sphi 0, %s76
      %s80 = sphi 0, %s79
      %s96 = sphi 0, %s80
      %s102 = sphi 0, %s104
      %s105 = sphi 0, %s102
      %s106 = sphi 0, %s105
      %s122 = sphi 0, %s106
    $region4: #{spatial_attention.1} parent=1 // loop_header_branch
      %13 = sbr.rel (%p11) target = $region8
    $region5: #{spatial_attention.1} parent=1 // loop_body
      %s15 = ssub.s32 %s10, 1
      %s16 = ssub.s32 %s10, 2
      %s23 = sadd.s32 1, %s18
      %p24 = scmp.ge.s32.totalorder %s23, 1
      %s25 = scalar_select %p24, 0, %s23
      %s26 = sadd.s32 1, %s17
      %s27 = scalar_select %p24, %s26, %s17
      %p28 = scmp.ge.s32.totalorder %s27, 2
      %s29 = scalar_select %p28, 0, %s27
      %s31 = sadd.s32 %s30, 1
      %p34 = scmp.eq.s32.totalorder %s10, 1
      %p35 = scmp.ne.s32.totalorder %s30, %s32
      %p36 = scmp.eq.s32.totalorder %s10, 0
      %p37 = por %p35, %p36
      %p38 = scmp.ne.s32.totalorder %s30, %s32
      %p39 = scmp.eq.s32.totalorder %s15, 1
      %p40 = por %p38, %p39
      %p41 = scmp.ne.s32.totalorder %s32, %s33
      %p42 = scmp.eq.s32.totalorder %s15, 0
      %p43 = por %p41, %p42
      %p44 = scmp.ne.s32.totalorder %s32, %s33
      %p45 = scmp.eq.s32.totalorder %s16, 1
      %p46 = por %p44, %p45
      %p48 = scmp.ne.s32.totalorder %s33, %s47
      %p49 = scmp.eq.s32.totalorder %s16, 0
      %p50 = por %p48, %p49
      %s52 = sadd.s32 %s51, 1
      %p55 = scmp.eq.s32.totalorder %s10, 1
      %p56 = scmp.ne.s32.totalorder %s51, %s53
      %p57 = scmp.eq.s32.totalorder %s10, 0
      %p58 = por %p56, %p57
      %p59 = scmp.ne.s32.totalorder %s51, %s53
      %p60 = scmp.eq.s32.totalorder %s15, 1
      %p61 = por %p59, %p60
      %p62 = scmp.ne.s32.totalorder %s53, %s54
      %p63 = scmp.eq.s32.totalorder %s15, 0
      %p64 = por %p62, %p63
      %p65 = scmp.ne.s32.totalorder %s53, %s54
      %p66 = scmp.eq.s32.totalorder %s16, 1
      %p67 = por %p65, %p66
      %p69 = scmp.ne.s32.totalorder %s54, %s68
      %p70 = scmp.eq.s32.totalorder %s16, 0
      %p71 = por %p69, %p70
      %s72 = ssub.s32 %s17, %s29
      %s73 = ssub.s32 %s18, %s25
      %s74 = sor.u32 %s72, %s73
      %p75 = scmp.eq.s32.totalorder %s74, 0
      %s77 = sadd.s32 %s76, 1
      %s78 = scalar_select %p75, %s76, %s77
      %p81 = pneg %p75
      %p82 = scmp.eq.s32.totalorder %s10, 1
      %p83 = por %p81, %p82
      %p84 = scmp.ne.s32.totalorder %s76, %s79
      %p85 = scmp.eq.s32.totalorder %s10, 0
      %p86 = por %p84, %p85
      %p87 = scmp.ne.s32.totalorder %s76, %s79
      %p88 = scmp.eq.s32.totalorder %s15, 1
      %p89 = por %p87, %p88
      %p90 = scmp.ne.s32.totalorder %s79, %s80
      %p91 = scmp.eq.s32.totalorder %s15, 0
      %p92 = por %p90, %p91
      %p93 = scmp.ne.s32.totalorder %s79, %s80
      %p94 = scmp.eq.s32.totalorder %s16, 1
      %p95 = por %p93, %p94
      %p97 = scmp.ne.s32.totalorder %s80, %s96
      %p98 = scmp.eq.s32.totalorder %s16, 0
      %p99 = por %p97, %p98
      %s100 = ssub.s32 %s17, %s29
      %p101 = scmp.eq.s32.totalorder %s100, 0
      %s103 = sadd.s32 %s102, 1
      %s104 = scalar_select %p101, %s102, %s103
      %p107 = pneg %p101
      %p108 = scmp.eq.s32.totalorder %s10, 1
      %p109 = por %p107, %p108
      %p110 = scmp.ne.s32.totalorder %s102, %s105
      %p111 = scmp.eq.s32.totalorder %s10, 0
      %p112 = por %p110, %p111
      %p113 = scmp.ne.s32.totalorder %s102, %s105
      %p114 = scmp.eq.s32.totalorder %s15, 1
      %p115 = por %p113, %p114
      %p116 = scmp.ne.s32.totalorder %s105, %s106
      %p117 = scmp.eq.s32.totalorder %s15, 0
      %p118 = por %p116, %p117
      %p119 = scmp.ne.s32.totalorder %s105, %s106
      %p120 = scmp.eq.s32.totalorder %s16, 1
      %p121 = por %p119, %p120
      %p123 = scmp.ne.s32.totalorder %s106, %s122
      %p124 = scmp.eq.s32.totalorder %s16, 0
      %p125 = por %p123, %p124
      %p126 = scmp.le.s32.totalorder 1, %s10
      %p127 = scmp.lt.s32.totalorder %s10, 3
      %p128 = pnand %p126, %p127
      %p129 = pneg %p128
      // Predicated region
      $region9: #{spatial_attention.1} parent=5 // pred_check
        _
      $region10: #{spatial_attention.1} parent=5 // pred_check_branch
        %131 = sbr.rel (%p128) target = $region12
      $region11: #{spatial_attention.1} parent=5 // pred_region
        %s132 = ssub.s32 %s10, 1
        // Predicated region
        $region13: #{spatial_attention.1} parent=11 // pred_check
          %p133 = pneg %p43
        $region14: #{spatial_attention.1} parent=11 // pred_check_branch
          %135 = sbr.rel (%p133) target = $region16
        $region15: #{spatial_attention.1} parent=11 // pred_region
          %s137 = ssub.s32 16, 16
          %138 = vsyncadd [#allocation5], %s137
          %s140 = sshll.u32 %s0, 4
          %s141 = int_to_ptr.vmem [resolvable:$true] %s140
          %143 = dma.vmem_to_smem %s141, 16, [#allocation4], [#allocation5]
        $region16: #{spatial_attention.1} parent=11 // pred_fallthru
          _
        // Predicated region
        $region17: #{spatial_attention.1} parent=11 // pred_check
          %p144 = pneg %p64
        $region18: #{spatial_attention.1} parent=11 // pred_check_branch
          %146 = sbr.rel (%p144) target = $region20
        $region19: #{spatial_attention.1} parent=11 // pred_region
          _
        $region20: #{spatial_attention.1} parent=11 // pred_fallthru
          _
      $region12: #{spatial_attention.1} parent=5 // pred_fallthru
        _
      %p147 = scmp.lt.s32.totalorder %s10, 2
      // Predicated region
      $region21: #{spatial_attention.1} parent=5 // pred_check
        %p148 = pneg %p147
      $region22: #{spatial_attention.1} parent=5 // pred_check_branch
        %150 = sbr.rel (%p148) target = $region24
      $region23: #{spatial_attention.1} parent=5 // pred_region
        // Predicated region
        $region25: #{spatial_attention.1} parent=23 // pred_check
          %p151 = pneg %p86
        $region26: #{spatial_attention.1} parent=23 // pred_check_branch
          %153 = sbr.rel (%p151) target = $region28
        $region27: #{spatial_attention.1} parent=23 // pred_region
          %p154 = scmp.lt.s32.totalorder %s17, 1
          %s155 = scalar_select %p154, %s17, 1
          %p156 = scmp.lt.s32.totalorder %s18, 0
          %s157 = scalar_select %p156, %s18, 0
          %s158 = smul.addr %s157, 2
          %s159 = smul.addr %s155, 2
          %s160 = sadd.s32 %s158, %s159
          %s161 = smul.addr %s160, 4
          %s162 = scalar_lea.vmem %s2, %s161
        $region28: #{spatial_attention.1} parent=23 // pred_fallthru
          _
      $region24: #{spatial_attention.1} parent=5 // pred_fallthru
        _
      %p163 = scmp.le.s32.totalorder 1, %s10
      %p164 = scmp.lt.s32.totalorder %s10, 3
      %p165 = pnand %p163, %p164
      %p166 = pneg %p165
      // Predicated region
      $region29: #{spatial_attention.1} parent=5 // pred_check
        _
      $region30: #{spatial_attention.1} parent=5 // pred_check_branch
        %168 = sbr.rel (%p165) target = $region32
      $region31: #{spatial_attention.1} parent=5 // pred_region
        %s169 = ssub.s32 %s10, 1
        // Predicated region
        $region33: #{spatial_attention.1} parent=31 // pred_check
          %p170 = pneg %p43
        $region34: #{spatial_attention.1} parent=31 // pred_check_branch
          %172 = sbr.rel (%p170) target = $region36
        $region35: #{spatial_attention.1} parent=31 // pred_region
          %173 = dma.done [#allocation5], 16
        $region36: #{spatial_attention.1} parent=31 // pred_fallthru
          _
        %174 = sfence
        %p175 = pneg %p43
        %p176 = pneg %p40
        %p177 = pneg %p64
        %p178 = pneg %p61
        %p179 = scmp.lt.s32.totalorder %s19, 1
        %s180 = scalar_select %p179, %s19, 1
        %p181 = scmp.lt.s32.totalorder %s20, 0
        %s182 = scalar_select %p181, %s20, 0
        %s183 = smul.addr %s182, 2
        %s184 = smul.addr %s180, 2
        %s185 = sadd.s32 %s183, %s184
        %s186 = smul.addr %s185, 4
        %s187 = scalar_lea.vmem %s2, %s186
        %p188 = pneg %p92
        %p189 = pneg %p89
        %p190 = pneg %p118
        %p191 = pneg %p115
        %p192 = scmp.lt.s32.totalorder %s19, 1
        %s193 = scalar_select %p192, %s19, 1
        %s194 = smul.addr %s193, 2
        %s195 = scalar_lea.vmem %s3, %s194
        %p196 = scmp.lt.s32.totalorder %s19, 1
        %s197 = scalar_select %p196, %s19, 1
        %p198 = scmp.lt.s32.totalorder %s20, 0
        %s199 = scalar_select %p198, %s20, 0
        %s200 = smul.addr %s199, 2
        %s201 = smul.addr %s197, 2
        %s202 = sadd.s32 %s200, %s201
        %s203 = smul.addr %s202, 4
        %s204 = scalar_lea.vmem %s2, %s203
        %p205 = scmp.lt.s32.totalorder %s19, 1
        %s206 = scalar_select %p205, %s19, 1
        %s207 = smul.addr %s206, 2
        %s208 = scalar_lea.vmem %s3, %s207
        %p209 = scmp.eq.s32.totalorder %s20, 0
        // Predicated region
        $region37: #{spatial_attention.1} parent=31 // pred_check
          %p210 = pneg %p209
        $region38: #{spatial_attention.1} parent=31 // pred_check_branch
          %212 = sbr.rel (%p210) target = $region40
        $region39: #{spatial_attention.1} parent=31 // pred_region
          %213 = vst [vmem:[#allocation2] sm:$0xff] 0.0
          %214 = vst [vmem:[#allocation2 + $0x8] sm:$0xff] 0.0
          %215 = vst [vmem:[#allocation3] sm:$0xff] -inf
          %216 = vst [vmem:[#allocation3 + $0x8] sm:$0xff] -inf
        $region40: #{spatial_attention.1} parent=31 // pred_fallthru
          _
        %v217 = vld [vmem:[%s204] sm:$0xff]
        %v218 = vld [vmem:[#allocation2] ss:$8 sm:$0x3]
        %v220 = vcombine.high %v217, %v217
        %vm222 = vcmask 1043456
        %v223 = vsel %vm222, %v217, 0.0
        %v224 = vrot.slane %v223, 4
        %v225 = vadd.f32 %v223, %v224
        %v226 = vrot.slane %v225, 2
        %v227 = vadd.f32 %v225, %v226
        %v228 = vrot.slane %v227, 1
        %v229 = vadd.f32 %v227, %v228
        %v230 = vsel %vm222, %v220, 0.0
        %v231 = vrot.slane %v230, 4
        %v232 = vadd.f32 %v230, %v231
        %v233 = vrot.slane %v232, 2
        %v234 = vadd.f32 %v232, %v233
        %v235 = vrot.slane %v234, 1
        %v236 = vadd.f32 %v234, %v235
        %v239 = vcombine.low %v229, %v236
        %v241 = vunpack.c.l.s4 1966171168
        %v242 = vunpack.c.0.s8 %v241
        %v243 = vlaneseq
        %v244 = vshrl.u32 %v243, 7
        %v245 = vsub.s32 %v242, %v244
        %v246 = vrot.slane %v239, %v245
        %v248 = vunpack.c.l.s4 1966171168
        %v249 = vunpack.c.0.s8 %v248
        %v250 = vlaneseq
        %v251 = vshrl.u32 %v250, 7
        %v252 = vsub.s32 %v249, %v251
        %v253 = vrot.slane %v246, %v252
        %v255 = vadd.f32 %v218, %v253
        %v256 = vlaneseq
        %vm257 = vcmp.ge.s32.totalorder %v256, 0
        %vm258 = vcmp.lt.s32.totalorder %v256, 256
        %vm259 = vmand %vm257, %vm258
        %260 = vst.msk [vmem:[#allocation2] ss:$8 sm:$0x3] %vm259, %v255
        %261 = vst.msk [vmem:[#allocation2] ss:$8 sm:$0x0] %vm259, %v255
        %v262 = vld [vmem:[#allocation3] ss:$8 sm:$0x3]
        %v263 = vsel %vm222, %v217, -inf
        %v264 = vrot.slane %v263, 4
        %v265 = vmax.f32 %v263, %v264
        %v266 = vrot.slane %v265, 2
        %v267 = vmax.f32 %v265, %v266
        %v268 = vrot.slane %v267, 1
        %v269 = vmax.f32 %v267, %v268
        %v270 = vsel %vm222, %v220, -inf
        %v271 = vrot.slane %v270, 4
        %v272 = vmax.f32 %v270, %v271
        %v273 = vrot.slane %v272, 2
        %v274 = vmax.f32 %v272, %v273
        %v275 = vrot.slane %v274, 1
        %v276 = vmax.f32 %v274, %v275
        %v279 = vcombine.low %v269, %v276
        %v281 = vunpack.c.l.s4 1966171168
        %v282 = vunpack.c.0.s8 %v281
        %v283 = vlaneseq
        %v284 = vshrl.u32 %v283, 7
        %v285 = vsub.s32 %v282, %v284
        %v286 = vrot.slane %v279, %v285
        %v288 = vunpack.c.l.s4 1966171168
        %v289 = vunpack.c.0.s8 %v288
        %v290 = vlaneseq
        %v291 = vshrl.u32 %v290, 7
        %v292 = vsub.s32 %v289, %v291
        %v293 = vrot.slane %v286, %v292
        %v295 = vmax.f32 %v262, %v293
        %296 = vst.msk [vmem:[#allocation3] ss:$8 sm:$0x3] %vm259, %v295
        %297 = vst.msk [vmem:[#allocation3] ss:$8 sm:$0x0] %vm259, %v295
        // Predicated region
        $region41: #{spatial_attention.1} parent=31 // pred_check
          %p298 = pneg %p209
        $region42: #{spatial_attention.1} parent=31 // pred_check_branch
          %300 = sbr.rel (%p298) target = $region44
        $region43: #{spatial_attention.1} parent=31 // pred_region
          %v301 = vld [vmem:[#allocation2] sm:$0xff]
          %v302 = vld [vmem:[#allocation2 + $0x8] sm:$0xff]
          %v303 = vrot.slane %v301, 4
          %v304 = vadd.f32 %v301, %v303
          %v305 = vrot.slane %v304, 2
          %v306 = vadd.f32 %v304, %v305
          %v307 = vrot.slane %v306, 1
          %v308 = vadd.f32 %v306, %v307
          %v309 = vrot.slane %v302, 4
          %v310 = vadd.f32 %v302, %v309
          %v311 = vrot.slane %v310, 2
          %v312 = vadd.f32 %v310, %v311
          %v313 = vrot.slane %v312, 1
          %v314 = vadd.f32 %v312, %v313
          %v315 = vmul.f32 %v308, 0.25
          %v316 = vmul.f32 %v314, 0.25
          %v317 = vld [vmem:[#allocation3] sm:$0xff]
          %v318 = vld [vmem:[#allocation3 + $0x8] sm:$0xff]
          %v319 = vrot.slane %v317, 4
          %v320 = vmax.f32 %v317, %v319
          %v321 = vrot.slane %v320, 2
          %v322 = vmax.f32 %v320, %v321
          %v323 = vrot.slane %v322, 1
          %v324 = vmax.f32 %v322, %v323
          %v325 = vrot.slane %v318, 4
          %v326 = vmax.f32 %v318, %v325
          %v327 = vrot.slane %v326, 2
          %v328 = vmax.f32 %v326, %v327
          %v329 = vrot.slane %v328, 1
          %v330 = vmax.f32 %v328, %v329
          %v331 = vld [vmem:[%s1] sm:$0x3]
          %s332 = scalar_lea.vmem %s1, 2
          %v333 = vld [vmem:[%s332] sm:$0x3]
          %vm334 = vcmp.ge.s32.totalorder %v331, 3
          %vm335 = vcmp.lt.s32.totalorder %v331, 19
          %vm336 = vmand %vm334, %vm335
          %vm337 = vcmp.ge.s32.totalorder %v333, 3
          %vm338 = vcmp.lt.s32.totalorder %v333, 19
          %vm339 = vmand %vm337, %vm338
          %vm340 = vcmp.ge.s32.totalorder %v331, 2
          %vm341 = vcmp.lt.s32.totalorder %v331, 18
          %vm342 = vmand %vm340, %vm341
          %vm343 = vcmp.ge.s32.totalorder %v333, 2
          %vm344 = vcmp.lt.s32.totalorder %v333, 18
          %vm345 = vmand %vm343, %vm344
          %vm346 = vcmp.ge.s32.totalorder %v331, 1
          %vm347 = vcmp.lt.s32.totalorder %v331, 17
          %vm348 = vmand %vm346, %vm347
          %vm349 = vcmp.ge.s32.totalorder %v333, 1
          %vm350 = vcmp.lt.s32.totalorder %v333, 17
          %vm351 = vmand %vm349, %vm350
          %vm352 = vcmp.ge.s32.totalorder %v331, 0
          %vm353 = vcmp.lt.s32.totalorder %v331, 16
          %vm354 = vmand %vm352, %vm353
          %vm355 = vcmp.ge.s32.totalorder %v333, 0
          %vm356 = vcmp.lt.s32.totalorder %v333, 16
          %vm357 = vmand %vm355, %vm356
          %vm358 = vcmp.ge.s32.totalorder %v331, 4294967295
          %vm359 = vcmp.lt.s32.totalorder %v331, 15
          %vm360 = vmand %vm358, %vm359
          %vm361 = vcmp.ge.s32.totalorder %v333, 4294967295
          %vm362 = vcmp.lt.s32.totalorder %v333, 15
          %vm363 = vmand %vm361, %vm362
          %vm364 = vcmp.ge.s32.totalorder %v331, 4294967294
          %vm365 = vcmp.lt.s32.totalorder %v331, 14
          %vm366 = vmand %vm364, %vm365
          %vm367 = vcmp.ge.s32.totalorder %v333, 4294967294
          %vm368 = vcmp.lt.s32.totalorder %v333, 14
          %vm369 = vmand %vm367, %vm368
          %vm370 = vcmp.ge.s32.totalorder %v331, 4294967293
          %vm371 = vcmp.lt.s32.totalorder %v331, 13
          %vm372 = vmand %vm370, %vm371
          %vm373 = vcmp.ge.s32.totalorder %v333, 4294967293
          %vm374 = vcmp.lt.s32.totalorder %v333, 13
          %vm375 = vmand %vm373, %vm374
          %s376 = sld [smem:[#allocation4]]
          %377 = vrot.lane.b32.xlu0 %v315, 51
          %v378 = vpop.permute.xlu0 %377
          %379 = vrot.lane.b32.xlu0 %v316, 51
          %v380 = vpop.permute.xlu0 %379
          %v381 = vlaneseq
          %v382 = vand.u32 %v381, 127
          %vm383 = vcmp.lt.s32.totalorder %v382, 51
          %v384 = vsel %vm383, %v378, %v380
          %v385 = vsel %vm383, %v380, %v378
          %vm386 = vmand %vm336, %vm339
          %v389 = vcombine.low %v385, %v384
          %v391 = vunpack.c.l.s4 1966171168
          %v392 = vunpack.c.0.s8 %v391
          %v393 = vlaneseq
          %v394 = vshrl.u32 %v393, 7
          %v395 = vsub.s32 %v392, %v394
          %v396 = vrot.slane %v389, %v395
          %v398 = vunpack.c.l.s4 1966171168
          %v399 = vunpack.c.0.s8 %v398
          %v400 = vlaneseq
          %v401 = vshrl.u32 %v400, 7
          %v402 = vsub.s32 %v399, %v401
          %v403 = vrot.slane %v396, %v402
          %v405 = vsel %vm386, %v403, 0.0
          %v406 = vstv %s376
          %v407 = vmul.f32 %v405, %v406
          %v408 = vadd.f32 %v407, 0.0
          %s409 = sld [smem:[#allocation4 + $0x1]]
          %410 = vrot.lane.b32.xlu0 %v315, 50
          %v411 = vpop.permute.xlu0 %410
          %412 = vrot.lane.b32.xlu0 %v316, 50
          %v413 = vpop.permute.xlu0 %412
          %vm414 = vcmp.lt.s32.totalorder %v382, 50
          %v415 = vsel %vm414, %v411, %v413
          %v416 = vsel %vm414, %v413, %v411
          %vm417 = vmand %vm336, %vm345
          %v420 = vcombine.low %v416, %v415
          %v422 = vunpack.c.l.s4 1966171168
          %v423 = vunpack.c.0.s8 %v422
          %v424 = vlaneseq
          %v425 = vshrl.u32 %v424, 7
          %v426 = vsub.s32 %v423, %v425
          %v427 = vrot.slane %v420, %v426
          %v429 = vunpack.c.l.s4 1966171168
          %v430 = vunpack.c.0.s8 %v429
          %v431 = vlaneseq
          %v432 = vshrl.u32 %v431, 7
          %v433 = vsub.s32 %v430, %v432
          %v434 = vrot.slane %v427, %v433
          %v436 = vsel %vm417, %v434, 0.0
          %v437 = vstv %s409
          %v438 = vmul.f32 %v436, %v437
          %v439 = vadd.f32 %v408, %v438
          %s440 = sld [smem:[#allocation4 + $0x2]]
          %441 = vrot.lane.b32.xlu0 %v315, 49
          %v442 = vpop.permute.xlu0 %441
          %443 = vrot.lane.b32.xlu0 %v316, 49
          %v444 = vpop.permute.xlu0 %443
          %vm445 = vcmp.lt.s32.totalorder %v382, 49
          %v446 = vsel %vm445, %v442, %v444
          %v447 = vsel %vm445, %v444, %v442
          %vm448 = vmand %vm336, %vm351
          %v451 = vcombine.low %v447, %v446
          %v453 = vunpack.c.l.s4 1966171168
          %v454 = vunpack.c.0.s8 %v453
          %v455 = vlaneseq
          %v456 = vshrl.u32 %v455, 7
          %v457 = vsub.s32 %v454, %v456
          %v458 = vrot.slane %v451, %v457
          %v460 = vunpack.c.l.s4 1966171168
          %v461 = vunpack.c.0.s8 %v460
          %v462 = vlaneseq
          %v463 = vshrl.u32 %v462, 7
          %v464 = vsub.s32 %v461, %v463
          %v465 = vrot.slane %v458, %v464
          %v467 = vsel %vm448, %v465, 0.0
          %v468 = vstv %s440
          %v469 = vmul.f32 %v467, %v468
          %v470 = vadd.f32 %v439, %v469
          %s471 = sld [smem:[#allocation4 + $0x3]]
          %472 = vrot.lane.b32.xlu0 %v315, 48
          %v473 = vpop.permute.xlu0 %472
          %474 = vrot.lane.b32.xlu0 %v316, 48
          %v475 = vpop.permute.xlu0 %474
          %vm476 = vcmp.lt.s32.totalorder %v382, 48
          %v477 = vsel %vm476, %v473, %v475
          %v478 = vsel %vm476, %v475, %v473
          %vm479 = vmand %vm336, %vm357
          %v482 = vcombine.low %v478, %v477
          %v484 = vunpack.c.l.s4 1966171168
          %v485 = vunpack.c.0.s8 %v484
          %v486 = vlaneseq
          %v487 = vshrl.u32 %v486, 7
          %v488 = vsub.s32 %v485, %v487
          %v489 = vrot.slane %v482, %v488
          %v491 = vunpack.c.l.s4 1966171168
          %v492 = vunpack.c.0.s8 %v491
          %v493 = vlaneseq
          %v494 = vshrl.u32 %v493, 7
          %v495 = vsub.s32 %v492, %v494
          %v496 = vrot.slane %v489, %v495
          %v498 = vsel %vm479, %v496, 0.0
          %v499 = vstv %s471
          %v500 = vmul.f32 %v498, %v499
          %v501 = vadd.f32 %v470, %v500
          %s502 = sld [smem:[#allocation4 + $0x4]]
          %503 = vrot.lane.b32.xlu0 %v315, 47
          %v504 = vpop.permute.xlu0 %503
          %505 = vrot.lane.b32.xlu0 %v316, 47
          %v506 = vpop.permute.xlu0 %505
          %vm507 = vcmp.lt.s32.totalorder %v382, 47
          %v508 = vsel %vm507, %v504, %v506
          %v509 = vsel %vm507, %v506, %v504
          %vm510 = vmand %vm336, %vm363
          %v513 = vcombine.low %v509, %v508
          %v515 = vunpack.c.l.s4 1966171168
          %v516 = vunpack.c.0.s8 %v515
          %v517 = vlaneseq
          %v518 = vshrl.u32 %v517, 7
          %v519 = vsub.s32 %v516, %v518
          %v520 = vrot.slane %v513, %v519
          %v522 = vunpack.c.l.s4 1966171168
          %v523 = vunpack.c.0.s8 %v522
          %v524 = vlaneseq
          %v525 = vshrl.u32 %v524, 7
          %v526 = vsub.s32 %v523, %v525
          %v527 = vrot.slane %v520, %v526
          %v529 = vsel %vm510, %v527, 0.0
          %v530 = vstv %s502
          %v531 = vmul.f32 %v529, %v530
          %v532 = vadd.f32 %v501, %v531
          %s533 = sld [smem:[#allocation4 + $0x5]]
          %534 = vrot.lane.b32.xlu0 %v315, 46
          %v535 = vpop.permute.xlu0 %534
          %536 = vrot.lane.b32.xlu0 %v316, 46
          %v537 = vpop.permute.xlu0 %536
          %vm538 = vcmp.lt.s32.totalorder %v382, 46
          %v539 = vsel %vm538, %v535, %v537
          %v540 = vsel %vm538, %v537, %v535
          %vm541 = vmand %vm336, %vm369
          %v544 = vcombine.low %v540, %v539
          %v546 = vunpack.c.l.s4 1966171168
          %v547 = vunpack.c.0.s8 %v546
          %v548 = vlaneseq
          %v549 = vshrl.u32 %v548, 7
          %v550 = vsub.s32 %v547, %v549
          %v551 = vrot.slane %v544, %v550
          %v553 = vunpack.c.l.s4 1966171168
          %v554 = vunpack.c.0.s8 %v553
          %v555 = vlaneseq
          %v556 = vshrl.u32 %v555, 7
          %v557 = vsub.s32 %v554, %v556
          %v558 = vrot.slane %v551, %v557
          %v560 = vsel %vm541, %v558, 0.0
          %v561 = vstv %s533
          %v562 = vmul.f32 %v560, %v561
          %v563 = vadd.f32 %v532, %v562
          %s564 = sld [smem:[#allocation4 + $0x6]]
          %565 = vrot.lane.b32.xlu0 %v315, 45
          %v566 = vpop.permute.xlu0 %565
          %567 = vrot.lane.b32.xlu0 %v316, 45
          %v568 = vpop.permute.xlu0 %567
          %vm569 = vcmp.lt.s32.totalorder %v382, 45
          %v570 = vsel %vm569, %v566, %v568
          %v571 = vsel %vm569, %v568, %v566
          %vm572 = vmand %vm336, %vm375
          %v575 = vcombine.low %v571, %v570
          %v577 = vunpack.c.l.s4 1966171168
          %v578 = vunpack.c.0.s8 %v577
          %v579 = vlaneseq
          %v580 = vshrl.u32 %v579, 7
          %v581 = vsub.s32 %v578, %v580
          %v582 = vrot.slane %v575, %v581
          %v584 = vunpack.c.l.s4 1966171168
          %v585 = vunpack.c.0.s8 %v584
          %v586 = vlaneseq
          %v587 = vshrl.u32 %v586, 7
          %v588 = vsub.s32 %v585, %v587
          %v589 = vrot.slane %v582, %v588
          %v591 = vsel %vm572, %v589, 0.0
          %v592 = vstv %s564
          %v593 = vmul.f32 %v591, %v592
          %v594 = vadd.f32 %v563, %v593
          %s595 = sld [smem:[#allocation4 + $0x7]]
          %596 = vrot.lane.b32.xlu0 %v315, 35
          %v597 = vpop.permute.xlu0 %596
          %598 = vrot.lane.b32.xlu0 %v316, 35
          %v599 = vpop.permute.xlu0 %598
          %vm600 = vcmp.lt.s32.totalorder %v382, 35
          %v601 = vsel %vm600, %v597, %v599
          %v602 = vsel %vm600, %v599, %v597
          %vm603 = vmand %vm342, %vm339
          %v606 = vcombine.low %v602, %v601
          %v608 = vunpack.c.l.s4 1966171168
          %v609 = vunpack.c.0.s8 %v608
          %v610 = vlaneseq
          %v611 = vshrl.u32 %v610, 7
          %v612 = vsub.s32 %v609, %v611
          %v613 = vrot.slane %v606, %v612
          %v615 = vunpack.c.l.s4 1966171168
          %v616 = vunpack.c.0.s8 %v615
          %v617 = vlaneseq
          %v618 = vshrl.u32 %v617, 7
          %v619 = vsub.s32 %v616, %v618
          %v620 = vrot.slane %v613, %v619
          %v622 = vsel %vm603, %v620, 0.0
          %v623 = vstv %s595
          %v624 = vmul.f32 %v622, %v623
          %v625 = vadd.f32 %v624, 0.0
          %s626 = sld [smem:[#allocation4 + $0x8]]
          %627 = vrot.lane.b32.xlu0 %v315, 34
          %v628 = vpop.permute.xlu0 %627
          %629 = vrot.lane.b32.xlu0 %v316, 34
          %v630 = vpop.permute.xlu0 %629
          %vm631 = vcmp.lt.s32.totalorder %v382, 34
          %v632 = vsel %vm631, %v628, %v630
          %v633 = vsel %vm631, %v630, %v628
          %vm634 = vmand %vm342, %vm345
          %v637 = vcombine.low %v633, %v632
          %v639 = vunpack.c.l.s4 1966171168
          %v640 = vunpack.c.0.s8 %v639
          %v641 = vlaneseq
          %v642 = vshrl.u32 %v641, 7
          %v643 = vsub.s32 %v640, %v642
          %v644 = vrot.slane %v637, %v643
          %v646 = vunpack.c.l.s4 1966171168
          %v647 = vunpack.c.0.s8 %v646
          %v648 = vlaneseq
          %v649 = vshrl.u32 %v648, 7
          %v650 = vsub.s32 %v647, %v649
          %v651 = vrot.slane %v644, %v650
          %v653 = vsel %vm634, %v651, 0.0
          %v654 = vstv %s626
          %v655 = vmul.f32 %v653, %v654
          %v656 = vadd.f32 %v625, %v655
          %s657 = sld [smem:[#allocation4 + $0x9]]
          %658 = vrot.lane.b32.xlu0 %v315, 33
          %v659 = vpop.permute.xlu0 %658
          %660 = vrot.lane.b32.xlu0 %v316, 33
          %v661 = vpop.permute.xlu0 %660
          %vm662 = vcmp.lt.s32.totalorder %v382, 33
          %v663 = vsel %vm662, %v659, %v661
          %v664 = vsel %vm662, %v661, %v659
          %vm665 = vmand %vm342, %vm351
          %v668 = vcombine.low %v664, %v663
          %v670 = vunpack.c.l.s4 1966171168
          %v671 = vunpack.c.0.s8 %v670
          %v672 = vlaneseq
          %v673 = vshrl.u32 %v672, 7
          %v674 = vsub.s32 %v671, %v673
          %v675 = vrot.slane %v668, %v674
          %v677 = vunpack.c.l.s4 1966171168
          %v678 = vunpack.c.0.s8 %v677
          %v679 = vlaneseq
          %v680 = vshrl.u32 %v679, 7
          %v681 = vsub.s32 %v678, %v680
          %v682 = vrot.slane %v675, %v681
          %v684 = vsel %vm665, %v682, 0.0
          %v685 = vstv %s657
          %v686 = vmul.f32 %v684, %v685
          %v687 = vadd.f32 %v656, %v686
          %s688 = sld [smem:[#allocation4 + $0xa]]
          %689 = vrot.lane.b32.xlu0 %v315, 32
          %v690 = vpop.permute.xlu0 %689
          %691 = vrot.lane.b32.xlu0 %v316, 32
          %v692 = vpop.permute.xlu0 %691
          %vm693 = vcmp.lt.s32.totalorder %v382, 32
          %v694 = vsel %vm693, %v690, %v692
          %v695 = vsel %vm693, %v692, %v690
          %vm696 = vmand %vm342, %vm357
          %v699 = vcombine.low %v695, %v694
          %v701 = vunpack.c.l.s4 1966171168
          %v702 = vunpack.c.0.s8 %v701
          %v703 = vlaneseq
          %v704 = vshrl.u32 %v703, 7
          %v705 = vsub.s32 %v702, %v704
          %v706 = vrot.slane %v699, %v705
          %v708 = vunpack.c.l.s4 1966171168
          %v709 = vunpack.c.0.s8 %v708
          %v710 = vlaneseq
          %v711 = vshrl.u32 %v710, 7
          %v712 = vsub.s32 %v709, %v711
          %v713 = vrot.slane %v706, %v712
          %v715 = vsel %vm696, %v713, 0.0
          %v716 = vstv %s688
          %v717 = vmul.f32 %v715, %v716
          %v718 = vadd.f32 %v687, %v717
          %s719 = sld [smem:[#allocation4 + $0xb]]
          %720 = vrot.lane.b32.xlu0 %v315, 31
          %v721 = vpop.permute.xlu0 %720
          %722 = vrot.lane.b32.xlu0 %v316, 31
          %v723 = vpop.permute.xlu0 %722
          %vm724 = vcmp.lt.s32.totalorder %v382, 31
          %v725 = vsel %vm724, %v721, %v723
          %v726 = vsel %vm724, %v723, %v721
          %vm727 = vmand %vm342, %vm363
          %v730 = vcombine.low %v726, %v725
          %v732 = vunpack.c.l.s4 1966171168
          %v733 = vunpack.c.0.s8 %v732
          %v734 = vlaneseq
          %v735 = vshrl.u32 %v734, 7
          %v736 = vsub.s32 %v733, %v735
          %v737 = vrot.slane %v730, %v736
          %v739 = vunpack.c.l.s4 1966171168
          %v740 = vunpack.c.0.s8 %v739
          %v741 = vlaneseq
          %v742 = vshrl.u32 %v741, 7
          %v743 = vsub.s32 %v740, %v742
          %v744 = vrot.slane %v737, %v743
          %v746 = vsel %vm727, %v744, 0.0
          %v747 = vstv %s719
          %v748 = vmul.f32 %v746, %v747
          %v749 = vadd.f32 %v718, %v748
          %s750 = sld [smem:[#allocation4 + $0xc]]
          %751 = vrot.lane.b32.xlu0 %v315, 30
          %v752 = vpop.permute.xlu0 %751
          %753 = vrot.lane.b32.xlu0 %v316, 30
          %v754 = vpop.permute.xlu0 %753
          %vm755 = vcmp.lt.s32.totalorder %v382, 30
          %v756 = vsel %vm755, %v752, %v754
          %v757 = vsel %vm755, %v754, %v752
          %vm758 = vmand %vm342, %vm369
          %v761 = vcombine.low %v757, %v756
          %v763 = vunpack.c.l.s4 1966171168
          %v764 = vunpack.c.0.s8 %v763
          %v765 = vlaneseq
          %v766 = vshrl.u32 %v765, 7
          %v767 = vsub.s32 %v764, %v766
          %v768 = vrot.slane %v761, %v767
          %v770 = vunpack.c.l.s4 1966171168
          %v771 = vunpack.c.0.s8 %v770
          %v772 = vlaneseq
          %v773 = vshrl.u32 %v772, 7
          %v774 = vsub.s32 %v771, %v773
          %v775 = vrot.slane %v768, %v774
          %v777 = vsel %vm758, %v775, 0.0
          %v778 = vstv %s750
          %v779 = vmul.f32 %v777, %v778
          %v780 = vadd.f32 %v749, %v779
          %s781 = sld [smem:[#allocation4 + $0xd]]
          %782 = vrot.lane.b32.xlu0 %v315, 29
          %v783 = vpop.permute.xlu0 %782
          %784 = vrot.lane.b32.xlu0 %v316, 29
          %v785 = vpop.permute.xlu0 %784
          %vm786 = vcmp.lt.s32.totalorder %v382, 29
          %v787 = vsel %vm786, %v783, %v785
          %v788 = vsel %vm786, %v785, %v783
          %vm789 = vmand %vm342, %vm375
          %v792 = vcombine.low %v788, %v787
          %v794 = vunpack.c.l.s4 1966171168
          %v795 = vunpack.c.0.s8 %v794
          %v796 = vlaneseq
          %v797 = vshrl.u32 %v796, 7
          %v798 = vsub.s32 %v795, %v797
          %v799 = vrot.slane %v792, %v798
          %v801 = vunpack.c.l.s4 1966171168
          %v802 = vunpack.c.0.s8 %v801
          %v803 = vlaneseq
          %v804 = vshrl.u32 %v803, 7
          %v805 = vsub.s32 %v802, %v804
          %v806 = vrot.slane %v799, %v805
          %v808 = vsel %vm789, %v806, 0.0
          %v809 = vstv %s781
          %v810 = vmul.f32 %v808, %v809
          %v811 = vadd.f32 %v780, %v810
          %s812 = sld [smem:[#allocation4 + $0xe]]
          %813 = vrot.lane.b32.xlu0 %v315, 19
          %v814 = vpop.permute.xlu0 %813
          %815 = vrot.lane.b32.xlu0 %v316, 19
          %v816 = vpop.permute.xlu0 %815
          %vm817 = vcmp.lt.s32.totalorder %v382, 19
          %v818 = vsel %vm817, %v814, %v816
          %v819 = vsel %vm817, %v816, %v814
          %vm820 = vmand %vm348, %vm339
          %v823 = vcombine.low %v819, %v818
          %v825 = vunpack.c.l.s4 1966171168
          %v826 = vunpack.c.0.s8 %v825
          %v827 = vlaneseq
          %v828 = vshrl.u32 %v827, 7
          %v829 = vsub.s32 %v826, %v828
          %v830 = vrot.slane %v823, %v829
          %v832 = vunpack.c.l.s4 1966171168
          %v833 = vunpack.c.0.s8 %v832
          %v834 = vlaneseq
          %v835 = vshrl.u32 %v834, 7
          %v836 = vsub.s32 %v833, %v835
          %v837 = vrot.slane %v830, %v836
          %v839 = vsel %vm820, %v837, 0.0
          %v840 = vstv %s812
          %v841 = vmul.f32 %v839, %v840
          %v842 = vadd.f32 %v594, %v841
          %s843 = sld [smem:[#allocation4 + $0xf]]
          %844 = vrot.lane.b32.xlu0 %v315, 18
          %v845 = vpop.permute.xlu0 %844
          %846 = vrot.lane.b32.xlu0 %v316, 18
          %v847 = vpop.permute.xlu0 %846
          %vm848 = vcmp.lt.s32.totalorder %v382, 18
          %v849 = vsel %vm848, %v845, %v847
          %v850 = vsel %vm848, %v847, %v845
          %vm851 = vmand %vm348, %vm345
          %v854 = vcombine.low %v850, %v849
          %v856 = vunpack.c.l.s4 1966171168
          %v857 = vunpack.c.0.s8 %v856
          %v858 = vlaneseq
          %v859 = vshrl.u32 %v858, 7
          %v860 = vsub.s32 %v857, %v859
          %v861 = vrot.slane %v854, %v860
          %v863 = vunpack.c.l.s4 1966171168
          %v864 = vunpack.c.0.s8 %v863
          %v865 = vlaneseq
          %v866 = vshrl.u32 %v865, 7
          %v867 = vsub.s32 %v864, %v866
          %v868 = vrot.slane %v861, %v867
          %v870 = vsel %vm851, %v868, 0.0
          %v871 = vstv %s843
          %v872 = vmul.f32 %v870, %v871
          %v873 = vadd.f32 %v842, %v872
          %s874 = sld [smem:[#allocation4 + $0x10]]
          %875 = vrot.lane.b32.xlu0 %v315, 17
          %v876 = vpop.permute.xlu0 %875
          %877 = vrot.lane.b32.xlu0 %v316, 17
          %v878 = vpop.permute.xlu0 %877
          %vm879 = vcmp.lt.s32.totalorder %v382, 17
          %v880 = vsel %vm879, %v876, %v878
          %v881 = vsel %vm879, %v878, %v876
          %vm882 = vmand %vm348, %vm351
          %v885 = vcombine.low %v881, %v880
          %v887 = vunpack.c.l.s4 1966171168
          %v888 = vunpack.c.0.s8 %v887
          %v889 = vlaneseq
          %v890 = vshrl.u32 %v889, 7
          %v891 = vsub.s32 %v888, %v890
          %v892 = vrot.slane %v885, %v891
          %v894 = vunpack.c.l.s4 1966171168
          %v895 = vunpack.c.0.s8 %v894
          %v896 = vlaneseq
          %v897 = vshrl.u32 %v896, 7
          %v898 = vsub.s32 %v895, %v897
          %v899 = vrot.slane %v892, %v898
          %v901 = vsel %vm882, %v899, 0.0
          %v902 = vstv %s874
          %v903 = vmul.f32 %v901, %v902
          %v904 = vadd.f32 %v873, %v903
          %s905 = sld [smem:[#allocation4 + $0x11]]
          %906 = vrot.lane.b32.xlu0 %v315, 16
          %v907 = vpop.permute.xlu0 %906
          %908 = vrot.lane.b32.xlu0 %v316, 16
          %v909 = vpop.permute.xlu0 %908
          %vm910 = vcmp.lt.s32.totalorder %v382, 16
          %v911 = vsel %vm910, %v907, %v909
          %v912 = vsel %vm910, %v909, %v907
          %vm913 = vmand %vm348, %vm357
          %v916 = vcombine.low %v912, %v911
          %v918 = vunpack.c.l.s4 1966171168
          %v919 = vunpack.c.0.s8 %v918
          %v920 = vlaneseq
          %v921 = vshrl.u32 %v920, 7
          %v922 = vsub.s32 %v919, %v921
          %v923 = vrot.slane %v916, %v922
          %v925 = vunpack.c.l.s4 1966171168
          %v926 = vunpack.c.0.s8 %v925
          %v927 = vlaneseq
          %v928 = vshrl.u32 %v927, 7
          %v929 = vsub.s32 %v926, %v928
          %v930 = vrot.slane %v923, %v929
          %v932 = vsel %vm913, %v930, 0.0
          %v933 = vstv %s905
          %v934 = vmul.f32 %v932, %v933
          %v935 = vadd.f32 %v904, %v934
          %s936 = sld [smem:[#allocation4 + $0x12]]
          %937 = vrot.lane.b32.xlu0 %v315, 15
          %v938 = vpop.permute.xlu0 %937
          %939 = vrot.lane.b32.xlu0 %v316, 15
          %v940 = vpop.permute.xlu0 %939
          %vm941 = vcmp.lt.s32.totalorder %v382, 15
          %v942 = vsel %vm941, %v938, %v940
          %v943 = vsel %vm941, %v940, %v938
          %vm944 = vmand %vm348, %vm363
          %v947 = vcombine.low %v943, %v942
          %v949 = vunpack.c.l.s4 1966171168
          %v950 = vunpack.c.0.s8 %v949
          %v951 = vlaneseq
          %v952 = vshrl.u32 %v951, 7
          %v953 = vsub.s32 %v950, %v952
          %v954 = vrot.slane %v947, %v953
          %v956 = vunpack.c.l.s4 1966171168
          %v957 = vunpack.c.0.s8 %v956
          %v958 = vlaneseq
          %v959 = vshrl.u32 %v958, 7
          %v960 = vsub.s32 %v957, %v959
          %v961 = vrot.slane %v954, %v960
          %v963 = vsel %vm944, %v961, 0.0
          %v964 = vstv %s936
          %v965 = vmul.f32 %v963, %v964
          %v966 = vadd.f32 %v935, %v965
          %s967 = sld [smem:[#allocation4 + $0x13]]
          %968 = vrot.lane.b32.xlu0 %v315, 14
          %v969 = vpop.permute.xlu0 %968
          %970 = vrot.lane.b32.xlu0 %v316, 14
          %v971 = vpop.permute.xlu0 %970
          %vm972 = vcmp.lt.s32.totalorder %v382, 14
          %v973 = vsel %vm972, %v969, %v971
          %v974 = vsel %vm972, %v971, %v969
          %vm975 = vmand %vm348, %vm369
          %v978 = vcombine.low %v974, %v973
          %v980 = vunpack.c.l.s4 1966171168
          %v981 = vunpack.c.0.s8 %v980
          %v982 = vlaneseq
          %v983 = vshrl.u32 %v982, 7
          %v984 = vsub.s32 %v981, %v983
          %v985 = vrot.slane %v978, %v984
          %v987 = vunpack.c.l.s4 1966171168
          %v988 = vunpack.c.0.s8 %v987
          %v989 = vlaneseq
          %v990 = vshrl.u32 %v989, 7
          %v991 = vsub.s32 %v988, %v990
          %v992 = vrot.slane %v985, %v991
          %v994 = vsel %vm975, %v992, 0.0
          %v995 = vstv %s967
          %v996 = vmul.f32 %v994, %v995
          %v997 = vadd.f32 %v966, %v996
          %s998 = sld [smem:[#allocation4 + $0x14]]
          %999 = vrot.lane.b32.xlu0 %v315, 13
          %v1000 = vpop.permute.xlu0 %999
          %1001 = vrot.lane.b32.xlu0 %v316, 13
          %v1002 = vpop.permute.xlu0 %1001
          %vm1003 = vcmp.lt.s32.totalorder %v382, 13
          %v1004 = vsel %vm1003, %v1000, %v1002
          %v1005 = vsel %vm1003, %v1002, %v1000
          %vm1006 = vmand %vm348, %vm375
          %v1009 = vcombine.low %v1005, %v1004
          %v1011 = vunpack.c.l.s4 1966171168
          %v1012 = vunpack.c.0.s8 %v1011
          %v1013 = vlaneseq
          %v1014 = vshrl.u32 %v1013, 7
          %v1015 = vsub.s32 %v1012, %v1014
          %v1016 = vrot.slane %v1009, %v1015
          %v1018 = vunpack.c.l.s4 1966171168
          %v1019 = vunpack.c.0.s8 %v1018
          %v1020 = vlaneseq
          %v1021 = vshrl.u32 %v1020, 7
          %v1022 = vsub.s32 %v1019, %v1021
          %v1023 = vrot.slane %v1016, %v1022
          %v1025 = vsel %vm1006, %v1023, 0.0
          %v1026 = vstv %s998
          %v1027 = vmul.f32 %v1025, %v1026
          %v1028 = vadd.f32 %v997, %v1027
          %s1029 = sld [smem:[#allocation4 + $0x15]]
          %1030 = vrot.lane.b32.xlu0 %v315, 3
          %v1031 = vpop.permute.xlu0 %1030
          %1032 = vrot.lane.b32.xlu0 %v316, 3
          %v1033 = vpop.permute.xlu0 %1032
          %vm1034 = vcmp.lt.s32.totalorder %v382, 3
          %v1035 = vsel %vm1034, %v1031, %v1033
          %v1036 = vsel %vm1034, %v1033, %v1031
          %vm1037 = vmand %vm354, %vm339
          %v1040 = vcombine.low %v1036, %v1035
          %v1042 = vunpack.c.l.s4 1966171168
          %v1043 = vunpack.c.0.s8 %v1042
          %v1044 = vlaneseq
          %v1045 = vshrl.u32 %v1044, 7
          %v1046 = vsub.s32 %v1043, %v1045
          %v1047 = vrot.slane %v1040, %v1046
          %v1049 = vunpack.c.l.s4 1966171168
          %v1050 = vunpack.c.0.s8 %v1049
          %v1051 = vlaneseq
          %v1052 = vshrl.u32 %v1051, 7
          %v1053 = vsub.s32 %v1050, %v1052
          %v1054 = vrot.slane %v1047, %v1053
          %v1056 = vsel %vm1037, %v1054, 0.0
          %v1057 = vstv %s1029
          %v1058 = vmul.f32 %v1056, %v1057
          %v1059 = vadd.f32 %v811, %v1058
          %s1060 = sld [smem:[#allocation4 + $0x16]]
          %1061 = vrot.lane.b32.xlu0 %v315, 2
          %v1062 = vpop.permute.xlu0 %1061
          %1063 = vrot.lane.b32.xlu0 %v316, 2
          %v1064 = vpop.permute.xlu0 %1063
          %vm1065 = vcmp.lt.s32.totalorder %v382, 2
          %v1066 = vsel %vm1065, %v1062, %v1064
          %v1067 = vsel %vm1065, %v1064, %v1062
          %vm1068 = vmand %vm354, %vm345
          %v1071 = vcombine.low %v1067, %v1066
          %v1073 = vunpack.c.l.s4 1966171168
          %v1074 = vunpack.c.0.s8 %v1073
          %v1075 = vlaneseq
          %v1076 = vshrl.u32 %v1075, 7
          %v1077 = vsub.s32 %v1074, %v1076
          %v1078 = vrot.slane %v1071, %v1077
          %v1080 = vunpack.c.l.s4 1966171168
          %v1081 = vunpack.c.0.s8 %v1080
          %v1082 = vlaneseq
          %v1083 = vshrl.u32 %v1082, 7
          %v1084 = vsub.s32 %v1081, %v1083
          %v1085 = vrot.slane %v1078, %v1084
          %v1087 = vsel %vm1068, %v1085, 0.0
          %v1088 = vstv %s1060
          %v1089 = vmul.f32 %v1087, %v1088
          %v1090 = vadd.f32 %v1059, %v1089
          %s1091 = sld [smem:[#allocation4 + $0x17]]
          %1092 = vrot.lane.b32.xlu0 %v315, 1
          %v1093 = vpop.permute.xlu0 %1092
          %1094 = vrot.lane.b32.xlu0 %v316, 1
          %v1095 = vpop.permute.xlu0 %1094
          %vm1096 = vcmp.lt.s32.totalorder %v382, 1
          %v1097 = vsel %vm1096, %v1093, %v1095
          %v1098 = vsel %vm1096, %v1095, %v1093
          %vm1099 = vmand %vm354, %vm351
          %v1102 = vcombine.low %v1098, %v1097
          %v1104 = vunpack.c.l.s4 1966171168
          %v1105 = vunpack.c.0.s8 %v1104
          %v1106 = vlaneseq
          %v1107 = vshrl.u32 %v1106, 7
          %v1108 = vsub.s32 %v1105, %v1107
          %v1109 = vrot.slane %v1102, %v1108
          %v1111 = vunpack.c.l.s4 1966171168
          %v1112 = vunpack.c.0.s8 %v1111
          %v1113 = vlaneseq
          %v1114 = vshrl.u32 %v1113, 7
          %v1115 = vsub.s32 %v1112, %v1114
          %v1116 = vrot.slane %v1109, %v1115
          %v1118 = vsel %vm1099, %v1116, 0.0
          %v1119 = vstv %s1091
          %v1120 = vmul.f32 %v1118, %v1119
          %v1121 = vadd.f32 %v1090, %v1120
          %s1122 = sld [smem:[#allocation4 + $0x18]]
          %vm1123 = vmand %vm354, %vm357
          %v1126 = vcombine.low %v315, %v316
          %v1128 = vunpack.c.l.s4 1966171168
          %v1129 = vunpack.c.0.s8 %v1128
          %v1130 = vlaneseq
          %v1131 = vshrl.u32 %v1130, 7
          %v1132 = vsub.s32 %v1129, %v1131
          %v1133 = vrot.slane %v1126, %v1132
          %v1135 = vunpack.c.l.s4 1966171168
          %v1136 = vunpack.c.0.s8 %v1135
          %v1137 = vlaneseq
          %v1138 = vshrl.u32 %v1137, 7
          %v1139 = vsub.s32 %v1136, %v1138
          %v1140 = vrot.slane %v1133, %v1139
          %v1142 = vsel %vm1123, %v1140, 0.0
          %v1143 = vstv %s1122
          %v1144 = vmul.f32 %v1142, %v1143
          %v1145 = vadd.f32 %v1121, %v1144
          %s1146 = sld [smem:[#allocation4 + $0x19]]
          %1147 = vrot.lane.b32.xlu0 %v315, 127
          %v1148 = vpop.permute.xlu0 %1147
          %1149 = vrot.lane.b32.xlu0 %v316, 127
          %v1150 = vpop.permute.xlu0 %1149
          %vm1151 = vcmp.lt.s32.totalorder %v382, 127
          %v1152 = vsel %vm1151, %v1148, %v1150
          %v1153 = vsel %vm1151, %v1150, %v1148
          %vm1154 = vmand %vm354, %vm363
          %v1157 = vcombine.low %v1152, %v1153
          %v1159 = vunpack.c.l.s4 1966171168
          %v1160 = vunpack.c.0.s8 %v1159
          %v1161 = vlaneseq
          %v1162 = vshrl.u32 %v1161, 7
          %v1163 = vsub.s32 %v1160, %v1162
          %v1164 = vrot.slane %v1157, %v1163
          %v1166 = vunpack.c.l.s4 1966171168
          %v1167 = vunpack.c.0.s8 %v1166
          %v1168 = vlaneseq
          %v1169 = vshrl.u32 %v1168, 7
          %v1170 = vsub.s32 %v1167, %v1169
          %v1171 = vrot.slane %v1164, %v1170
          %v1173 = vsel %vm1154, %v1171, 0.0
          %v1174 = vstv %s1146
          %v1175 = vmul.f32 %v1173, %v1174
          %v1176 = vadd.f32 %v1145, %v1175
          %s1177 = sld [smem:[#allocation4 + $0x1a]]
          %1178 = vrot.lane.b32.xlu0 %v315, 126
          %v1179 = vpop.permute.xlu0 %1178
          %1180 = vrot.lane.b32.xlu0 %v316, 126
          %v1181 = vpop.permute.xlu0 %1180
          %vm1182 = vcmp.lt.s32.totalorder %v382, 126
          %v1183 = vsel %vm1182, %v1179, %v1181
          %v1184 = vsel %vm1182, %v1181, %v1179
          %vm1185 = vmand %vm354, %vm369
          %v1188 = vcombine.low %v1183, %v1184
          %v1190 = vunpack.c.l.s4 1966171168
          %v1191 = vunpack.c.0.s8 %v1190
          %v1192 = vlaneseq
          %v1193 = vshrl.u32 %v1192, 7
          %v1194 = vsub.s32 %v1191, %v1193
          %v1195 = vrot.slane %v1188, %v1194
          %v1197 = vunpack.c.l.s4 1966171168
          %v1198 = vunpack.c.0.s8 %v1197
          %v1199 = vlaneseq
          %v1200 = vshrl.u32 %v1199, 7
          %v1201 = vsub.s32 %v1198, %v1200
          %v1202 = vrot.slane %v1195, %v1201
          %v1204 = vsel %vm1185, %v1202, 0.0
          %v1205 = vstv %s1177
          %v1206 = vmul.f32 %v1204, %v1205
          %v1207 = vadd.f32 %v1176, %v1206
          %s1208 = sld [smem:[#allocation4 + $0x1b]]
          %1209 = vrot.lane.b32.xlu0 %v315, 125
          %v1210 = vpop.permute.xlu0 %1209
          %1211 = vrot.lane.b32.xlu0 %v316, 125
          %v1212 = vpop.permute.xlu0 %1211
          %vm1213 = vcmp.lt.s32.totalorder %v382, 125
          %v1214 = vsel %vm1213, %v1210, %v1212
          %v1215 = vsel %vm1213, %v1212, %v1210
          %vm1216 = vmand %vm354, %vm375
          %v1219 = vcombine.low %v1214, %v1215
          %v1221 = vunpack.c.l.s4 1966171168
          %v1222 = vunpack.c.0.s8 %v1221
          %v1223 = vlaneseq
          %v1224 = vshrl.u32 %v1223, 7
          %v1225 = vsub.s32 %v1222, %v1224
          %v1226 = vrot.slane %v1219, %v1225
          %v1228 = vunpack.c.l.s4 1966171168
          %v1229 = vunpack.c.0.s8 %v1228
          %v1230 = vlaneseq
          %v1231 = vshrl.u32 %v1230, 7
          %v1232 = vsub.s32 %v1229, %v1231
          %v1233 = vrot.slane %v1226, %v1232
          %v1235 = vsel %vm1216, %v1233, 0.0
          %v1236 = vstv %s1208
          %v1237 = vmul.f32 %v1235, %v1236
          %v1238 = vadd.f32 %v1207, %v1237
          %s1239 = sld [smem:[#allocation4 + $0x1c]]
          %1240 = vrot.lane.b32.xlu0 %v315, 115
          %v1241 = vpop.permute.xlu0 %1240
          %1242 = vrot.lane.b32.xlu0 %v316, 115
          %v1243 = vpop.permute.xlu0 %1242
          %vm1244 = vcmp.lt.s32.totalorder %v382, 115
          %v1245 = vsel %vm1244, %v1241, %v1243
          %v1246 = vsel %vm1244, %v1243, %v1241
          %vm1247 = vmand %vm360, %vm339
          %v1250 = vcombine.low %v1245, %v1246
          %v1252 = vunpack.c.l.s4 1966171168
          %v1253 = vunpack.c.0.s8 %v1252
          %v1254 = vlaneseq
          %v1255 = vshrl.u32 %v1254, 7
          %v1256 = vsub.s32 %v1253, %v1255
          %v1257 = vrot.slane %v1250, %v1256
          %v1259 = vunpack.c.l.s4 1966171168
          %v1260 = vunpack.c.0.s8 %v1259
          %v1261 = vlaneseq
          %v1262 = vshrl.u32 %v1261, 7
          %v1263 = vsub.s32 %v1260, %v1262
          %v1264 = vrot.slane %v1257, %v1263
          %v1266 = vsel %vm1247, %v1264, 0.0
          %v1267 = vstv %s1239
          %v1268 = vmul.f32 %v1266, %v1267
          %v1269 = vadd.f32 %v1028, %v1268
          %s1270 = sld [smem:[#allocation4 + $0x1d]]
          %1271 = vrot.lane.b32.xlu0 %v315, 114
          %v1272 = vpop.permute.xlu0 %1271
          %1273 = vrot.lane.b32.xlu0 %v316, 114
          %v1274 = vpop.permute.xlu0 %1273
          %vm1275 = vcmp.lt.s32.totalorder %v382, 114
          %v1276 = vsel %vm1275, %v1272, %v1274
          %v1277 = vsel %vm1275, %v1274, %v1272
          %vm1278 = vmand %vm360, %vm345
          %v1281 = vcombine.low %v1276, %v1277
          %v1283 = vunpack.c.l.s4 1966171168
          %v1284 = vunpack.c.0.s8 %v1283
          %v1285 = vlaneseq
          %v1286 = vshrl.u32 %v1285, 7
          %v1287 = vsub.s32 %v1284, %v1286
          %v1288 = vrot.slane %v1281, %v1287
          %v1290 = vunpack.c.l.s4 1966171168
          %v1291 = vunpack.c.0.s8 %v1290
          %v1292 = vlaneseq
          %v1293 = vshrl.u32 %v1292, 7
          %v1294 = vsub.s32 %v1291, %v1293
          %v1295 = vrot.slane %v1288, %v1294
          %v1297 = vsel %vm1278, %v1295, 0.0
          %v1298 = vstv %s1270
          %v1299 = vmul.f32 %v1297, %v1298
          %v1300 = vadd.f32 %v1269, %v1299
          %s1301 = sld [smem:[#allocation4 + $0x1e]]
          %1302 = vrot.lane.b32.xlu0 %v315, 113
          %v1303 = vpop.permute.xlu0 %1302
          %1304 = vrot.lane.b32.xlu0 %v316, 113
          %v1305 = vpop.permute.xlu0 %1304
          %vm1306 = vcmp.lt.s32.totalorder %v382, 113
          %v1307 = vsel %vm1306, %v1303, %v1305
          %v1308 = vsel %vm1306, %v1305, %v1303
          %vm1309 = vmand %vm360, %vm351
          %v1312 = vcombine.low %v1307, %v1308
          %v1314 = vunpack.c.l.s4 1966171168
          %v1315 = vunpack.c.0.s8 %v1314
          %v1316 = vlaneseq
          %v1317 = vshrl.u32 %v1316, 7
          %v1318 = vsub.s32 %v1315, %v1317
          %v1319 = vrot.slane %v1312, %v1318
          %v1321 = vunpack.c.l.s4 1966171168
          %v1322 = vunpack.c.0.s8 %v1321
          %v1323 = vlaneseq
          %v1324 = vshrl.u32 %v1323, 7
          %v1325 = vsub.s32 %v1322, %v1324
          %v1326 = vrot.slane %v1319, %v1325
          %v1328 = vsel %vm1309, %v1326, 0.0
          %v1329 = vstv %s1301
          %v1330 = vmul.f32 %v1328, %v1329
          %v1331 = vadd.f32 %v1300, %v1330
          %s1332 = sld [smem:[#allocation4 + $0x1f]]
          %1333 = vrot.lane.b32.xlu0 %v315, 112
          %v1334 = vpop.permute.xlu0 %1333
          %1335 = vrot.lane.b32.xlu0 %v316, 112
          %v1336 = vpop.permute.xlu0 %1335
          %vm1337 = vcmp.lt.s32.totalorder %v382, 112
          %v1338 = vsel %vm1337, %v1334, %v1336
          %v1339 = vsel %vm1337, %v1336, %v1334
          %vm1340 = vmand %vm360, %vm357
          %v1343 = vcombine.low %v1338, %v1339
          %v1345 = vunpack.c.l.s4 1966171168
          %v1346 = vunpack.c.0.s8 %v1345
          %v1347 = vlaneseq
          %v1348 = vshrl.u32 %v1347, 7
          %v1349 = vsub.s32 %v1346, %v1348
          %v1350 = vrot.slane %v1343, %v1349
          %v1352 = vunpack.c.l.s4 1966171168
          %v1353 = vunpack.c.0.s8 %v1352
          %v1354 = vlaneseq
          %v1355 = vshrl.u32 %v1354, 7
          %v1356 = vsub.s32 %v1353, %v1355
          %v1357 = vrot.slane %v1350, %v1356
          %v1359 = vsel %vm1340, %v1357, 0.0
          %v1360 = vstv %s1332
          %v1361 = vmul.f32 %v1359, %v1360
          %v1362 = vadd.f32 %v1331, %v1361
          %s1363 = sld [smem:[#allocation4 + $0x20]]
          %1364 = vrot.lane.b32.xlu0 %v315, 111
          %v1365 = vpop.permute.xlu0 %1364
          %1366 = vrot.lane.b32.xlu0 %v316, 111
          %v1367 = vpop.permute.xlu0 %1366
          %vm1368 = vcmp.lt.s32.totalorder %v382, 111
          %v1369 = vsel %vm1368, %v1365, %v1367
          %v1370 = vsel %vm1368, %v1367, %v1365
          %vm1371 = vmand %vm360, %vm363
          %v1374 = vcombine.low %v1369, %v1370
          %v1376 = vunpack.c.l.s4 1966171168
          %v1377 = vunpack.c.0.s8 %v1376
          %v1378 = vlaneseq
          %v1379 = vshrl.u32 %v1378, 7
          %v1380 = vsub.s32 %v1377, %v1379
          %v1381 = vrot.slane %v1374, %v1380
          %v1383 = vunpack.c.l.s4 1966171168
          %v1384 = vunpack.c.0.s8 %v1383
          %v1385 = vlaneseq
          %v1386 = vshrl.u32 %v1385, 7
          %v1387 = vsub.s32 %v1384, %v1386
          %v1388 = vrot.slane %v1381, %v1387
          %v1390 = vsel %vm1371, %v1388, 0.0
          %v1391 = vstv %s1363
          %v1392 = vmul.f32 %v1390, %v1391
          %v1393 = vadd.f32 %v1362, %v1392
          %s1394 = sld [smem:[#allocation4 + $0x21]]
          %1395 = vrot.lane.b32.xlu0 %v315, 110
          %v1396 = vpop.permute.xlu0 %1395
          %1397 = vrot.lane.b32.xlu0 %v316, 110
          %v1398 = vpop.permute.xlu0 %1397
          %vm1399 = vcmp.lt.s32.totalorder %v382, 110
          %v1400 = vsel %vm1399, %v1396, %v1398
          %v1401 = vsel %vm1399, %v1398, %v1396
          %vm1402 = vmand %vm360, %vm369
          %v1405 = vcombine.low %v1400, %v1401
          %v1407 = vunpack.c.l.s4 1966171168
          %v1408 = vunpack.c.0.s8 %v1407
          %v1409 = vlaneseq
          %v1410 = vshrl.u32 %v1409, 7
          %v1411 = vsub.s32 %v1408, %v1410
          %v1412 = vrot.slane %v1405, %v1411
          %v1414 = vunpack.c.l.s4 1966171168
          %v1415 = vunpack.c.0.s8 %v1414
          %v1416 = vlaneseq
          %v1417 = vshrl.u32 %v1416, 7
          %v1418 = vsub.s32 %v1415, %v1417
          %v1419 = vrot.slane %v1412, %v1418
          %v1421 = vsel %vm1402, %v1419, 0.0
          %v1422 = vstv %s1394
          %v1423 = vmul.f32 %v1421, %v1422
          %v1424 = vadd.f32 %v1393, %v1423
          %s1425 = sld [smem:[#allocation4 + $0x22]]
          %1426 = vrot.lane.b32.xlu0 %v315, 109
          %v1427 = vpop.permute.xlu0 %1426
          %1428 = vrot.lane.b32.xlu0 %v316, 109
          %v1429 = vpop.permute.xlu0 %1428
          %vm1430 = vcmp.lt.s32.totalorder %v382, 109
          %v1431 = vsel %vm1430, %v1427, %v1429
          %v1432 = vsel %vm1430, %v1429, %v1427
          %vm1433 = vmand %vm360, %vm375
          %v1436 = vcombine.low %v1431, %v1432
          %v1438 = vunpack.c.l.s4 1966171168
          %v1439 = vunpack.c.0.s8 %v1438
          %v1440 = vlaneseq
          %v1441 = vshrl.u32 %v1440, 7
          %v1442 = vsub.s32 %v1439, %v1441
          %v1443 = vrot.slane %v1436, %v1442
          %v1445 = vunpack.c.l.s4 1966171168
          %v1446 = vunpack.c.0.s8 %v1445
          %v1447 = vlaneseq
          %v1448 = vshrl.u32 %v1447, 7
          %v1449 = vsub.s32 %v1446, %v1448
          %v1450 = vrot.slane %v1443, %v1449
          %v1452 = vsel %vm1433, %v1450, 0.0
          %v1453 = vstv %s1425
          %v1454 = vmul.f32 %v1452, %v1453
          %v1455 = vadd.f32 %v1424, %v1454
          %s1456 = sld [smem:[#allocation4 + $0x23]]
          %1457 = vrot.lane.b32.xlu0 %v315, 99
          %v1458 = vpop.permute.xlu0 %1457
          %1459 = vrot.lane.b32.xlu0 %v316, 99
          %v1460 = vpop.permute.xlu0 %1459
          %vm1461 = vcmp.lt.s32.totalorder %v382, 99
          %v1462 = vsel %vm1461, %v1458, %v1460
          %v1463 = vsel %vm1461, %v1460, %v1458
          %vm1464 = vmand %vm366, %vm339
          %v1467 = vcombine.low %v1462, %v1463
          %v1469 = vunpack.c.l.s4 1966171168
          %v1470 = vunpack.c.0.s8 %v1469
          %v1471 = vlaneseq
          %v1472 = vshrl.u32 %v1471, 7
          %v1473 = vsub.s32 %v1470, %v1472
          %v1474 = vrot.slane %v1467, %v1473
          %v1476 = vunpack.c.l.s4 1966171168
          %v1477 = vunpack.c.0.s8 %v1476
          %v1478 = vlaneseq
          %v1479 = vshrl.u32 %v1478, 7
          %v1480 = vsub.s32 %v1477, %v1479
          %v1481 = vrot.slane %v1474, %v1480
          %v1483 = vsel %vm1464, %v1481, 0.0
          %v1484 = vstv %s1456
          %v1485 = vmul.f32 %v1483, %v1484
          %v1486 = vadd.f32 %v1238, %v1485
          %s1487 = sld [smem:[#allocation4 + $0x24]]
          %1488 = vrot.lane.b32.xlu0 %v315, 98
          %v1489 = vpop.permute.xlu0 %1488
          %1490 = vrot.lane.b32.xlu0 %v316, 98
          %v1491 = vpop.permute.xlu0 %1490
          %vm1492 = vcmp.lt.s32.totalorder %v382, 98
          %v1493 = vsel %vm1492, %v1489, %v1491
          %v1494 = vsel %vm1492, %v1491, %v1489
          %vm1495 = vmand %vm366, %vm345
          %v1498 = vcombine.low %v1493, %v1494
          %v1500 = vunpack.c.l.s4 1966171168
          %v1501 = vunpack.c.0.s8 %v1500
          %v1502 = vlaneseq
          %v1503 = vshrl.u32 %v1502, 7
          %v1504 = vsub.s32 %v1501, %v1503
          %v1505 = vrot.slane %v1498, %v1504
          %v1507 = vunpack.c.l.s4 1966171168
          %v1508 = vunpack.c.0.s8 %v1507
          %v1509 = vlaneseq
          %v1510 = vshrl.u32 %v1509, 7
          %v1511 = vsub.s32 %v1508, %v1510
          %v1512 = vrot.slane %v1505, %v1511
          %v1514 = vsel %vm1495, %v1512, 0.0
          %v1515 = vstv %s1487
          %v1516 = vmul.f32 %v1514, %v1515
          %v1517 = vadd.f32 %v1486, %v1516
          %s1518 = sld [smem:[#allocation4 + $0x25]]
          %1519 = vrot.lane.b32.xlu0 %v315, 97
          %v1520 = vpop.permute.xlu0 %1519
          %1521 = vrot.lane.b32.xlu0 %v316, 97
          %v1522 = vpop.permute.xlu0 %1521
          %vm1523 = vcmp.lt.s32.totalorder %v382, 97
          %v1524 = vsel %vm1523, %v1520, %v1522
          %v1525 = vsel %vm1523, %v1522, %v1520
          %vm1526 = vmand %vm366, %vm351
          %v1529 = vcombine.low %v1524, %v1525
          %v1531 = vunpack.c.l.s4 1966171168
          %v1532 = vunpack.c.0.s8 %v1531
          %v1533 = vlaneseq
          %v1534 = vshrl.u32 %v1533, 7
          %v1535 = vsub.s32 %v1532, %v1534
          %v1536 = vrot.slane %v1529, %v1535
          %v1538 = vunpack.c.l.s4 1966171168
          %v1539 = vunpack.c.0.s8 %v1538
          %v1540 = vlaneseq
          %v1541 = vshrl.u32 %v1540, 7
          %v1542 = vsub.s32 %v1539, %v1541
          %v1543 = vrot.slane %v1536, %v1542
          %v1545 = vsel %vm1526, %v1543, 0.0
          %v1546 = vstv %s1518
          %v1547 = vmul.f32 %v1545, %v1546
          %v1548 = vadd.f32 %v1517, %v1547
          %s1549 = sld [smem:[#allocation4 + $0x26]]
          %1550 = vrot.lane.b32.xlu0 %v315, 96
          %v1551 = vpop.permute.xlu0 %1550
          %1552 = vrot.lane.b32.xlu0 %v316, 96
          %v1553 = vpop.permute.xlu0 %1552
          %vm1554 = vcmp.lt.s32.totalorder %v382, 96
          %v1555 = vsel %vm1554, %v1551, %v1553
          %v1556 = vsel %vm1554, %v1553, %v1551
          %vm1557 = vmand %vm366, %vm357
          %v1560 = vcombine.low %v1555, %v1556
          %v1562 = vunpack.c.l.s4 1966171168
          %v1563 = vunpack.c.0.s8 %v1562
          %v1564 = vlaneseq
          %v1565 = vshrl.u32 %v1564, 7
          %v1566 = vsub.s32 %v1563, %v1565
          %v1567 = vrot.slane %v1560, %v1566
          %v1569 = vunpack.c.l.s4 1966171168
          %v1570 = vunpack.c.0.s8 %v1569
          %v1571 = vlaneseq
          %v1572 = vshrl.u32 %v1571, 7
          %v1573 = vsub.s32 %v1570, %v1572
          %v1574 = vrot.slane %v1567, %v1573
          %v1576 = vsel %vm1557, %v1574, 0.0
          %v1577 = vstv %s1549
          %v1578 = vmul.f32 %v1576, %v1577
          %v1579 = vadd.f32 %v1548, %v1578
          %s1580 = sld [smem:[#allocation4 + $0x27]]
          %1581 = vrot.lane.b32.xlu0 %v315, 95
          %v1582 = vpop.permute.xlu0 %1581
          %1583 = vrot.lane.b32.xlu0 %v316, 95
          %v1584 = vpop.permute.xlu0 %1583
          %vm1585 = vcmp.lt.s32.totalorder %v382, 95
          %v1586 = vsel %vm1585, %v1582, %v1584
          %v1587 = vsel %vm1585, %v1584, %v1582
          %vm1588 = vmand %vm366, %vm363
          %v1591 = vcombine.low %v1586, %v1587
          %v1593 = vunpack.c.l.s4 1966171168
          %v1594 = vunpack.c.0.s8 %v1593
          %v1595 = vlaneseq
          %v1596 = vshrl.u32 %v1595, 7
          %v1597 = vsub.s32 %v1594, %v1596
          %v1598 = vrot.slane %v1591, %v1597
          %v1600 = vunpack.c.l.s4 1966171168
          %v1601 = vunpack.c.0.s8 %v1600
          %v1602 = vlaneseq
          %v1603 = vshrl.u32 %v1602, 7
          %v1604 = vsub.s32 %v1601, %v1603
          %v1605 = vrot.slane %v1598, %v1604
          %v1607 = vsel %vm1588, %v1605, 0.0
          %v1608 = vstv %s1580
          %v1609 = vmul.f32 %v1607, %v1608
          %v1610 = vadd.f32 %v1579, %v1609
          %s1611 = sld [smem:[#allocation4 + $0x28]]
          %1612 = vrot.lane.b32.xlu0 %v315, 94
          %v1613 = vpop.permute.xlu0 %1612
          %1614 = vrot.lane.b32.xlu0 %v316, 94
          %v1615 = vpop.permute.xlu0 %1614
          %vm1616 = vcmp.lt.s32.totalorder %v382, 94
          %v1617 = vsel %vm1616, %v1613, %v1615
          %v1618 = vsel %vm1616, %v1615, %v1613
          %vm1619 = vmand %vm366, %vm369
          %v1622 = vcombine.low %v1617, %v1618
          %v1624 = vunpack.c.l.s4 1966171168
          %v1625 = vunpack.c.0.s8 %v1624
          %v1626 = vlaneseq
          %v1627 = vshrl.u32 %v1626, 7
          %v1628 = vsub.s32 %v1625, %v1627
          %v1629 = vrot.slane %v1622, %v1628
          %v1631 = vunpack.c.l.s4 1966171168
          %v1632 = vunpack.c.0.s8 %v1631
          %v1633 = vlaneseq
          %v1634 = vshrl.u32 %v1633, 7
          %v1635 = vsub.s32 %v1632, %v1634
          %v1636 = vrot.slane %v1629, %v1635
          %v1638 = vsel %vm1619, %v1636, 0.0
          %v1639 = vstv %s1611
          %v1640 = vmul.f32 %v1638, %v1639
          %v1641 = vadd.f32 %v1610, %v1640
          %s1642 = sld [smem:[#allocation4 + $0x29]]
          %1643 = vrot.lane.b32.xlu0 %v315, 93
          %v1644 = vpop.permute.xlu0 %1643
          %1645 = vrot.lane.b32.xlu0 %v316, 93
          %v1646 = vpop.permute.xlu0 %1645
          %vm1647 = vcmp.lt.s32.totalorder %v382, 93
          %v1648 = vsel %vm1647, %v1644, %v1646
          %v1649 = vsel %vm1647, %v1646, %v1644
          %vm1650 = vmand %vm366, %vm375
          %v1653 = vcombine.low %v1648, %v1649
          %v1655 = vunpack.c.l.s4 1966171168
          %v1656 = vunpack.c.0.s8 %v1655
          %v1657 = vlaneseq
          %v1658 = vshrl.u32 %v1657, 7
          %v1659 = vsub.s32 %v1656, %v1658
          %v1660 = vrot.slane %v1653, %v1659
          %v1662 = vunpack.c.l.s4 1966171168
          %v1663 = vunpack.c.0.s8 %v1662
          %v1664 = vlaneseq
          %v1665 = vshrl.u32 %v1664, 7
          %v1666 = vsub.s32 %v1663, %v1665
          %v1667 = vrot.slane %v1660, %v1666
          %v1669 = vsel %vm1650, %v1667, 0.0
          %v1670 = vstv %s1642
          %v1671 = vmul.f32 %v1669, %v1670
          %v1672 = vadd.f32 %v1641, %v1671
          %s1673 = sld [smem:[#allocation4 + $0x2a]]
          %1674 = vrot.lane.b32.xlu0 %v315, 83
          %v1675 = vpop.permute.xlu0 %1674
          %1676 = vrot.lane.b32.xlu0 %v316, 83
          %v1677 = vpop.permute.xlu0 %1676
          %vm1678 = vcmp.lt.s32.totalorder %v382, 83
          %v1679 = vsel %vm1678, %v1675, %v1677
          %v1680 = vsel %vm1678, %v1677, %v1675
          %vm1681 = vmand %vm372, %vm339
          %v1684 = vcombine.low %v1679, %v1680
          %v1686 = vunpack.c.l.s4 1966171168
          %v1687 = vunpack.c.0.s8 %v1686
          %v1688 = vlaneseq
          %v1689 = vshrl.u32 %v1688, 7
          %v1690 = vsub.s32 %v1687, %v1689
          %v1691 = vrot.slane %v1684, %v1690
          %v1693 = vunpack.c.l.s4 1966171168
          %v1694 = vunpack.c.0.s8 %v1693
          %v1695 = vlaneseq
          %v1696 = vshrl.u32 %v1695, 7
          %v1697 = vsub.s32 %v1694, %v1696
          %v1698 = vrot.slane %v1691, %v1697
          %v1700 = vsel %vm1681, %v1698, 0.0
          %v1701 = vstv %s1673
          %v1702 = vmul.f32 %v1700, %v1701
          %v1703 = vadd.f32 %v1455, %v1702
          %s1704 = sld [smem:[#allocation4 + $0x2b]]
          %1705 = vrot.lane.b32.xlu0 %v315, 82
          %v1706 = vpop.permute.xlu0 %1705
          %1707 = vrot.lane.b32.xlu0 %v316, 82
          %v1708 = vpop.permute.xlu0 %1707
          %vm1709 = vcmp.lt.s32.totalorder %v382, 82
          %v1710 = vsel %vm1709, %v1706, %v1708
          %v1711 = vsel %vm1709, %v1708, %v1706
          %vm1712 = vmand %vm372, %vm345
          %v1715 = vcombine.low %v1710, %v1711
          %v1717 = vunpack.c.l.s4 1966171168
          %v1718 = vunpack.c.0.s8 %v1717
          %v1719 = vlaneseq
          %v1720 = vshrl.u32 %v1719, 7
          %v1721 = vsub.s32 %v1718, %v1720
          %v1722 = vrot.slane %v1715, %v1721
          %v1724 = vunpack.c.l.s4 1966171168
          %v1725 = vunpack.c.0.s8 %v1724
          %v1726 = vlaneseq
          %v1727 = vshrl.u32 %v1726, 7
          %v1728 = vsub.s32 %v1725, %v1727
          %v1729 = vrot.slane %v1722, %v1728
          %v1731 = vsel %vm1712, %v1729, 0.0
          %v1732 = vstv %s1704
          %v1733 = vmul.f32 %v1731, %v1732
          %v1734 = vadd.f32 %v1703, %v1733
          %s1735 = sld [smem:[#allocation4 + $0x2c]]
          %1736 = vrot.lane.b32.xlu0 %v315, 81
          %v1737 = vpop.permute.xlu0 %1736
          %1738 = vrot.lane.b32.xlu0 %v316, 81
          %v1739 = vpop.permute.xlu0 %1738
          %vm1740 = vcmp.lt.s32.totalorder %v382, 81
          %v1741 = vsel %vm1740, %v1737, %v1739
          %v1742 = vsel %vm1740, %v1739, %v1737
          %vm1743 = vmand %vm372, %vm351
          %v1746 = vcombine.low %v1741, %v1742
          %v1748 = vunpack.c.l.s4 1966171168
          %v1749 = vunpack.c.0.s8 %v1748
          %v1750 = vlaneseq
          %v1751 = vshrl.u32 %v1750, 7
          %v1752 = vsub.s32 %v1749, %v1751
          %v1753 = vrot.slane %v1746, %v1752
          %v1755 = vunpack.c.l.s4 1966171168
          %v1756 = vunpack.c.0.s8 %v1755
          %v1757 = vlaneseq
          %v1758 = vshrl.u32 %v1757, 7
          %v1759 = vsub.s32 %v1756, %v1758
          %v1760 = vrot.slane %v1753, %v1759
          %v1762 = vsel %vm1743, %v1760, 0.0
          %v1763 = vstv %s1735
          %v1764 = vmul.f32 %v1762, %v1763
          %v1765 = vadd.f32 %v1734, %v1764
          %s1766 = sld [smem:[#allocation4 + $0x2d]]
          %1767 = vrot.lane.b32.xlu0 %v315, 80
          %v1768 = vpop.permute.xlu0 %1767
          %1769 = vrot.lane.b32.xlu0 %v316, 80
          %v1770 = vpop.permute.xlu0 %1769
          %vm1771 = vcmp.lt.s32.totalorder %v382, 80
          %v1772 = vsel %vm1771, %v1768, %v1770
          %v1773 = vsel %vm1771, %v1770, %v1768
          %vm1774 = vmand %vm372, %vm357
          %v1777 = vcombine.low %v1772, %v1773
          %v1779 = vunpack.c.l.s4 1966171168
          %v1780 = vunpack.c.0.s8 %v1779
          %v1781 = vlaneseq
          %v1782 = vshrl.u32 %v1781, 7
          %v1783 = vsub.s32 %v1780, %v1782
          %v1784 = vrot.slane %v1777, %v1783
          %v1786 = vunpack.c.l.s4 1966171168
          %v1787 = vunpack.c.0.s8 %v1786
          %v1788 = vlaneseq
          %v1789 = vshrl.u32 %v1788, 7
          %v1790 = vsub.s32 %v1787, %v1789
          %v1791 = vrot.slane %v1784, %v1790
          %v1793 = vsel %vm1774, %v1791, 0.0
          %v1794 = vstv %s1766
          %v1795 = vmul.f32 %v1793, %v1794
          %v1796 = vadd.f32 %v1765, %v1795
          %s1797 = sld [smem:[#allocation4 + $0x2e]]
          %1798 = vrot.lane.b32.xlu0 %v315, 79
          %v1799 = vpop.permute.xlu0 %1798
          %1800 = vrot.lane.b32.xlu0 %v316, 79
          %v1801 = vpop.permute.xlu0 %1800
          %vm1802 = vcmp.lt.s32.totalorder %v382, 79
          %v1803 = vsel %vm1802, %v1799, %v1801
          %v1804 = vsel %vm1802, %v1801, %v1799
          %vm1805 = vmand %vm372, %vm363
          %v1808 = vcombine.low %v1803, %v1804
          %v1810 = vunpack.c.l.s4 1966171168
          %v1811 = vunpack.c.0.s8 %v1810
          %v1812 = vlaneseq
          %v1813 = vshrl.u32 %v1812, 7
          %v1814 = vsub.s32 %v1811, %v1813
          %v1815 = vrot.slane %v1808, %v1814
          %v1817 = vunpack.c.l.s4 1966171168
          %v1818 = vunpack.c.0.s8 %v1817
          %v1819 = vlaneseq
          %v1820 = vshrl.u32 %v1819, 7
          %v1821 = vsub.s32 %v1818, %v1820
          %v1822 = vrot.slane %v1815, %v1821
          %v1824 = vsel %vm1805, %v1822, 0.0
          %v1825 = vstv %s1797
          %v1826 = vmul.f32 %v1824, %v1825
          %v1827 = vadd.f32 %v1796, %v1826
          %s1828 = sld [smem:[#allocation4 + $0x2f]]
          %1829 = vrot.lane.b32.xlu0 %v315, 78
          %v1830 = vpop.permute.xlu0 %1829
          %1831 = vrot.lane.b32.xlu0 %v316, 78
          %v1832 = vpop.permute.xlu0 %1831
          %vm1833 = vcmp.lt.s32.totalorder %v382, 78
          %v1834 = vsel %vm1833, %v1830, %v1832
          %v1835 = vsel %vm1833, %v1832, %v1830
          %vm1836 = vmand %vm372, %vm369
          %v1839 = vcombine.low %v1834, %v1835
          %v1841 = vunpack.c.l.s4 1966171168
          %v1842 = vunpack.c.0.s8 %v1841
          %v1843 = vlaneseq
          %v1844 = vshrl.u32 %v1843, 7
          %v1845 = vsub.s32 %v1842, %v1844
          %v1846 = vrot.slane %v1839, %v1845
          %v1848 = vunpack.c.l.s4 1966171168
          %v1849 = vunpack.c.0.s8 %v1848
          %v1850 = vlaneseq
          %v1851 = vshrl.u32 %v1850, 7
          %v1852 = vsub.s32 %v1849, %v1851
          %v1853 = vrot.slane %v1846, %v1852
          %v1855 = vsel %vm1836, %v1853, 0.0
          %v1856 = vstv %s1828
          %v1857 = vmul.f32 %v1855, %v1856
          %v1858 = vadd.f32 %v1827, %v1857
          %s1859 = sld [smem:[#allocation4 + $0x30]]
          %1860 = vrot.lane.b32.xlu0 %v315, 77
          %v1861 = vpop.permute.xlu0 %1860
          %1862 = vrot.lane.b32.xlu0 %v316, 77
          %v1863 = vpop.permute.xlu0 %1862
          %vm1864 = vcmp.lt.s32.totalorder %v382, 77
          %v1865 = vsel %vm1864, %v1861, %v1863
          %v1866 = vsel %vm1864, %v1863, %v1861
          %vm1867 = vmand %vm372, %vm375
          %v1870 = vcombine.low %v1865, %v1866
          %v1872 = vunpack.c.l.s4 1966171168
          %v1873 = vunpack.c.0.s8 %v1872
          %v1874 = vlaneseq
          %v1875 = vshrl.u32 %v1874, 7
          %v1876 = vsub.s32 %v1873, %v1875
          %v1877 = vrot.slane %v1870, %v1876
          %v1879 = vunpack.c.l.s4 1966171168
          %v1880 = vunpack.c.0.s8 %v1879
          %v1881 = vlaneseq
          %v1882 = vshrl.u32 %v1881, 7
          %v1883 = vsub.s32 %v1880, %v1882
          %v1884 = vrot.slane %v1877, %v1883
          %v1886 = vsel %vm1867, %v1884, 0.0
          %v1887 = vstv %s1859
          %v1888 = vmul.f32 %v1886, %v1887
          %v1889 = vadd.f32 %v1858, %v1888
          %s1890 = sld [smem:[#allocation4 + $0x31]]
          %1891 = vrot.lane.b32.xlu0 %v324, 51
          %v1892 = vpop.permute.xlu0 %1891
          %1893 = vrot.lane.b32.xlu0 %v330, 51
          %v1894 = vpop.permute.xlu0 %1893
          %v1895 = vsel %vm383, %v1892, %v1894
          %v1896 = vsel %vm383, %v1894, %v1892
          %v1899 = vcombine.low %v1896, %v1895
          %v1901 = vunpack.c.l.s4 1966171168
          %v1902 = vunpack.c.0.s8 %v1901
          %v1903 = vlaneseq
          %v1904 = vshrl.u32 %v1903, 7
          %v1905 = vsub.s32 %v1902, %v1904
          %v1906 = vrot.slane %v1899, %v1905
          %v1908 = vunpack.c.l.s4 1966171168
          %v1909 = vunpack.c.0.s8 %v1908
          %v1910 = vlaneseq
          %v1911 = vshrl.u32 %v1910, 7
          %v1912 = vsub.s32 %v1909, %v1911
          %v1913 = vrot.slane %v1906, %v1912
          %v1915 = vsel %vm386, %v1913, 0.0
          %v1916 = vstv %s1890
          %v1917 = vmul.f32 %v1915, %v1916
          %v1918 = vadd.f32 %v1917, 0.0
          %s1919 = sld [smem:[#allocation4 + $0x32]]
          %1920 = vrot.lane.b32.xlu0 %v324, 50
          %v1921 = vpop.permute.xlu0 %1920
          %1922 = vrot.lane.b32.xlu0 %v330, 50
          %v1923 = vpop.permute.xlu0 %1922
          %v1924 = vsel %vm414, %v1921, %v1923
          %v1925 = vsel %vm414, %v1923, %v1921
          %v1928 = vcombine.low %v1925, %v1924
          %v1930 = vunpack.c.l.s4 1966171168
          %v1931 = vunpack.c.0.s8 %v1930
          %v1932 = vlaneseq
          %v1933 = vshrl.u32 %v1932, 7
          %v1934 = vsub.s32 %v1931, %v1933
          %v1935 = vrot.slane %v1928, %v1934
          %v1937 = vunpack.c.l.s4 1966171168
          %v1938 = vunpack.c.0.s8 %v1937
          %v1939 = vlaneseq
          %v1940 = vshrl.u32 %v1939, 7
          %v1941 = vsub.s32 %v1938, %v1940
          %v1942 = vrot.slane %v1935, %v1941
          %v1944 = vsel %vm417, %v1942, 0.0
          %v1945 = vstv %s1919
          %v1946 = vmul.f32 %v1944, %v1945
          %v1947 = vadd.f32 %v1918, %v1946
          %s1948 = sld [smem:[#allocation4 + $0x33]]
          %1949 = vrot.lane.b32.xlu0 %v324, 49
          %v1950 = vpop.permute.xlu0 %1949
          %1951 = vrot.lane.b32.xlu0 %v330, 49
          %v1952 = vpop.permute.xlu0 %1951
          %v1953 = vsel %vm445, %v1950, %v1952
          %v1954 = vsel %vm445, %v1952, %v1950
          %v1957 = vcombine.low %v1954, %v1953
          %v1959 = vunpack.c.l.s4 1966171168
          %v1960 = vunpack.c.0.s8 %v1959
          %v1961 = vlaneseq
          %v1962 = vshrl.u32 %v1961, 7
          %v1963 = vsub.s32 %v1960, %v1962
          %v1964 = vrot.slane %v1957, %v1963
          %v1966 = vunpack.c.l.s4 1966171168
          %v1967 = vunpack.c.0.s8 %v1966
          %v1968 = vlaneseq
          %v1969 = vshrl.u32 %v1968, 7
          %v1970 = vsub.s32 %v1967, %v1969
          %v1971 = vrot.slane %v1964, %v1970
          %v1973 = vsel %vm448, %v1971, 0.0
          %v1974 = vstv %s1948
          %v1975 = vmul.f32 %v1973, %v1974
          %v1976 = vadd.f32 %v1947, %v1975
          %s1977 = sld [smem:[#allocation4 + $0x34]]
          %1978 = vrot.lane.b32.xlu0 %v324, 48
          %v1979 = vpop.permute.xlu0 %1978
          %1980 = vrot.lane.b32.xlu0 %v330, 48
          %v1981 = vpop.permute.xlu0 %1980
          %v1982 = vsel %vm476, %v1979, %v1981
          %v1983 = vsel %vm476, %v1981, %v1979
          %v1986 = vcombine.low %v1983, %v1982
          %v1988 = vunpack.c.l.s4 1966171168
          %v1989 = vunpack.c.0.s8 %v1988
          %v1990 = vlaneseq
          %v1991 = vshrl.u32 %v1990, 7
          %v1992 = vsub.s32 %v1989, %v1991
          %v1993 = vrot.slane %v1986, %v1992
          %v1995 = vunpack.c.l.s4 1966171168
          %v1996 = vunpack.c.0.s8 %v1995
          %v1997 = vlaneseq
          %v1998 = vshrl.u32 %v1997, 7
          %v1999 = vsub.s32 %v1996, %v1998
          %v2000 = vrot.slane %v1993, %v1999
          %v2002 = vsel %vm479, %v2000, 0.0
          %v2003 = vstv %s1977
          %v2004 = vmul.f32 %v2002, %v2003
          %v2005 = vadd.f32 %v1976, %v2004
          %s2006 = sld [smem:[#allocation4 + $0x35]]
          %2007 = vrot.lane.b32.xlu0 %v324, 47
          %v2008 = vpop.permute.xlu0 %2007
          %2009 = vrot.lane.b32.xlu0 %v330, 47
          %v2010 = vpop.permute.xlu0 %2009
          %v2011 = vsel %vm507, %v2008, %v2010
          %v2012 = vsel %vm507, %v2010, %v2008
          %v2015 = vcombine.low %v2012, %v2011
          %v2017 = vunpack.c.l.s4 1966171168
          %v2018 = vunpack.c.0.s8 %v2017
          %v2019 = vlaneseq
          %v2020 = vshrl.u32 %v2019, 7
          %v2021 = vsub.s32 %v2018, %v2020
          %v2022 = vrot.slane %v2015, %v2021
          %v2024 = vunpack.c.l.s4 1966171168
          %v2025 = vunpack.c.0.s8 %v2024
          %v2026 = vlaneseq
          %v2027 = vshrl.u32 %v2026, 7
          %v2028 = vsub.s32 %v2025, %v2027
          %v2029 = vrot.slane %v2022, %v2028
          %v2031 = vsel %vm510, %v2029, 0.0
          %v2032 = vstv %s2006
          %v2033 = vmul.f32 %v2031, %v2032
          %v2034 = vadd.f32 %v2005, %v2033
          %s2035 = sld [smem:[#allocation4 + $0x36]]
          %2036 = vrot.lane.b32.xlu0 %v324, 46
          %v2037 = vpop.permute.xlu0 %2036
          %2038 = vrot.lane.b32.xlu0 %v330, 46
          %v2039 = vpop.permute.xlu0 %2038
          %v2040 = vsel %vm538, %v2037, %v2039
          %v2041 = vsel %vm538, %v2039, %v2037
          %v2044 = vcombine.low %v2041, %v2040
          %v2046 = vunpack.c.l.s4 1966171168
          %v2047 = vunpack.c.0.s8 %v2046
          %v2048 = vlaneseq
          %v2049 = vshrl.u32 %v2048, 7
          %v2050 = vsub.s32 %v2047, %v2049
          %v2051 = vrot.slane %v2044, %v2050
          %v2053 = vunpack.c.l.s4 1966171168
          %v2054 = vunpack.c.0.s8 %v2053
          %v2055 = vlaneseq
          %v2056 = vshrl.u32 %v2055, 7
          %v2057 = vsub.s32 %v2054, %v2056
          %v2058 = vrot.slane %v2051, %v2057
          %v2060 = vsel %vm541, %v2058, 0.0
          %v2061 = vstv %s2035
          %v2062 = vmul.f32 %v2060, %v2061
          %v2063 = vadd.f32 %v2034, %v2062
          %s2064 = sld [smem:[#allocation4 + $0x37]]
          %2065 = vrot.lane.b32.xlu0 %v324, 45
          %v2066 = vpop.permute.xlu0 %2065
          %2067 = vrot.lane.b32.xlu0 %v330, 45
          %v2068 = vpop.permute.xlu0 %2067
          %v2069 = vsel %vm569, %v2066, %v2068
          %v2070 = vsel %vm569, %v2068, %v2066
          %v2073 = vcombine.low %v2070, %v2069
          %v2075 = vunpack.c.l.s4 1966171168
          %v2076 = vunpack.c.0.s8 %v2075
          %v2077 = vlaneseq
          %v2078 = vshrl.u32 %v2077, 7
          %v2079 = vsub.s32 %v2076, %v2078
          %v2080 = vrot.slane %v2073, %v2079
          %v2082 = vunpack.c.l.s4 1966171168
          %v2083 = vunpack.c.0.s8 %v2082
          %v2084 = vlaneseq
          %v2085 = vshrl.u32 %v2084, 7
          %v2086 = vsub.s32 %v2083, %v2085
          %v2087 = vrot.slane %v2080, %v2086
          %v2089 = vsel %vm572, %v2087, 0.0
          %v2090 = vstv %s2064
          %v2091 = vmul.f32 %v2089, %v2090
          %v2092 = vadd.f32 %v2063, %v2091
          %s2093 = sld [smem:[#allocation4 + $0x38]]
          %2094 = vrot.lane.b32.xlu0 %v324, 35
          %v2095 = vpop.permute.xlu0 %2094
          %2096 = vrot.lane.b32.xlu0 %v330, 35
          %v2097 = vpop.permute.xlu0 %2096
          %v2098 = vsel %vm600, %v2095, %v2097
          %v2099 = vsel %vm600, %v2097, %v2095
          %v2102 = vcombine.low %v2099, %v2098
          %v2104 = vunpack.c.l.s4 1966171168
          %v2105 = vunpack.c.0.s8 %v2104
          %v2106 = vlaneseq
          %v2107 = vshrl.u32 %v2106, 7
          %v2108 = vsub.s32 %v2105, %v2107
          %v2109 = vrot.slane %v2102, %v2108
          %v2111 = vunpack.c.l.s4 1966171168
          %v2112 = vunpack.c.0.s8 %v2111
          %v2113 = vlaneseq
          %v2114 = vshrl.u32 %v2113, 7
          %v2115 = vsub.s32 %v2112, %v2114
          %v2116 = vrot.slane %v2109, %v2115
          %v2118 = vsel %vm603, %v2116, 0.0
          %v2119 = vstv %s2093
          %v2120 = vmul.f32 %v2118, %v2119
          %v2121 = vadd.f32 %v2120, 0.0
          %s2122 = sld [smem:[#allocation4 + $0x39]]
          %2123 = vrot.lane.b32.xlu0 %v324, 34
          %v2124 = vpop.permute.xlu0 %2123
          %2125 = vrot.lane.b32.xlu0 %v330, 34
          %v2126 = vpop.permute.xlu0 %2125
          %v2127 = vsel %vm631, %v2124, %v2126
          %v2128 = vsel %vm631, %v2126, %v2124
          %v2131 = vcombine.low %v2128, %v2127
          %v2133 = vunpack.c.l.s4 1966171168
          %v2134 = vunpack.c.0.s8 %v2133
          %v2135 = vlaneseq
          %v2136 = vshrl.u32 %v2135, 7
          %v2137 = vsub.s32 %v2134, %v2136
          %v2138 = vrot.slane %v2131, %v2137
          %v2140 = vunpack.c.l.s4 1966171168
          %v2141 = vunpack.c.0.s8 %v2140
          %v2142 = vlaneseq
          %v2143 = vshrl.u32 %v2142, 7
          %v2144 = vsub.s32 %v2141, %v2143
          %v2145 = vrot.slane %v2138, %v2144
          %v2147 = vsel %vm634, %v2145, 0.0
          %v2148 = vstv %s2122
          %v2149 = vmul.f32 %v2147, %v2148
          %v2150 = vadd.f32 %v2121, %v2149
          %s2151 = sld [smem:[#allocation4 + $0x3a]]
          %2152 = vrot.lane.b32.xlu0 %v324, 33
          %v2153 = vpop.permute.xlu0 %2152
          %2154 = vrot.lane.b32.xlu0 %v330, 33
          %v2155 = vpop.permute.xlu0 %2154
          %v2156 = vsel %vm662, %v2153, %v2155
          %v2157 = vsel %vm662, %v2155, %v2153
          %v2160 = vcombine.low %v2157, %v2156
          %v2162 = vunpack.c.l.s4 1966171168
          %v2163 = vunpack.c.0.s8 %v2162
          %v2164 = vlaneseq
          %v2165 = vshrl.u32 %v2164, 7
          %v2166 = vsub.s32 %v2163, %v2165
          %v2167 = vrot.slane %v2160, %v2166
          %v2169 = vunpack.c.l.s4 1966171168
          %v2170 = vunpack.c.0.s8 %v2169
          %v2171 = vlaneseq
          %v2172 = vshrl.u32 %v2171, 7
          %v2173 = vsub.s32 %v2170, %v2172
          %v2174 = vrot.slane %v2167, %v2173
          %v2176 = vsel %vm665, %v2174, 0.0
          %v2177 = vstv %s2151
          %v2178 = vmul.f32 %v2176, %v2177
          %v2179 = vadd.f32 %v2150, %v2178
          %s2180 = sld [smem:[#allocation4 + $0x3b]]
          %2181 = vrot.lane.b32.xlu0 %v324, 32
          %v2182 = vpop.permute.xlu0 %2181
          %2183 = vrot.lane.b32.xlu0 %v330, 32
          %v2184 = vpop.permute.xlu0 %2183
          %v2185 = vsel %vm693, %v2182, %v2184
          %v2186 = vsel %vm693, %v2184, %v2182
          %v2189 = vcombine.low %v2186, %v2185
          %v2191 = vunpack.c.l.s4 1966171168
          %v2192 = vunpack.c.0.s8 %v2191
          %v2193 = vlaneseq
          %v2194 = vshrl.u32 %v2193, 7
          %v2195 = vsub.s32 %v2192, %v2194
          %v2196 = vrot.slane %v2189, %v2195
          %v2198 = vunpack.c.l.s4 1966171168
          %v2199 = vunpack.c.0.s8 %v2198
          %v2200 = vlaneseq
          %v2201 = vshrl.u32 %v2200, 7
          %v2202 = vsub.s32 %v2199, %v2201
          %v2203 = vrot.slane %v2196, %v2202
          %v2205 = vsel %vm696, %v2203, 0.0
          %v2206 = vstv %s2180
          %v2207 = vmul.f32 %v2205, %v2206
          %v2208 = vadd.f32 %v2179, %v2207
          %s2209 = sld [smem:[#allocation4 + $0x3c]]
          %2210 = vrot.lane.b32.xlu0 %v324, 31
          %v2211 = vpop.permute.xlu0 %2210
          %2212 = vrot.lane.b32.xlu0 %v330, 31
          %v2213 = vpop.permute.xlu0 %2212
          %v2214 = vsel %vm724, %v2211, %v2213
          %v2215 = vsel %vm724, %v2213, %v2211
          %v2218 = vcombine.low %v2215, %v2214
          %v2220 = vunpack.c.l.s4 1966171168
          %v2221 = vunpack.c.0.s8 %v2220
          %v2222 = vlaneseq
          %v2223 = vshrl.u32 %v2222, 7
          %v2224 = vsub.s32 %v2221, %v2223
          %v2225 = vrot.slane %v2218, %v2224
          %v2227 = vunpack.c.l.s4 1966171168
          %v2228 = vunpack.c.0.s8 %v2227
          %v2229 = vlaneseq
          %v2230 = vshrl.u32 %v2229, 7
          %v2231 = vsub.s32 %v2228, %v2230
          %v2232 = vrot.slane %v2225, %v2231
          %v2234 = vsel %vm727, %v2232, 0.0
          %v2235 = vstv %s2209
          %v2236 = vmul.f32 %v2234, %v2235
          %v2237 = vadd.f32 %v2208, %v2236
          %s2238 = sld [smem:[#allocation4 + $0x3d]]
          %2239 = vrot.lane.b32.xlu0 %v324, 30
          %v2240 = vpop.permute.xlu0 %2239
          %2241 = vrot.lane.b32.xlu0 %v330, 30
          %v2242 = vpop.permute.xlu0 %2241
          %v2243 = vsel %vm755, %v2240, %v2242
          %v2244 = vsel %vm755, %v2242, %v2240
          %v2247 = vcombine.low %v2244, %v2243
          %v2249 = vunpack.c.l.s4 1966171168
          %v2250 = vunpack.c.0.s8 %v2249
          %v2251 = vlaneseq
          %v2252 = vshrl.u32 %v2251, 7
          %v2253 = vsub.s32 %v2250, %v2252
          %v2254 = vrot.slane %v2247, %v2253
          %v2256 = vunpack.c.l.s4 1966171168
          %v2257 = vunpack.c.0.s8 %v2256
          %v2258 = vlaneseq
          %v2259 = vshrl.u32 %v2258, 7
          %v2260 = vsub.s32 %v2257, %v2259
          %v2261 = vrot.slane %v2254, %v2260
          %v2263 = vsel %vm758, %v2261, 0.0
          %v2264 = vstv %s2238
          %v2265 = vmul.f32 %v2263, %v2264
          %v2266 = vadd.f32 %v2237, %v2265
          %s2267 = sld [smem:[#allocation4 + $0x3e]]
          %2268 = vrot.lane.b32.xlu0 %v324, 29
          %v2269 = vpop.permute.xlu0 %2268
          %2270 = vrot.lane.b32.xlu0 %v330, 29
          %v2271 = vpop.permute.xlu0 %2270
          %v2272 = vsel %vm786, %v2269, %v2271
          %v2273 = vsel %vm786, %v2271, %v2269
          %v2276 = vcombine.low %v2273, %v2272
          %v2278 = vunpack.c.l.s4 1966171168
          %v2279 = vunpack.c.0.s8 %v2278
          %v2280 = vlaneseq
          %v2281 = vshrl.u32 %v2280, 7
          %v2282 = vsub.s32 %v2279, %v2281
          %v2283 = vrot.slane %v2276, %v2282
          %v2285 = vunpack.c.l.s4 1966171168
          %v2286 = vunpack.c.0.s8 %v2285
          %v2287 = vlaneseq
          %v2288 = vshrl.u32 %v2287, 7
          %v2289 = vsub.s32 %v2286, %v2288
          %v2290 = vrot.slane %v2283, %v2289
          %v2292 = vsel %vm789, %v2290, 0.0
          %v2293 = vstv %s2267
          %v2294 = vmul.f32 %v2292, %v2293
          %v2295 = vadd.f32 %v2266, %v2294
          %s2296 = sld [smem:[#allocation4 + $0x3f]]
          %2297 = vrot.lane.b32.xlu0 %v324, 19
          %v2298 = vpop.permute.xlu0 %2297
          %2299 = vrot.lane.b32.xlu0 %v330, 19
          %v2300 = vpop.permute.xlu0 %2299
          %v2301 = vsel %vm817, %v2298, %v2300
          %v2302 = vsel %vm817, %v2300, %v2298
          %v2305 = vcombine.low %v2302, %v2301
          %v2307 = vunpack.c.l.s4 1966171168
          %v2308 = vunpack.c.0.s8 %v2307
          %v2309 = vlaneseq
          %v2310 = vshrl.u32 %v2309, 7
          %v2311 = vsub.s32 %v2308, %v2310
          %v2312 = vrot.slane %v2305, %v2311
          %v2314 = vunpack.c.l.s4 1966171168
          %v2315 = vunpack.c.0.s8 %v2314
          %v2316 = vlaneseq
          %v2317 = vshrl.u32 %v2316, 7
          %v2318 = vsub.s32 %v2315, %v2317
          %v2319 = vrot.slane %v2312, %v2318
          %v2321 = vsel %vm820, %v2319, 0.0
          %v2322 = vstv %s2296
          %v2323 = vmul.f32 %v2321, %v2322
          %v2324 = vadd.f32 %v2092, %v2323
          %s2325 = sld [smem:[#allocation4 + $0x40]]
          %2326 = vrot.lane.b32.xlu0 %v324, 18
          %v2327 = vpop.permute.xlu0 %2326
          %2328 = vrot.lane.b32.xlu0 %v330, 18
          %v2329 = vpop.permute.xlu0 %2328
          %v2330 = vsel %vm848, %v2327, %v2329
          %v2331 = vsel %vm848, %v2329, %v2327
          %v2334 = vcombine.low %v2331, %v2330
          %v2336 = vunpack.c.l.s4 1966171168
          %v2337 = vunpack.c.0.s8 %v2336
          %v2338 = vlaneseq
          %v2339 = vshrl.u32 %v2338, 7
          %v2340 = vsub.s32 %v2337, %v2339
          %v2341 = vrot.slane %v2334, %v2340
          %v2343 = vunpack.c.l.s4 1966171168
          %v2344 = vunpack.c.0.s8 %v2343
          %v2345 = vlaneseq
          %v2346 = vshrl.u32 %v2345, 7
          %v2347 = vsub.s32 %v2344, %v2346
          %v2348 = vrot.slane %v2341, %v2347
          %v2350 = vsel %vm851, %v2348, 0.0
          %v2351 = vstv %s2325
          %v2352 = vmul.f32 %v2350, %v2351
          %v2353 = vadd.f32 %v2324, %v2352
          %s2354 = sld [smem:[#allocation4 + $0x41]]
          %2355 = vrot.lane.b32.xlu0 %v324, 17
          %v2356 = vpop.permute.xlu0 %2355
          %2357 = vrot.lane.b32.xlu0 %v330, 17
          %v2358 = vpop.permute.xlu0 %2357
          %v2359 = vsel %vm879, %v2356, %v2358
          %v2360 = vsel %vm879, %v2358, %v2356
          %v2363 = vcombine.low %v2360, %v2359
          %v2365 = vunpack.c.l.s4 1966171168
          %v2366 = vunpack.c.0.s8 %v2365
          %v2367 = vlaneseq
          %v2368 = vshrl.u32 %v2367, 7
          %v2369 = vsub.s32 %v2366, %v2368
          %v2370 = vrot.slane %v2363, %v2369
          %v2372 = vunpack.c.l.s4 1966171168
          %v2373 = vunpack.c.0.s8 %v2372
          %v2374 = vlaneseq
          %v2375 = vshrl.u32 %v2374, 7
          %v2376 = vsub.s32 %v2373, %v2375
          %v2377 = vrot.slane %v2370, %v2376
          %v2379 = vsel %vm882, %v2377, 0.0
          %v2380 = vstv %s2354
          %v2381 = vmul.f32 %v2379, %v2380
          %v2382 = vadd.f32 %v2353, %v2381
          %s2383 = sld [smem:[#allocation4 + $0x42]]
          %2384 = vrot.lane.b32.xlu0 %v324, 16
          %v2385 = vpop.permute.xlu0 %2384
          %2386 = vrot.lane.b32.xlu0 %v330, 16
          %v2387 = vpop.permute.xlu0 %2386
          %v2388 = vsel %vm910, %v2385, %v2387
          %v2389 = vsel %vm910, %v2387, %v2385
          %v2392 = vcombine.low %v2389, %v2388
          %v2394 = vunpack.c.l.s4 1966171168
          %v2395 = vunpack.c.0.s8 %v2394
          %v2396 = vlaneseq
          %v2397 = vshrl.u32 %v2396, 7
          %v2398 = vsub.s32 %v2395, %v2397
          %v2399 = vrot.slane %v2392, %v2398
          %v2401 = vunpack.c.l.s4 1966171168
          %v2402 = vunpack.c.0.s8 %v2401
          %v2403 = vlaneseq
          %v2404 = vshrl.u32 %v2403, 7
          %v2405 = vsub.s32 %v2402, %v2404
          %v2406 = vrot.slane %v2399, %v2405
          %v2408 = vsel %vm913, %v2406, 0.0
          %v2409 = vstv %s2383
          %v2410 = vmul.f32 %v2408, %v2409
          %v2411 = vadd.f32 %v2382, %v2410
          %s2412 = sld [smem:[#allocation4 + $0x43]]
          %2413 = vrot.lane.b32.xlu0 %v324, 15
          %v2414 = vpop.permute.xlu0 %2413
          %2415 = vrot.lane.b32.xlu0 %v330, 15
          %v2416 = vpop.permute.xlu0 %2415
          %v2417 = vsel %vm941, %v2414, %v2416
          %v2418 = vsel %vm941, %v2416, %v2414
          %v2421 = vcombine.low %v2418, %v2417
          %v2423 = vunpack.c.l.s4 1966171168
          %v2424 = vunpack.c.0.s8 %v2423
          %v2425 = vlaneseq
          %v2426 = vshrl.u32 %v2425, 7
          %v2427 = vsub.s32 %v2424, %v2426
          %v2428 = vrot.slane %v2421, %v2427
          %v2430 = vunpack.c.l.s4 1966171168
          %v2431 = vunpack.c.0.s8 %v2430
          %v2432 = vlaneseq
          %v2433 = vshrl.u32 %v2432, 7
          %v2434 = vsub.s32 %v2431, %v2433
          %v2435 = vrot.slane %v2428, %v2434
          %v2437 = vsel %vm944, %v2435, 0.0
          %v2438 = vstv %s2412
          %v2439 = vmul.f32 %v2437, %v2438
          %v2440 = vadd.f32 %v2411, %v2439
          %s2441 = sld [smem:[#allocation4 + $0x44]]
          %2442 = vrot.lane.b32.xlu0 %v324, 14
          %v2443 = vpop.permute.xlu0 %2442
          %2444 = vrot.lane.b32.xlu0 %v330, 14
          %v2445 = vpop.permute.xlu0 %2444
          %v2446 = vsel %vm972, %v2443, %v2445
          %v2447 = vsel %vm972, %v2445, %v2443
          %v2450 = vcombine.low %v2447, %v2446
          %v2452 = vunpack.c.l.s4 1966171168
          %v2453 = vunpack.c.0.s8 %v2452
          %v2454 = vlaneseq
          %v2455 = vshrl.u32 %v2454, 7
          %v2456 = vsub.s32 %v2453, %v2455
          %v2457 = vrot.slane %v2450, %v2456
          %v2459 = vunpack.c.l.s4 1966171168
          %v2460 = vunpack.c.0.s8 %v2459
          %v2461 = vlaneseq
          %v2462 = vshrl.u32 %v2461, 7
          %v2463 = vsub.s32 %v2460, %v2462
          %v2464 = vrot.slane %v2457, %v2463
          %v2466 = vsel %vm975, %v2464, 0.0
          %v2467 = vstv %s2441
          %v2468 = vmul.f32 %v2466, %v2467
          %v2469 = vadd.f32 %v2440, %v2468
          %s2470 = sld [smem:[#allocation4 + $0x45]]
          %2471 = vrot.lane.b32.xlu0 %v324, 13
          %v2472 = vpop.permute.xlu0 %2471
          %2473 = vrot.lane.b32.xlu0 %v330, 13
          %v2474 = vpop.permute.xlu0 %2473
          %v2475 = vsel %vm1003, %v2472, %v2474
          %v2476 = vsel %vm1003, %v2474, %v2472
          %v2479 = vcombine.low %v2476, %v2475
          %v2481 = vunpack.c.l.s4 1966171168
          %v2482 = vunpack.c.0.s8 %v2481
          %v2483 = vlaneseq
          %v2484 = vshrl.u32 %v2483, 7
          %v2485 = vsub.s32 %v2482, %v2484
          %v2486 = vrot.slane %v2479, %v2485
          %v2488 = vunpack.c.l.s4 1966171168
          %v2489 = vunpack.c.0.s8 %v2488
          %v2490 = vlaneseq
          %v2491 = vshrl.u32 %v2490, 7
          %v2492 = vsub.s32 %v2489, %v2491
          %v2493 = vrot.slane %v2486, %v2492
          %v2495 = vsel %vm1006, %v2493, 0.0
          %v2496 = vstv %s2470
          %v2497 = vmul.f32 %v2495, %v2496
          %v2498 = vadd.f32 %v2469, %v2497
          %s2499 = sld [smem:[#allocation4 + $0x46]]
          %2500 = vrot.lane.b32.xlu0 %v324, 3
          %v2501 = vpop.permute.xlu0 %2500
          %2502 = vrot.lane.b32.xlu0 %v330, 3
          %v2503 = vpop.permute.xlu0 %2502
          %v2504 = vsel %vm1034, %v2501, %v2503
          %v2505 = vsel %vm1034, %v2503, %v2501
          %v2508 = vcombine.low %v2505, %v2504
          %v2510 = vunpack.c.l.s4 1966171168
          %v2511 = vunpack.c.0.s8 %v2510
          %v2512 = vlaneseq
          %v2513 = vshrl.u32 %v2512, 7
          %v2514 = vsub.s32 %v2511, %v2513
          %v2515 = vrot.slane %v2508, %v2514
          %v2517 = vunpack.c.l.s4 1966171168
          %v2518 = vunpack.c.0.s8 %v2517
          %v2519 = vlaneseq
          %v2520 = vshrl.u32 %v2519, 7
          %v2521 = vsub.s32 %v2518, %v2520
          %v2522 = vrot.slane %v2515, %v2521
          %v2524 = vsel %vm1037, %v2522, 0.0
          %v2525 = vstv %s2499
          %v2526 = vmul.f32 %v2524, %v2525
          %v2527 = vadd.f32 %v2295, %v2526
          %s2528 = sld [smem:[#allocation4 + $0x47]]
          %2529 = vrot.lane.b32.xlu0 %v324, 2
          %v2530 = vpop.permute.xlu0 %2529
          %2531 = vrot.lane.b32.xlu0 %v330, 2
          %v2532 = vpop.permute.xlu0 %2531
          %v2533 = vsel %vm1065, %v2530, %v2532
          %v2534 = vsel %vm1065, %v2532, %v2530
          %v2537 = vcombine.low %v2534, %v2533
          %v2539 = vunpack.c.l.s4 1966171168
          %v2540 = vunpack.c.0.s8 %v2539
          %v2541 = vlaneseq
          %v2542 = vshrl.u32 %v2541, 7
          %v2543 = vsub.s32 %v2540, %v2542
          %v2544 = vrot.slane %v2537, %v2543
          %v2546 = vunpack.c.l.s4 1966171168
          %v2547 = vunpack.c.0.s8 %v2546
          %v2548 = vlaneseq
          %v2549 = vshrl.u32 %v2548, 7
          %v2550 = vsub.s32 %v2547, %v2549
          %v2551 = vrot.slane %v2544, %v2550
          %v2553 = vsel %vm1068, %v2551, 0.0
          %v2554 = vstv %s2528
          %v2555 = vmul.f32 %v2553, %v2554
          %v2556 = vadd.f32 %v2527, %v2555
          %s2557 = sld [smem:[#allocation4 + $0x48]]
          %2558 = vrot.lane.b32.xlu0 %v324, 1
          %v2559 = vpop.permute.xlu0 %2558
          %2560 = vrot.lane.b32.xlu0 %v330, 1
          %v2561 = vpop.permute.xlu0 %2560
          %v2562 = vsel %vm1096, %v2559, %v2561
          %v2563 = vsel %vm1096, %v2561, %v2559
          %v2566 = vcombine.low %v2563, %v2562
          %v2568 = vunpack.c.l.s4 1966171168
          %v2569 = vunpack.c.0.s8 %v2568
          %v2570 = vlaneseq
          %v2571 = vshrl.u32 %v2570, 7
          %v2572 = vsub.s32 %v2569, %v2571
          %v2573 = vrot.slane %v2566, %v2572
          %v2575 = vunpack.c.l.s4 1966171168
          %v2576 = vunpack.c.0.s8 %v2575
          %v2577 = vlaneseq
          %v2578 = vshrl.u32 %v2577, 7
          %v2579 = vsub.s32 %v2576, %v2578
          %v2580 = vrot.slane %v2573, %v2579
          %v2582 = vsel %vm1099, %v2580, 0.0
          %v2583 = vstv %s2557
          %v2584 = vmul.f32 %v2582, %v2583
          %v2585 = vadd.f32 %v2556, %v2584
          %s2586 = sld [smem:[#allocation4 + $0x49]]
          %v2589 = vcombine.low %v324, %v330
          %v2591 = vunpack.c.l.s4 1966171168
          %v2592 = vunpack.c.0.s8 %v2591
          %v2593 = vlaneseq
          %v2594 = vshrl.u32 %v2593, 7
          %v2595 = vsub.s32 %v2592, %v2594
          %v2596 = vrot.slane %v2589, %v2595
          %v2598 = vunpack.c.l.s4 1966171168
          %v2599 = vunpack.c.0.s8 %v2598
          %v2600 = vlaneseq
          %v2601 = vshrl.u32 %v2600, 7
          %v2602 = vsub.s32 %v2599, %v2601
          %v2603 = vrot.slane %v2596, %v2602
          %v2605 = vsel %vm1123, %v2603, 0.0
          %v2606 = vstv %s2586
          %v2607 = vmul.f32 %v2605, %v2606
          %v2608 = vadd.f32 %v2585, %v2607
          %s2609 = sld [smem:[#allocation4 + $0x4a]]
          %2610 = vrot.lane.b32.xlu0 %v324, 127
          %v2611 = vpop.permute.xlu0 %2610
          %2612 = vrot.lane.b32.xlu0 %v330, 127
          %v2613 = vpop.permute.xlu0 %2612
          %v2614 = vsel %vm1151, %v2611, %v2613
          %v2615 = vsel %vm1151, %v2613, %v2611
          %v2618 = vcombine.low %v2614, %v2615
          %v2620 = vunpack.c.l.s4 1966171168
          %v2621 = vunpack.c.0.s8 %v2620
          %v2622 = vlaneseq
          %v2623 = vshrl.u32 %v2622, 7
          %v2624 = vsub.s32 %v2621, %v2623
          %v2625 = vrot.slane %v2618, %v2624
          %v2627 = vunpack.c.l.s4 1966171168
          %v2628 = vunpack.c.0.s8 %v2627
          %v2629 = vlaneseq
          %v2630 = vshrl.u32 %v2629, 7
          %v2631 = vsub.s32 %v2628, %v2630
          %v2632 = vrot.slane %v2625, %v2631
          %v2634 = vsel %vm1154, %v2632, 0.0
          %v2635 = vstv %s2609
          %v2636 = vmul.f32 %v2634, %v2635
          %v2637 = vadd.f32 %v2608, %v2636
          %s2638 = sld [smem:[#allocation4 + $0x4b]]
          %2639 = vrot.lane.b32.xlu0 %v324, 126
          %v2640 = vpop.permute.xlu0 %2639
          %2641 = vrot.lane.b32.xlu0 %v330, 126
          %v2642 = vpop.permute.xlu0 %2641
          %v2643 = vsel %vm1182, %v2640, %v2642
          %v2644 = vsel %vm1182, %v2642, %v2640
          %v2647 = vcombine.low %v2643, %v2644
          %v2649 = vunpack.c.l.s4 1966171168
          %v2650 = vunpack.c.0.s8 %v2649
          %v2651 = vlaneseq
          %v2652 = vshrl.u32 %v2651, 7
          %v2653 = vsub.s32 %v2650, %v2652
          %v2654 = vrot.slane %v2647, %v2653
          %v2656 = vunpack.c.l.s4 1966171168
          %v2657 = vunpack.c.0.s8 %v2656
          %v2658 = vlaneseq
          %v2659 = vshrl.u32 %v2658, 7
          %v2660 = vsub.s32 %v2657, %v2659
          %v2661 = vrot.slane %v2654, %v2660
          %v2663 = vsel %vm1185, %v2661, 0.0
          %v2664 = vstv %s2638
          %v2665 = vmul.f32 %v2663, %v2664
          %v2666 = vadd.f32 %v2637, %v2665
          %s2667 = sld [smem:[#allocation4 + $0x4c]]
          %2668 = vrot.lane.b32.xlu0 %v324, 125
          %v2669 = vpop.permute.xlu0 %2668
          %2670 = vrot.lane.b32.xlu0 %v330, 125
          %v2671 = vpop.permute.xlu0 %2670
          %v2672 = vsel %vm1213, %v2669, %v2671
          %v2673 = vsel %vm1213, %v2671, %v2669
          %v2676 = vcombine.low %v2672, %v2673
          %v2678 = vunpack.c.l.s4 1966171168
          %v2679 = vunpack.c.0.s8 %v2678
          %v2680 = vlaneseq
          %v2681 = vshrl.u32 %v2680, 7
          %v2682 = vsub.s32 %v2679, %v2681
          %v2683 = vrot.slane %v2676, %v2682
          %v2685 = vunpack.c.l.s4 1966171168
          %v2686 = vunpack.c.0.s8 %v2685
          %v2687 = vlaneseq
          %v2688 = vshrl.u32 %v2687, 7
          %v2689 = vsub.s32 %v2686, %v2688
          %v2690 = vrot.slane %v2683, %v2689
          %v2692 = vsel %vm1216, %v2690, 0.0
          %v2693 = vstv %s2667
          %v2694 = vmul.f32 %v2692, %v2693
          %v2695 = vadd.f32 %v2666, %v2694
          %s2696 = sld [smem:[#allocation4 + $0x4d]]
          %2697 = vrot.lane.b32.xlu0 %v324, 115
          %v2698 = vpop.permute.xlu0 %2697
          %2699 = vrot.lane.b32.xlu0 %v330, 115
          %v2700 = vpop.permute.xlu0 %2699
          %v2701 = vsel %vm1244, %v2698, %v2700
          %v2702 = vsel %vm1244, %v2700, %v2698
          %v2705 = vcombine.low %v2701, %v2702
          %v2707 = vunpack.c.l.s4 1966171168
          %v2708 = vunpack.c.0.s8 %v2707
          %v2709 = vlaneseq
          %v2710 = vshrl.u32 %v2709, 7
          %v2711 = vsub.s32 %v2708, %v2710
          %v2712 = vrot.slane %v2705, %v2711
          %v2714 = vunpack.c.l.s4 1966171168
          %v2715 = vunpack.c.0.s8 %v2714
          %v2716 = vlaneseq
          %v2717 = vshrl.u32 %v2716, 7
          %v2718 = vsub.s32 %v2715, %v2717
          %v2719 = vrot.slane %v2712, %v2718
          %v2721 = vsel %vm1247, %v2719, 0.0
          %v2722 = vstv %s2696
          %v2723 = vmul.f32 %v2721, %v2722
          %v2724 = vadd.f32 %v2498, %v2723
          %s2725 = sld [smem:[#allocation4 + $0x4e]]
          %2726 = vrot.lane.b32.xlu0 %v324, 114
          %v2727 = vpop.permute.xlu0 %2726
          %2728 = vrot.lane.b32.xlu0 %v330, 114
          %v2729 = vpop.permute.xlu0 %2728
          %v2730 = vsel %vm1275, %v2727, %v2729
          %v2731 = vsel %vm1275, %v2729, %v2727
          %v2734 = vcombine.low %v2730, %v2731
          %v2736 = vunpack.c.l.s4 1966171168
          %v2737 = vunpack.c.0.s8 %v2736
          %v2738 = vlaneseq
          %v2739 = vshrl.u32 %v2738, 7
          %v2740 = vsub.s32 %v2737, %v2739
          %v2741 = vrot.slane %v2734, %v2740
          %v2743 = vunpack.c.l.s4 1966171168
          %v2744 = vunpack.c.0.s8 %v2743
          %v2745 = vlaneseq
          %v2746 = vshrl.u32 %v2745, 7
          %v2747 = vsub.s32 %v2744, %v2746
          %v2748 = vrot.slane %v2741, %v2747
          %v2750 = vsel %vm1278, %v2748, 0.0
          %v2751 = vstv %s2725
          %v2752 = vmul.f32 %v2750, %v2751
          %v2753 = vadd.f32 %v2724, %v2752
          %s2754 = sld [smem:[#allocation4 + $0x4f]]
          %2755 = vrot.lane.b32.xlu0 %v324, 113
          %v2756 = vpop.permute.xlu0 %2755
          %2757 = vrot.lane.b32.xlu0 %v330, 113
          %v2758 = vpop.permute.xlu0 %2757
          %v2759 = vsel %vm1306, %v2756, %v2758
          %v2760 = vsel %vm1306, %v2758, %v2756
          %v2763 = vcombine.low %v2759, %v2760
          %v2765 = vunpack.c.l.s4 1966171168
          %v2766 = vunpack.c.0.s8 %v2765
          %v2767 = vlaneseq
          %v2768 = vshrl.u32 %v2767, 7
          %v2769 = vsub.s32 %v2766, %v2768
          %v2770 = vrot.slane %v2763, %v2769
          %v2772 = vunpack.c.l.s4 1966171168
          %v2773 = vunpack.c.0.s8 %v2772
          %v2774 = vlaneseq
          %v2775 = vshrl.u32 %v2774, 7
          %v2776 = vsub.s32 %v2773, %v2775
          %v2777 = vrot.slane %v2770, %v2776
          %v2779 = vsel %vm1309, %v2777, 0.0
          %v2780 = vstv %s2754
          %v2781 = vmul.f32 %v2779, %v2780
          %v2782 = vadd.f32 %v2753, %v2781
          %s2783 = sld [smem:[#allocation4 + $0x50]]
          %2784 = vrot.lane.b32.xlu0 %v324, 112
          %v2785 = vpop.permute.xlu0 %2784
          %2786 = vrot.lane.b32.xlu0 %v330, 112
          %v2787 = vpop.permute.xlu0 %2786
          %v2788 = vsel %vm1337, %v2785, %v2787
          %v2789 = vsel %vm1337, %v2787, %v2785
          %v2792 = vcombine.low %v2788, %v2789
          %v2794 = vunpack.c.l.s4 1966171168
          %v2795 = vunpack.c.0.s8 %v2794
          %v2796 = vlaneseq
          %v2797 = vshrl.u32 %v2796, 7
          %v2798 = vsub.s32 %v2795, %v2797
          %v2799 = vrot.slane %v2792, %v2798
          %v2801 = vunpack.c.l.s4 1966171168
          %v2802 = vunpack.c.0.s8 %v2801
          %v2803 = vlaneseq
          %v2804 = vshrl.u32 %v2803, 7
          %v2805 = vsub.s32 %v2802, %v2804
          %v2806 = vrot.slane %v2799, %v2805
          %v2808 = vsel %vm1340, %v2806, 0.0
          %v2809 = vstv %s2783
          %v2810 = vmul.f32 %v2808, %v2809
          %v2811 = vadd.f32 %v2782, %v2810
          %s2812 = sld [smem:[#allocation4 + $0x51]]
          %2813 = vrot.lane.b32.xlu0 %v324, 111
          %v2814 = vpop.permute.xlu0 %2813
          %2815 = vrot.lane.b32.xlu0 %v330, 111
          %v2816 = vpop.permute.xlu0 %2815
          %v2817 = vsel %vm1368, %v2814, %v2816
          %v2818 = vsel %vm1368, %v2816, %v2814
          %v2821 = vcombine.low %v2817, %v2818
          %v2823 = vunpack.c.l.s4 1966171168
          %v2824 = vunpack.c.0.s8 %v2823
          %v2825 = vlaneseq
          %v2826 = vshrl.u32 %v2825, 7
          %v2827 = vsub.s32 %v2824, %v2826
          %v2828 = vrot.slane %v2821, %v2827
          %v2830 = vunpack.c.l.s4 1966171168
          %v2831 = vunpack.c.0.s8 %v2830
          %v2832 = vlaneseq
          %v2833 = vshrl.u32 %v2832, 7
          %v2834 = vsub.s32 %v2831, %v2833
          %v2835 = vrot.slane %v2828, %v2834
          %v2837 = vsel %vm1371, %v2835, 0.0
          %v2838 = vstv %s2812
          %v2839 = vmul.f32 %v2837, %v2838
          %v2840 = vadd.f32 %v2811, %v2839
          %s2841 = sld [smem:[#allocation4 + $0x52]]
          %2842 = vrot.lane.b32.xlu0 %v324, 110
          %v2843 = vpop.permute.xlu0 %2842
          %2844 = vrot.lane.b32.xlu0 %v330, 110
          %v2845 = vpop.permute.xlu0 %2844
          %v2846 = vsel %vm1399, %v2843, %v2845
          %v2847 = vsel %vm1399, %v2845, %v2843
          %v2850 = vcombine.low %v2846, %v2847
          %v2852 = vunpack.c.l.s4 1966171168
          %v2853 = vunpack.c.0.s8 %v2852
          %v2854 = vlaneseq
          %v2855 = vshrl.u32 %v2854, 7
          %v2856 = vsub.s32 %v2853, %v2855
          %v2857 = vrot.slane %v2850, %v2856
          %v2859 = vunpack.c.l.s4 1966171168
          %v2860 = vunpack.c.0.s8 %v2859
          %v2861 = vlaneseq
          %v2862 = vshrl.u32 %v2861, 7
          %v2863 = vsub.s32 %v2860, %v2862
          %v2864 = vrot.slane %v2857, %v2863
          %v2866 = vsel %vm1402, %v2864, 0.0
          %v2867 = vstv %s2841
          %v2868 = vmul.f32 %v2866, %v2867
          %v2869 = vadd.f32 %v2840, %v2868
          %s2870 = sld [smem:[#allocation4 + $0x53]]
          %2871 = vrot.lane.b32.xlu0 %v324, 109
          %v2872 = vpop.permute.xlu0 %2871
          %2873 = vrot.lane.b32.xlu0 %v330, 109
          %v2874 = vpop.permute.xlu0 %2873
          %v2875 = vsel %vm1430, %v2872, %v2874
          %v2876 = vsel %vm1430, %v2874, %v2872
          %v2879 = vcombine.low %v2875, %v2876
          %v2881 = vunpack.c.l.s4 1966171168
          %v2882 = vunpack.c.0.s8 %v2881
          %v2883 = vlaneseq
          %v2884 = vshrl.u32 %v2883, 7
          %v2885 = vsub.s32 %v2882, %v2884
          %v2886 = vrot.slane %v2879, %v2885
          %v2888 = vunpack.c.l.s4 1966171168
          %v2889 = vunpack.c.0.s8 %v2888
          %v2890 = vlaneseq
          %v2891 = vshrl.u32 %v2890, 7
          %v2892 = vsub.s32 %v2889, %v2891
          %v2893 = vrot.slane %v2886, %v2892
          %v2895 = vsel %vm1433, %v2893, 0.0
          %v2896 = vstv %s2870
          %v2897 = vmul.f32 %v2895, %v2896
          %v2898 = vadd.f32 %v2869, %v2897
          %s2899 = sld [smem:[#allocation4 + $0x54]]
          %2900 = vrot.lane.b32.xlu0 %v324, 99
          %v2901 = vpop.permute.xlu0 %2900
          %2902 = vrot.lane.b32.xlu0 %v330, 99
          %v2903 = vpop.permute.xlu0 %2902
          %v2904 = vsel %vm1461, %v2901, %v2903
          %v2905 = vsel %vm1461, %v2903, %v2901
          %v2908 = vcombine.low %v2904, %v2905
          %v2910 = vunpack.c.l.s4 1966171168
          %v2911 = vunpack.c.0.s8 %v2910
          %v2912 = vlaneseq
          %v2913 = vshrl.u32 %v2912, 7
          %v2914 = vsub.s32 %v2911, %v2913
          %v2915 = vrot.slane %v2908, %v2914
          %v2917 = vunpack.c.l.s4 1966171168
          %v2918 = vunpack.c.0.s8 %v2917
          %v2919 = vlaneseq
          %v2920 = vshrl.u32 %v2919, 7
          %v2921 = vsub.s32 %v2918, %v2920
          %v2922 = vrot.slane %v2915, %v2921
          %v2924 = vsel %vm1464, %v2922, 0.0
          %v2925 = vstv %s2899
          %v2926 = vmul.f32 %v2924, %v2925
          %v2927 = vadd.f32 %v2695, %v2926
          %s2928 = sld [smem:[#allocation4 + $0x55]]
          %2929 = vrot.lane.b32.xlu0 %v324, 98
          %v2930 = vpop.permute.xlu0 %2929
          %2931 = vrot.lane.b32.xlu0 %v330, 98
          %v2932 = vpop.permute.xlu0 %2931
          %v2933 = vsel %vm1492, %v2930, %v2932
          %v2934 = vsel %vm1492, %v2932, %v2930
          %v2937 = vcombine.low %v2933, %v2934
          %v2939 = vunpack.c.l.s4 1966171168
          %v2940 = vunpack.c.0.s8 %v2939
          %v2941 = vlaneseq
          %v2942 = vshrl.u32 %v2941, 7
          %v2943 = vsub.s32 %v2940, %v2942
          %v2944 = vrot.slane %v2937, %v2943
          %v2946 = vunpack.c.l.s4 1966171168
          %v2947 = vunpack.c.0.s8 %v2946
          %v2948 = vlaneseq
          %v2949 = vshrl.u32 %v2948, 7
          %v2950 = vsub.s32 %v2947, %v2949
          %v2951 = vrot.slane %v2944, %v2950
          %v2953 = vsel %vm1495, %v2951, 0.0
          %v2954 = vstv %s2928
          %v2955 = vmul.f32 %v2953, %v2954
          %v2956 = vadd.f32 %v2927, %v2955
          %s2957 = sld [smem:[#allocation4 + $0x56]]
          %2958 = vrot.lane.b32.xlu0 %v324, 97
          %v2959 = vpop.permute.xlu0 %2958
          %2960 = vrot.lane.b32.xlu0 %v330, 97
          %v2961 = vpop.permute.xlu0 %2960
          %v2962 = vsel %vm1523, %v2959, %v2961
          %v2963 = vsel %vm1523, %v2961, %v2959
          %v2966 = vcombine.low %v2962, %v2963
          %v2968 = vunpack.c.l.s4 1966171168
          %v2969 = vunpack.c.0.s8 %v2968
          %v2970 = vlaneseq
          %v2971 = vshrl.u32 %v2970, 7
          %v2972 = vsub.s32 %v2969, %v2971
          %v2973 = vrot.slane %v2966, %v2972
          %v2975 = vunpack.c.l.s4 1966171168
          %v2976 = vunpack.c.0.s8 %v2975
          %v2977 = vlaneseq
          %v2978 = vshrl.u32 %v2977, 7
          %v2979 = vsub.s32 %v2976, %v2978
          %v2980 = vrot.slane %v2973, %v2979
          %v2982 = vsel %vm1526, %v2980, 0.0
          %v2983 = vstv %s2957
          %v2984 = vmul.f32 %v2982, %v2983
          %v2985 = vadd.f32 %v2956, %v2984
          %s2986 = sld [smem:[#allocation4 + $0x57]]
          %2987 = vrot.lane.b32.xlu0 %v324, 96
          %v2988 = vpop.permute.xlu0 %2987
          %2989 = vrot.lane.b32.xlu0 %v330, 96
          %v2990 = vpop.permute.xlu0 %2989
          %v2991 = vsel %vm1554, %v2988, %v2990
          %v2992 = vsel %vm1554, %v2990, %v2988
          %v2995 = vcombine.low %v2991, %v2992
          %v2997 = vunpack.c.l.s4 1966171168
          %v2998 = vunpack.c.0.s8 %v2997
          %v2999 = vlaneseq
          %v3000 = vshrl.u32 %v2999, 7
          %v3001 = vsub.s32 %v2998, %v3000
          %v3002 = vrot.slane %v2995, %v3001
          %v3004 = vunpack.c.l.s4 1966171168
          %v3005 = vunpack.c.0.s8 %v3004
          %v3006 = vlaneseq
          %v3007 = vshrl.u32 %v3006, 7
          %v3008 = vsub.s32 %v3005, %v3007
          %v3009 = vrot.slane %v3002, %v3008
          %v3011 = vsel %vm1557, %v3009, 0.0
          %v3012 = vstv %s2986
          %v3013 = vmul.f32 %v3011, %v3012
          %v3014 = vadd.f32 %v2985, %v3013
          %s3015 = sld [smem:[#allocation4 + $0x58]]
          %3016 = vrot.lane.b32.xlu0 %v324, 95
          %v3017 = vpop.permute.xlu0 %3016
          %3018 = vrot.lane.b32.xlu0 %v330, 95
          %v3019 = vpop.permute.xlu0 %3018
          %v3020 = vsel %vm1585, %v3017, %v3019
          %v3021 = vsel %vm1585, %v3019, %v3017
          %v3024 = vcombine.low %v3020, %v3021
          %v3026 = vunpack.c.l.s4 1966171168
          %v3027 = vunpack.c.0.s8 %v3026
          %v3028 = vlaneseq
          %v3029 = vshrl.u32 %v3028, 7
          %v3030 = vsub.s32 %v3027, %v3029
          %v3031 = vrot.slane %v3024, %v3030
          %v3033 = vunpack.c.l.s4 1966171168
          %v3034 = vunpack.c.0.s8 %v3033
          %v3035 = vlaneseq
          %v3036 = vshrl.u32 %v3035, 7
          %v3037 = vsub.s32 %v3034, %v3036
          %v3038 = vrot.slane %v3031, %v3037
          %v3040 = vsel %vm1588, %v3038, 0.0
          %v3041 = vstv %s3015
          %v3042 = vmul.f32 %v3040, %v3041
          %v3043 = vadd.f32 %v3014, %v3042
          %s3044 = sld [smem:[#allocation4 + $0x59]]
          %3045 = vrot.lane.b32.xlu0 %v324, 94
          %v3046 = vpop.permute.xlu0 %3045
          %3047 = vrot.lane.b32.xlu0 %v330, 94
          %v3048 = vpop.permute.xlu0 %3047
          %v3049 = vsel %vm1616, %v3046, %v3048
          %v3050 = vsel %vm1616, %v3048, %v3046
          %v3053 = vcombine.low %v3049, %v3050
          %v3055 = vunpack.c.l.s4 1966171168
          %v3056 = vunpack.c.0.s8 %v3055
          %v3057 = vlaneseq
          %v3058 = vshrl.u32 %v3057, 7
          %v3059 = vsub.s32 %v3056, %v3058
          %v3060 = vrot.slane %v3053, %v3059
          %v3062 = vunpack.c.l.s4 1966171168
          %v3063 = vunpack.c.0.s8 %v3062
          %v3064 = vlaneseq
          %v3065 = vshrl.u32 %v3064, 7
          %v3066 = vsub.s32 %v3063, %v3065
          %v3067 = vrot.slane %v3060, %v3066
          %v3069 = vsel %vm1619, %v3067, 0.0
          %v3070 = vstv %s3044
          %v3071 = vmul.f32 %v3069, %v3070
          %v3072 = vadd.f32 %v3043, %v3071
          %s3073 = sld [smem:[#allocation4 + $0x5a]]
          %3074 = vrot.lane.b32.xlu0 %v324, 93
          %v3075 = vpop.permute.xlu0 %3074
          %3076 = vrot.lane.b32.xlu0 %v330, 93
          %v3077 = vpop.permute.xlu0 %3076
          %v3078 = vsel %vm1647, %v3075, %v3077
          %v3079 = vsel %vm1647, %v3077, %v3075
          %v3082 = vcombine.low %v3078, %v3079
          %v3084 = vunpack.c.l.s4 1966171168
          %v3085 = vunpack.c.0.s8 %v3084
          %v3086 = vlaneseq
          %v3087 = vshrl.u32 %v3086, 7
          %v3088 = vsub.s32 %v3085, %v3087
          %v3089 = vrot.slane %v3082, %v3088
          %v3091 = vunpack.c.l.s4 1966171168
          %v3092 = vunpack.c.0.s8 %v3091
          %v3093 = vlaneseq
          %v3094 = vshrl.u32 %v3093, 7
          %v3095 = vsub.s32 %v3092, %v3094
          %v3096 = vrot.slane %v3089, %v3095
          %v3098 = vsel %vm1650, %v3096, 0.0
          %v3099 = vstv %s3073
          %v3100 = vmul.f32 %v3098, %v3099
          %v3101 = vadd.f32 %v3072, %v3100
          %s3102 = sld [smem:[#allocation4 + $0x5b]]
          %3103 = vrot.lane.b32.xlu0 %v324, 83
          %v3104 = vpop.permute.xlu0 %3103
          %3105 = vrot.lane.b32.xlu0 %v330, 83
          %v3106 = vpop.permute.xlu0 %3105
          %v3107 = vsel %vm1678, %v3104, %v3106
          %v3108 = vsel %vm1678, %v3106, %v3104
          %v3111 = vcombine.low %v3107, %v3108
          %v3113 = vunpack.c.l.s4 1966171168
          %v3114 = vunpack.c.0.s8 %v3113
          %v3115 = vlaneseq
          %v3116 = vshrl.u32 %v3115, 7
          %v3117 = vsub.s32 %v3114, %v3116
          %v3118 = vrot.slane %v3111, %v3117
          %v3120 = vunpack.c.l.s4 1966171168
          %v3121 = vunpack.c.0.s8 %v3120
          %v3122 = vlaneseq
          %v3123 = vshrl.u32 %v3122, 7
          %v3124 = vsub.s32 %v3121, %v3123
          %v3125 = vrot.slane %v3118, %v3124
          %v3127 = vsel %vm1681, %v3125, 0.0
          %v3128 = vstv %s3102
          %v3129 = vmul.f32 %v3127, %v3128
          %v3130 = vadd.f32 %v2898, %v3129
          %s3131 = sld [smem:[#allocation4 + $0x5c]]
          %3132 = vrot.lane.b32.xlu0 %v324, 82
          %v3133 = vpop.permute.xlu0 %3132
          %3134 = vrot.lane.b32.xlu0 %v330, 82
          %v3135 = vpop.permute.xlu0 %3134
          %v3136 = vsel %vm1709, %v3133, %v3135
          %v3137 = vsel %vm1709, %v3135, %v3133
          %v3140 = vcombine.low %v3136, %v3137
          %v3142 = vunpack.c.l.s4 1966171168
          %v3143 = vunpack.c.0.s8 %v3142
          %v3144 = vlaneseq
          %v3145 = vshrl.u32 %v3144, 7
          %v3146 = vsub.s32 %v3143, %v3145
          %v3147 = vrot.slane %v3140, %v3146
          %v3149 = vunpack.c.l.s4 1966171168
          %v3150 = vunpack.c.0.s8 %v3149
          %v3151 = vlaneseq
          %v3152 = vshrl.u32 %v3151, 7
          %v3153 = vsub.s32 %v3150, %v3152
          %v3154 = vrot.slane %v3147, %v3153
          %v3156 = vsel %vm1712, %v3154, 0.0
          %v3157 = vstv %s3131
          %v3158 = vmul.f32 %v3156, %v3157
          %v3159 = vadd.f32 %v3130, %v3158
          %s3160 = sld [smem:[#allocation4 + $0x5d]]
          %3161 = vrot.lane.b32.xlu0 %v324, 81
          %v3162 = vpop.permute.xlu0 %3161
          %3163 = vrot.lane.b32.xlu0 %v330, 81
          %v3164 = vpop.permute.xlu0 %3163
          %v3165 = vsel %vm1740, %v3162, %v3164
          %v3166 = vsel %vm1740, %v3164, %v3162
          %v3169 = vcombine.low %v3165, %v3166
          %v3171 = vunpack.c.l.s4 1966171168
          %v3172 = vunpack.c.0.s8 %v3171
          %v3173 = vlaneseq
          %v3174 = vshrl.u32 %v3173, 7
          %v3175 = vsub.s32 %v3172, %v3174
          %v3176 = vrot.slane %v3169, %v3175
          %v3178 = vunpack.c.l.s4 1966171168
          %v3179 = vunpack.c.0.s8 %v3178
          %v3180 = vlaneseq
          %v3181 = vshrl.u32 %v3180, 7
          %v3182 = vsub.s32 %v3179, %v3181
          %v3183 = vrot.slane %v3176, %v3182
          %v3185 = vsel %vm1743, %v3183, 0.0
          %v3186 = vstv %s3160
          %v3187 = vmul.f32 %v3185, %v3186
          %v3188 = vadd.f32 %v3159, %v3187
          %s3189 = sld [smem:[#allocation4 + $0x5e]]
          %3190 = vrot.lane.b32.xlu0 %v324, 80
          %v3191 = vpop.permute.xlu0 %3190
          %3192 = vrot.lane.b32.xlu0 %v330, 80
          %v3193 = vpop.permute.xlu0 %3192
          %v3194 = vsel %vm1771, %v3191, %v3193
          %v3195 = vsel %vm1771, %v3193, %v3191
          %v3198 = vcombine.low %v3194, %v3195
          %v3200 = vunpack.c.l.s4 1966171168
          %v3201 = vunpack.c.0.s8 %v3200
          %v3202 = vlaneseq
          %v3203 = vshrl.u32 %v3202, 7
          %v3204 = vsub.s32 %v3201, %v3203
          %v3205 = vrot.slane %v3198, %v3204
          %v3207 = vunpack.c.l.s4 1966171168
          %v3208 = vunpack.c.0.s8 %v3207
          %v3209 = vlaneseq
          %v3210 = vshrl.u32 %v3209, 7
          %v3211 = vsub.s32 %v3208, %v3210
          %v3212 = vrot.slane %v3205, %v3211
          %v3214 = vsel %vm1774, %v3212, 0.0
          %v3215 = vstv %s3189
          %v3216 = vmul.f32 %v3214, %v3215
          %v3217 = vadd.f32 %v3188, %v3216
          %s3218 = sld [smem:[#allocation4 + $0x5f]]
          %3219 = vrot.lane.b32.xlu0 %v324, 79
          %v3220 = vpop.permute.xlu0 %3219
          %3221 = vrot.lane.b32.xlu0 %v330, 79
          %v3222 = vpop.permute.xlu0 %3221
          %v3223 = vsel %vm1802, %v3220, %v3222
          %v3224 = vsel %vm1802, %v3222, %v3220
          %v3227 = vcombine.low %v3223, %v3224
          %v3229 = vunpack.c.l.s4 1966171168
          %v3230 = vunpack.c.0.s8 %v3229
          %v3231 = vlaneseq
          %v3232 = vshrl.u32 %v3231, 7
          %v3233 = vsub.s32 %v3230, %v3232
          %v3234 = vrot.slane %v3227, %v3233
          %v3236 = vunpack.c.l.s4 1966171168
          %v3237 = vunpack.c.0.s8 %v3236
          %v3238 = vlaneseq
          %v3239 = vshrl.u32 %v3238, 7
          %v3240 = vsub.s32 %v3237, %v3239
          %v3241 = vrot.slane %v3234, %v3240
          %v3243 = vsel %vm1805, %v3241, 0.0
          %v3244 = vstv %s3218
          %v3245 = vmul.f32 %v3243, %v3244
          %v3246 = vadd.f32 %v3217, %v3245
          %s3247 = sld [smem:[#allocation4 + $0x60]]
          %3248 = vrot.lane.b32.xlu0 %v324, 78
          %v3249 = vpop.permute.xlu0 %3248
          %3250 = vrot.lane.b32.xlu0 %v330, 78
          %v3251 = vpop.permute.xlu0 %3250
          %v3252 = vsel %vm1833, %v3249, %v3251
          %v3253 = vsel %vm1833, %v3251, %v3249
          %v3256 = vcombine.low %v3252, %v3253
          %v3258 = vunpack.c.l.s4 1966171168
          %v3259 = vunpack.c.0.s8 %v3258
          %v3260 = vlaneseq
          %v3261 = vshrl.u32 %v3260, 7
          %v3262 = vsub.s32 %v3259, %v3261
          %v3263 = vrot.slane %v3256, %v3262
          %v3265 = vunpack.c.l.s4 1966171168
          %v3266 = vunpack.c.0.s8 %v3265
          %v3267 = vlaneseq
          %v3268 = vshrl.u32 %v3267, 7
          %v3269 = vsub.s32 %v3266, %v3268
          %v3270 = vrot.slane %v3263, %v3269
          %v3272 = vsel %vm1836, %v3270, 0.0
          %v3273 = vstv %s3247
          %v3274 = vmul.f32 %v3272, %v3273
          %v3275 = vadd.f32 %v3246, %v3274
          %s3276 = sld [smem:[#allocation4 + $0x61]]
          %3277 = vrot.lane.b32.xlu0 %v324, 77
          %v3278 = vpop.permute.xlu0 %3277
          %3279 = vrot.lane.b32.xlu0 %v330, 77
          %v3280 = vpop.permute.xlu0 %3279
          %v3281 = vsel %vm1864, %v3278, %v3280
          %v3282 = vsel %vm1864, %v3280, %v3278
          %v3285 = vcombine.low %v3281, %v3282
          %v3287 = vunpack.c.l.s4 1966171168
          %v3288 = vunpack.c.0.s8 %v3287
          %v3289 = vlaneseq
          %v3290 = vshrl.u32 %v3289, 7
          %v3291 = vsub.s32 %v3288, %v3290
          %v3292 = vrot.slane %v3285, %v3291
          %v3294 = vunpack.c.l.s4 1966171168
          %v3295 = vunpack.c.0.s8 %v3294
          %v3296 = vlaneseq
          %v3297 = vshrl.u32 %v3296, 7
          %v3298 = vsub.s32 %v3295, %v3297
          %v3299 = vrot.slane %v3292, %v3298
          %v3301 = vsel %vm1867, %v3299, 0.0
          %v3302 = vstv %s3276
          %v3303 = vmul.f32 %v3301, %v3302
          %v3304 = vadd.f32 %v3275, %v3303
          %v3305 = vadd.f32 %v1889, %v1672
          %v3306 = vadd.f32 %v3304, %v3101
          %v3307 = vadd.f32 %v3305, %v3306
          %v3308 = vxor.u32 %v3307, 2147483648
          %v3309 = vmul.f32 %v3308, 1.442695
          %v3310 = vpow.pop %v3309
          %v3311 = vadd.f32 %v3310, 1.0
          %v3312 = vrcp.pop %v3311
          %v3313 = vmul.f32 1.0, %v3312
          %3314 = vst.msk [vmem:[%s208] sm:$0x3] %vm259, %v3313
        $region44: #{spatial_attention.1} parent=31 // pred_fallthru
          _
        %p3315 = scmp.lt.s32.totalorder %s19, 1
        %s3316 = scalar_select %p3315, %s19, 1
        %s3317 = smul.addr %s3316, 2
        %s3318 = scalar_lea.vmem %s3, %s3317
        // Predicated region
        $region45: #{spatial_attention.1} parent=31 // pred_check
          %p3319 = pneg %p115
        $region46: #{spatial_attention.1} parent=31 // pred_check_branch
          %3321 = sbr.rel (%p3319) target = $region48
        $region47: #{spatial_attention.1} parent=31 // pred_region
          _
        $region48: #{spatial_attention.1} parent=31 // pred_fallthru
          _
      $region32: #{spatial_attention.1} parent=5 // pred_fallthru
        _
      %p3322 = scmp.le.s32.totalorder 2, %s10
      // Predicated region
      $region49: #{spatial_attention.1} parent=5 // pred_check
        %p3323 = pneg %p3322
      $region50: #{spatial_attention.1} parent=5 // pred_check_branch
        %3325 = sbr.rel (%p3323) target = $region52
      $region51: #{spatial_attention.1} parent=5 // pred_region
        %s3326 = ssub.s32 %s10, 2
        // Predicated region
        $region53: #{spatial_attention.1} parent=51 // pred_check
          %p3327 = pneg %p121
        $region54: #{spatial_attention.1} parent=51 // pred_check_branch
          %3329 = sbr.rel (%p3327) target = $region56
        $region55: #{spatial_attention.1} parent=51 // pred_region
          %p3330 = scmp.lt.s32.totalorder %s21, 1
          %s3331 = scalar_select %p3330, %s21, 1
          %s3332 = smul.addr %s3331, 2
          %s3333 = scalar_lea.vmem %s3, %s3332
        $region56: #{spatial_attention.1} parent=51 // pred_fallthru
          _
      $region52: #{spatial_attention.1} parent=5 // pred_fallthru
        _
    $region6: #{spatial_attention.1} parent=1 // loop_footer
      %s14 = sadd.s32 1, %s10
    $region7: #{spatial_attention.1} parent=1 // loop_footer_branch
      %9 = sbr.rel target = $region3
    $region8: #{spatial_attention.1} parent=1 // loop_exit
      _
    %3334 = vsyncpa [#allocation5], 1
    %s3335 = scalar_lea.sflag [#allocation5], 1
    %3336 = vsyncpa %s3335, 1

</llo_original>
